<compile_context>
chip_gen: v7x
topology: tpu7x:2x2x1
jax: 0.10.0
libtpu: 0.0.40
codegen_flags: <defaults>
</compile_context>

<pallas_src>
import math
import jax
import jax.numpy as jnp
from jax.experimental import pallas as pl
from jax.experimental.pallas import tpu as pltpu

d_k = d_v = 64
d_model = 768
n_heads = 12

HEADS_PER_BLOCK = 4  # 4 heads per attention grid step -> 256-lane blocks/stores


def _row_tile(m):
    """Largest row tile <= 256 that divides m (256 keeps v5e's 16 MiB scoped
    VMEM happy while still saturating the MXU). If nothing divides, fall back
    to a fixed tile + pl.cdiv grid (Pallas masks the partial tail block) rather
    than tm == m, which would kill DMA/compute pipelining."""
    for c in (256, 128, 64, 32, 16, 8):
        if m % c == 0:
            return c
    return 128 if m >= 128 else 8


def _invariant_spec(block_shape, index_map):
    """BlockSpec for operands whose block index never changes across the grid:
    single-buffer them so the second pipeline buffer doesn't waste VMEM."""
    try:
        return pl.BlockSpec(block_shape, index_map, pipeline_mode=pl.Buffered(1))
    except (TypeError, AttributeError):  # older JAX without pipeline_mode
        return pl.BlockSpec(block_shape, index_map)


# ---------------------------------------------------------------------------
# Kernel 1: fused Q/K/V projections, grid = (M row tiles,)
# Weights stay VMEM-resident (single-buffered); activations cast to bf16
# in-kernel; MXU accumulates in f32.
# ---------------------------------------------------------------------------
def qkv_kernel(xq_ref, xk_ref, xv_ref, wq_ref, wk_ref, wv_ref,
               bq_ref, bk_ref, bv_ref, q_ref, k_ref, v_ref):
    q_ref[...] = (jnp.dot(xq_ref[...].astype(jnp.bfloat16), wq_ref[...],
                          preferred_element_type=jnp.float32)
                  + bq_ref[...]).astype(q_ref.dtype)
    k_ref[...] = (jnp.dot(xk_ref[...].astype(jnp.bfloat16), wk_ref[...],
                          preferred_element_type=jnp.float32)
                  + bk_ref[...]).astype(k_ref.dtype)
    v_ref[...] = (jnp.dot(xv_ref[...].astype(jnp.bfloat16), wv_ref[...],
                          preferred_element_type=jnp.float32)
                  + bv_ref[...]).astype(v_ref.dtype)


def qkv_projection(xq, xk, xv, wq, wk, wv, bq, bk, bv):
    # xq/xk/xv: (M, d_model) f32; w*: (d_model, d_model) bf16; b*: (1, d_model) f32
    M = xq.shape[0]
    tm = _row_tile(M)
    act_spec = pl.BlockSpec((tm, d_model), lambda m: (m, 0))
    w_spec = _invariant_spec((d_model, d_model), lambda m: (0, 0))
    b_spec = _invariant_spec((1, d_model), lambda m: (0, 0))
    out_spec = pl.BlockSpec((tm, d_model), lambda m: (m, 0))
    return pl.pallas_call(
        qkv_kernel,
        out_shape=tuple(jax.ShapeDtypeStruct((M, d_model), jnp.bfloat16)
                        for _ in range(3)),
        grid_spec=pltpu.PrefetchScalarGridSpec(
            num_scalar_prefetch=0,
            grid=(pl.cdiv(M, tm),),
            in_specs=[act_spec, act_spec, act_spec,
                      w_spec, w_spec, w_spec,
                      b_spec, b_spec, b_spec],
            out_specs=(out_spec, out_spec, out_spec),
        ),
        compiler_params=pltpu.CompilerParams(dimension_semantics=("parallel",)),
    )(xq, xk, xv, wq, wk, wv, bq, bk, bv)


# ---------------------------------------------------------------------------
# Kernel 2: scaled dot-product attention, 4 heads per (batch, head-block) step.
# Head split/merge done purely in BlockSpec index_maps (no transposes).
# Mask: (1, S) int8 key-padding row -> one additive -1e9 bias per grid step.
# ---------------------------------------------------------------------------
def attention_kernel(m_ref, q_ref, k_ref, v_ref, o_ref, ctx_ref):
    # m_ref: (1, S) int8 (1 = masked key); q/k/v: (S, HEADS_PER_BLOCK*64) bf16
    # ctx_ref: (S, HEADS_PER_BLOCK*64) f32 VMEM scratch
    bias = m_ref[...].astype(jnp.float32) * jnp.float32(-1e9)      # (1, S)
    for h in range(HEADS_PER_BLOCK):                                # static unroll
        q = q_ref[:, h * d_k:(h + 1) * d_k]                         # (S, d_k) bf16
        k = k_ref[:, h * d_k:(h + 1) * d_k]
        v = v_ref[:, h * d_v:(h + 1) * d_v]
        # NOTE: 1/sqrt(d_k) is folded into W_Q / b_Q (prepare_params).
        s = jnp.einsum("qd,kd->qk", q, k,
                       preferred_element_type=jnp.float32) + bias
        s = s - jnp.max(s, axis=-1, keepdims=True)
        p = jnp.exp(s)                                              # f32 (v5e-safe)
        inv = pl.reciprocal(jnp.sum(p, axis=-1, keepdims=True), approx=True)
        attn = (p * inv).astype(jnp.bfloat16)
        ctx_ref[:, h * d_v:(h + 1) * d_v] = jnp.dot(
            attn, v, preferred_element_type=jnp.float32)
    o_ref[...] = ctx_ref[...].astype(o_ref.dtype)   # single lane-dense store


def scaled_dot_product_attention(q, k, v, key_mask_i8):
    # q/k/v: (B, S, n_heads*64) bf16 ; key_mask_i8: (B, 1, S) int8
    B, S, _ = q.shape
    hp = HEADS_PER_BLOCK
    head_spec = lambda b, h: (b, 0, h)
    return pl.pallas_call(
        attention_kernel,
        out_shape=jax.ShapeDtypeStruct((B, S, n_heads * d_v), jnp.bfloat16),
        grid_spec=pltpu.PrefetchScalarGridSpec(
            num_scalar_prefetch=0,
            grid=(B, n_heads // hp),
            in_specs=[
                pl.BlockSpec((None, 1, S), lambda b, h: (b, 0, 0)),
                pl.BlockSpec((None, S, hp * d_k), head_spec),
                pl.BlockSpec((None, S, hp * d_k), head_spec),
                pl.BlockSpec((None, S, hp * d_v), head_spec),
            ],
            out_specs=pl.BlockSpec((None, S, hp * d_v), head_spec),
            scratch_shapes=[pltpu.VMEM((S, hp * d_v), jnp.float32)],
        ),
        compiler_params=pltpu.CompilerParams(
            dimension_semantics=("parallel", "parallel")),
    )(key_mask_i8, q, k, v)


# ---------------------------------------------------------------------------
# Kernel 3: output projection + residual add + LayerNorm, tiled over rows.
# ---------------------------------------------------------------------------
def out_ln_kernel(ctx_ref, wo_ref, bo_ref, res_ref, g_ref, beta_ref, o_ref):
    y = (jnp.dot(ctx_ref[...], wo_ref[...], preferred_element_type=jnp.float32)
         + bo_ref[...])
    x = y + res_ref[...]
    mean = jnp.mean(x, axis=-1, keepdims=True)
    var = jnp.mean(jnp.square(x - mean), axis=-1, keepdims=True)
    norm = (x - mean) * jax.lax.rsqrt(var + jnp.float32(1e-5))
    o_ref[...] = norm * g_ref[...] + beta_ref[...]


def output_layernorm(ctx, wo, bo, residual, gamma, beta):
    # ctx: (M, 768) bf16, wo: (768, 768) bf16, rest f32
    M = ctx.shape[0]
    tm = _row_tile(M)
    return pl.pallas_call(
        out_ln_kernel,
        out_shape=jax.ShapeDtypeStruct((M, d_model), jnp.float32),
        grid_spec=pltpu.PrefetchScalarGridSpec(
            num_scalar_prefetch=0,
            grid=(pl.cdiv(M, tm),),
            in_specs=[
                pl.BlockSpec((tm, n_heads * d_v), lambda m: (m, 0)),
                _invariant_spec((n_heads * d_v, d_model), lambda m: (0, 0)),
                _invariant_spec((1, d_model), lambda m: (0, 0)),
                pl.BlockSpec((tm, d_model), lambda m: (m, 0)),
                _invariant_spec((1, d_model), lambda m: (0, 0)),
                _invariant_spec((1, d_model), lambda m: (0, 0)),
            ],
            out_specs=pl.BlockSpec((tm, d_model), lambda m: (m, 0)),
        ),
        compiler_params=pltpu.CompilerParams(dimension_semantics=("parallel",)),
    )(ctx, wo, bo, residual, gamma, beta)


# ---------------------------------------------------------------------------
# One-time weight prep (hoisted out of the forward path).
# ---------------------------------------------------------------------------
def prepare_params(params):
    scale = 1.0 / math.sqrt(d_k)
    return {
        "wq": (params["wq"] * scale).astype(jnp.bfloat16),
        "bq": (params["bq"] * scale).astype(jnp.float32),
        "wk": params["wk"].astype(jnp.bfloat16),
        "bk": params["bk"],
        "wv": params["wv"].astype(jnp.bfloat16),
        "bv": params["bv"],
        "wo": params["wo"].astype(jnp.bfloat16),
        "bo": params["bo"],
        "gamma": params["gamma"],
        "beta": params["beta"],
    }


# ---------------------------------------------------------------------------
# Full MultiHeadAttention forward
# ---------------------------------------------------------------------------
def multi_head_attention(Q, K, V, attn_mask, prepared):
    # Q, K, V: (B, S, d_model) f32; attn_mask: (B, S, S) bool (True = mask)
    B, S, _ = Q.shape
    M = B * S

    q, k, v = qkv_projection(
        Q.reshape(M, d_model), K.reshape(M, d_model), V.reshape(M, d_model),
        prepared["wq"], prepared["wk"], prepared["wv"],
        prepared["bq"], prepared["bk"], prepared["bv"])          # (M, 768) bf16 each
    q = q.reshape(B, S, n_heads * d_k)   # free reshape, no transpose
    k = k.reshape(B, S, n_heads * d_k)
    v = v.reshape(B, S, n_heads * d_v)

    # BERT's attn_mask (get_attn_pad_mask) is a key-padding mask broadcast over
    # query positions, so one row per batch suffices: S bytes/batch vs S^2.
    # TODO(synk): a genuinely per-query (S, S) mask would need a full-mask path.
    key_mask = attn_mask[:, :1, :].astype(jnp.int8)              # (B, 1, S)

    ctx = scaled_dot_product_attention(q, k, v, key_mask)        # (B, S, 768) bf16

    out = output_layernorm(
        ctx.reshape(M, n_heads * d_v), prepared["wo"], prepared["bo"],
        Q.reshape(M, d_model), prepared["gamma"], prepared["beta"])
    return out.reshape(B, S, d_model)


# ---------------------------------------------------------------------------
# Parameters (synthetic, shapes from the PyTorch module) + f32 JAX reference
# ---------------------------------------------------------------------------
def init_params(key):
    ks = jax.random.split(key, 8)
    bound_in = 1.0 / math.sqrt(d_model)
    bound_out = 1.0 / math.sqrt(n_heads * d_v)

    def u(k, shape, bound):
        return jax.random.uniform(
            k, shape, dtype=jnp.float32, minval=-bound, maxval=bound)

    return {
        "wq": u(ks[0], (d_model, n_heads * d_k), bound_in),
        "bq": u(ks[1], (1, n_heads * d_k), bound_in),
        "wk": u(ks[2], (d_model, n_heads * d_k), bound_in),
        "bk": u(ks[3], (1, n_heads * d_k), bound_in),
        "wv": u(ks[4], (d_model, n_heads * d_v), bound_in),
        "bv": u(ks[5], (1, n_heads * d_v), bound_in),
        "wo": u(ks[6], (n_heads * d_v, d_model), bound_out),
        "bo": u(ks[7], (1, d_model), bound_out),
        "gamma": jnp.ones((1, d_model), jnp.float32),
        "beta": jnp.zeros((1, d_model), jnp.float32),
    }


def reference_mha(Q, K, V, attn_mask, params):
    B, S, _ = Q.shape
    q = (Q @ params["wq"] + params["bq"]).reshape(B, S, n_heads, d_k).transpose(0, 2, 1, 3)
    k = (K @ params["wk"] + params["bk"]).reshape(B, S, n_heads, d_k).transpose(0, 2, 1, 3)
    v = (V @ params["wv"] + params["bv"]).reshape(B, S, n_heads, d_v).transpose(0, 2, 1, 3)
    score = jnp.einsum("bhqd,bhkd->bhqk", q, k) / math.sqrt(d_k)
    score = jnp.where(attn_mask[:, None, :, :], jnp.float32(-1e9), score)
    attn = jax.nn.softmax(score, axis=-1)
    ctx = jnp.einsum("bhqk,bhkd->bhqd", attn, v)
    ctx = ctx.transpose(0, 2, 1, 3).reshape(B, S, n_heads * d_v)
    y = ctx @ params["wo"] + params["bo"] + Q
    mean = y.mean(-1, keepdims=True)
    var = ((y - mean) ** 2).mean(-1, keepdims=True)
    return (y - mean) / jnp.sqrt(var + 1e-5) * params["gamma"] + params["beta"]


if __name__ == "__main__":
    B, S = 2, 8  # small harness; d_model=768, n_heads=12, d_k=d_v=64 from the module

    key = jax.random.PRNGKey(0)
    kq, kk, kv, kp = jax.random.split(key, 4)

    Q = jax.random.normal(kq, (B, S, d_model), dtype=jnp.float32)
    K = jax.random.normal(kk, (B, S, d_model), dtype=jnp.float32)
    V = jax.random.normal(kv, (B, S, d_model), dtype=jnp.float32)

    # padding-style mask: last 2 key positions masked for every query
    key_pad = jnp.array([[False] * (S - 2) + [True, True]] * B)   # (B, S)
    attn_mask = jnp.broadcast_to(key_pad[:, None, :], (B, S, S))  # (B, S, S)

    params = init_params(kp)
    prepared = prepare_params(params)  # hoisted one-time weight prep

    out = multi_head_attention(Q, K, V, attn_mask, prepared)
    out = jax.block_until_ready(out)

    assert out.shape == (B, S, d_model)
    assert jnp.all(jnp.isfinite(out))

    # loose tolerance: kernels use bf16 MXU operands with f32 accumulation
    ref = reference_mha(Q, K, V, attn_mask, params)
    max_err = float(jnp.max(jnp.abs(out - ref)))
    assert max_err < 0.25, f"max abs error vs f32 reference: {max_err}"

    print("KERNEL_OK")
</pallas_src>

<mosaic_0001>
module attributes {stable_mosaic.version = 11 : i64} {
  func.func @qkv_kernel(%arg0: i32, %arg1: memref<16x768xf32, #tpu.memory_space<vmem>>, %arg2: memref<16x768xf32, #tpu.memory_space<vmem>>, %arg3: memref<16x768xf32, #tpu.memory_space<vmem>>, %arg4: memref<768x768xbf16, #tpu.memory_space<vmem>>, %arg5: memref<768x768xbf16, #tpu.memory_space<vmem>>, %arg6: memref<768x768xbf16, #tpu.memory_space<vmem>>, %arg7: memref<1x768xf32, #tpu.memory_space<vmem>>, %arg8: memref<1x768xf32, #tpu.memory_space<vmem>>, %arg9: memref<1x768xf32, #tpu.memory_space<vmem>>, %arg10: memref<16x768xbf16, #tpu.memory_space<vmem>>, %arg11: memref<16x768xbf16, #tpu.memory_space<vmem>>, %arg12: memref<16x768xbf16, #tpu.memory_space<vmem>>) attributes {dimension_semantics = [#tpu.dimension_semantics<parallel>], iteration_bounds = array<i64: 1>, scalar_prefetch = 0 : i64, scratch_operands = 0 : i64, tpu.core_type = #tpu.core_type<tc>, window_params = [{transform_indices = @transform_0, window_bounds = array<i64: 16, 768>}, {transform_indices = @transform_1, window_bounds = array<i64: 16, 768>}, {transform_indices = @transform_2, window_bounds = array<i64: 16, 768>}, {pipeline_mode = #tpu.pipeline_mode<synchronous>, transform_indices = @transform_3, window_bounds = array<i64: 768, 768>}, {pipeline_mode = #tpu.pipeline_mode<synchronous>, transform_indices = @transform_4, window_bounds = array<i64: 768, 768>}, {pipeline_mode = #tpu.pipeline_mode<synchronous>, transform_indices = @transform_5, window_bounds = array<i64: 768, 768>}, {pipeline_mode = #tpu.pipeline_mode<synchronous>, transform_indices = @transform_6, window_bounds = array<i64: 1, 768>}, {pipeline_mode = #tpu.pipeline_mode<synchronous>, transform_indices = @transform_7, window_bounds = array<i64: 1, 768>}, {pipeline_mode = #tpu.pipeline_mode<synchronous>, transform_indices = @transform_8, window_bounds = array<i64: 1, 768>}, {transform_indices = @transform_9, window_bounds = array<i64: 16, 768>}, {transform_indices = @transform_10, window_bounds = array<i64: 16, 768>}, {transform_indices = @transform_11, window_bounds = array<i64: 16, 768>}]} {
    %c0 = arith.constant 0 : index
    %c0_0 = arith.constant 0 : index
    %0 = vector.load %arg1[%c0, %c0_0] : memref<16x768xf32, #tpu.memory_space<vmem>>, vector<16x768xf32>
    %1 = arith.truncf %0 : vector<16x768xf32> to vector<16x768xbf16>
    %c0_1 = arith.constant 0 : index
    %c0_2 = arith.constant 0 : index
    %2 = vector.load %arg4[%c0_1, %c0_2] : memref<768x768xbf16, #tpu.memory_space<vmem>>, vector<768x768xbf16>
    %cst = arith.constant dense<0.000000e+00> : vector<16x768xf32>
    %3 = tpu.matmul %1, %2, %cst {dimension_numbers = #tpu.dot_dimension_numbers<[1], [0], [0], [1], [0, 0, 1, 1], [], []>} : vector<16x768xbf16>, vector<768x768xbf16>, vector<16x768xf32> -> vector<16x768xf32>
    %c0_3 = arith.constant 0 : index
    %c0_4 = arith.constant 0 : index
    %4 = vector.load %arg7[%c0_3, %c0_4] : memref<1x768xf32, #tpu.memory_space<vmem>>, vector<1x768xf32>
    %5 = vector.broadcast %4 : vector<1x768xf32> to vector<16x768xf32>
    %6 = arith.addf %3, %5 : vector<16x768xf32>
    %7 = arith.truncf %6 : vector<16x768xf32> to vector<16x768xbf16>
    %c0_5 = arith.constant 0 : index
    %c0_6 = arith.constant 0 : index
    %8 = vector.load %arg10[%c0_5, %c0_6] : memref<16x768xbf16, #tpu.memory_space<vmem>>, vector<16x768xbf16>
    tpu.vector_store %arg10[%c0_5, %c0_6], %7 {strides = array<i32>} : memref<16x768xbf16, #tpu.memory_space<vmem>>, vector<16x768xbf16>,
    %c0_7 = arith.constant 0 : index
    %c0_8 = arith.constant 0 : index
    %9 = vector.load %arg2[%c0_7, %c0_8] : memref<16x768xf32, #tpu.memory_space<vmem>>, vector<16x768xf32>
    %10 = arith.truncf %9 : vector<16x768xf32> to vector<16x768xbf16>
    %c0_9 = arith.constant 0 : index
    %c0_10 = arith.constant 0 : index
    %11 = vector.load %arg5[%c0_9, %c0_10] : memref<768x768xbf16, #tpu.memory_space<vmem>>, vector<768x768xbf16>
    %cst_11 = arith.constant dense<0.000000e+00> : vector<16x768xf32>
    %12 = tpu.matmul %10, %11, %cst_11 {dimension_numbers = #tpu.dot_dimension_numbers<[1], [0], [0], [1], [0, 0, 1, 1], [], []>} : vector<16x768xbf16>, vector<768x768xbf16>, vector<16x768xf32> -> vector<16x768xf32>
    %c0_12 = arith.constant 0 : index
    %c0_13 = arith.constant 0 : index
    %13 = vector.load %arg8[%c0_12, %c0_13] : memref<1x768xf32, #tpu.memory_space<vmem>>, vector<1x768xf32>
    %14 = vector.broadcast %13 : vector<1x768xf32> to vector<16x768xf32>
    %15 = arith.addf %12, %14 : vector<16x768xf32>
    %16 = arith.truncf %15 : vector<16x768xf32> to vector<16x768xbf16>
    %c0_14 = arith.constant 0 : index
    %c0_15 = arith.constant 0 : index
    %17 = vector.load %arg11[%c0_14, %c0_15] : memref<16x768xbf16, #tpu.memory_space<vmem>>, vector<16x768xbf16>
    tpu.vector_store %arg11[%c0_14, %c0_15], %16 {strides = array<i32>} : memref<16x768xbf16, #tpu.memory_space<vmem>>, vector<16x768xbf16>,
    %c0_16 = arith.constant 0 : index
    %c0_17 = arith.constant 0 : index
    %18 = vector.load %arg3[%c0_16, %c0_17] : memref<16x768xf32, #tpu.memory_space<vmem>>, vector<16x768xf32>
    %19 = arith.truncf %18 : vector<16x768xf32> to vector<16x768xbf16>
    %c0_18 = arith.constant 0 : index
    %c0_19 = arith.constant 0 : index
    %20 = vector.load %arg6[%c0_18, %c0_19] : memref<768x768xbf16, #tpu.memory_space<vmem>>, vector<768x768xbf16>
    %cst_20 = arith.constant dense<0.000000e+00> : vector<16x768xf32>
    %21 = tpu.matmul %19, %20, %cst_20 {dimension_numbers = #tpu.dot_dimension_numbers<[1], [0], [0], [1], [0, 0, 1, 1], [], []>} : vector<16x768xbf16>, vector<768x768xbf16>, vector<16x768xf32> -> vector<16x768xf32>
    %c0_21 = arith.constant 0 : index
    %c0_22 = arith.constant 0 : index
    %22 = vector.load %arg9[%c0_21, %c0_22] : memref<1x768xf32, #tpu.memory_space<vmem>>, vector<1x768xf32>
    %23 = vector.broadcast %22 : vector<1x768xf32> to vector<16x768xf32>
    %24 = arith.addf %21, %23 : vector<16x768xf32>
    %25 = arith.truncf %24 : vector<16x768xf32> to vector<16x768xbf16>
    %c0_23 = arith.constant 0 : index
    %c0_24 = arith.constant 0 : index
    %26 = vector.load %arg12[%c0_23, %c0_24] : memref<16x768xbf16, #tpu.memory_space<vmem>>, vector<16x768xbf16>
    tpu.vector_store %arg12[%c0_23, %c0_24], %25 {strides = array<i32>} : memref<16x768xbf16, #tpu.memory_space<vmem>>, vector<16x768xbf16>,
    return
  }
  func.func @transform_0(%arg0: i32) -> (i32, i32) {
    %c0_i32 = arith.constant 0 : i32
    %c0_i32_0 = arith.constant 0 : i32
    return %arg0, %c0_i32 : i32, i32
  }
  func.func @transform_1(%arg0: i32) -> (i32, i32) {
    %c0_i32 = arith.constant 0 : i32
    %c0_i32_0 = arith.constant 0 : i32
    return %arg0, %c0_i32 : i32, i32
  }
  func.func @transform_2(%arg0: i32) -> (i32, i32) {
    %c0_i32 = arith.constant 0 : i32
    %c0_i32_0 = arith.constant 0 : i32
    return %arg0, %c0_i32 : i32, i32
  }
  func.func @transform_3(%arg0: i32) -> (i32, i32) {
    %c0_i32 = arith.constant 0 : i32
    %c0_i32_0 = arith.constant 0 : i32
    %c0_i32_1 = arith.constant 0 : i32
    return %c0_i32, %c0_i32_0 : i32, i32
  }
  func.func @transform_4(%arg0: i32) -> (i32, i32) {
    %c0_i32 = arith.constant 0 : i32
    %c0_i32_0 = arith.constant 0 : i32
    %c0_i32_1 = arith.constant 0 : i32
    return %c0_i32, %c0_i32_0 : i32, i32
  }
  func.func @transform_5(%arg0: i32) -> (i32, i32) {
    %c0_i32 = arith.constant 0 : i32
    %c0_i32_0 = arith.constant 0 : i32
    %c0_i32_1 = arith.constant 0 : i32
    return %c0_i32, %c0_i32_0 : i32, i32
  }
  func.func @transform_6(%arg0: i32) -> (i32, i32) {
    %c0_i32 = arith.constant 0 : i32
    %c0_i32_0 = arith.constant 0 : i32
    %c0_i32_1 = arith.constant 0 : i32
    return %c0_i32, %c0_i32_0 : i32, i32
  }
  func.func @transform_7(%arg0: i32) -> (i32, i32) {
    %c0_i32 = arith.constant 0 : i32
    %c0_i32_0 = arith.constant 0 : i32
    %c0_i32_1 = arith.constant 0 : i32
    return %c0_i32, %c0_i32_0 : i32, i32
  }
  func.func @transform_8(%arg0: i32) -> (i32, i32) {
    %c0_i32 = arith.constant 0 : i32
    %c0_i32_0 = arith.constant 0 : i32
    %c0_i32_1 = arith.constant 0 : i32
    return %c0_i32, %c0_i32_0 : i32, i32
  }
  func.func @transform_9(%arg0: i32) -> (i32, i32) {
    %c0_i32 = arith.constant 0 : i32
    %c0_i32_0 = arith.constant 0 : i32
    return %arg0, %c0_i32 : i32, i32
  }
  func.func @transform_10(%arg0: i32) -> (i32, i32) {
    %c0_i32 = arith.constant 0 : i32
    %c0_i32_0 = arith.constant 0 : i32
    return %arg0, %c0_i32 : i32, i32
  }
  func.func @transform_11(%arg0: i32) -> (i32, i32) {
    %c0_i32 = arith.constant 0 : i32
    %c0_i32_0 = arith.constant 0 : i32
    return %arg0, %c0_i32 : i32, i32
  }
}

</mosaic_0001>

<llo_original>
// kernel: tpu_custom_call.1
$region0: #{tpu_custom_call.1}
  #allocation0 [shape = 'u32[]', space=smem, size = 0x4, offset = 0x4, fixed_abs, tag = 'smem constant byte address 0x4 - core index']
  #allocation1 [shape = 'u32[144,128]{1,0:T(1,128)}', space=vmem, size = 0x12000, scoped, tag = 'internal scratch']
  %s0 = inlined_call_operand.hbm [shape: f32[16,768], index: 0, kind: input, shape index: {}]
  %s1 = inlined_call_operand.hbm [shape: f32[16,768], index: 1, kind: input, shape index: {}]
  %s2 = inlined_call_operand.hbm [shape: f32[16,768], index: 2, kind: input, shape index: {}]
  %s3 = inlined_call_operand.hbm [shape: bf16[768,768], index: 3, kind: input, shape index: {}]
  %s4 = inlined_call_operand.hbm [shape: bf16[768,768], index: 4, kind: input, shape index: {}]
  %s5 = inlined_call_operand.hbm [shape: bf16[768,768], index: 5, kind: input, shape index: {}]
  %s6 = inlined_call_operand.hbm [shape: f32[1,768], index: 6, kind: input, shape index: {}]
  %s7 = inlined_call_operand.hbm [shape: f32[1,768], index: 7, kind: input, shape index: {}]
  %s8 = inlined_call_operand.hbm [shape: f32[1,768], index: 8, kind: input, shape index: {}]
  %s9 = inlined_call_operand.hbm [shape: bf16[16,768], index: 9, kind: output, shape index: {0}]
  %s10 = inlined_call_operand.hbm [shape: bf16[16,768], index: 10, kind: output, shape index: {1}]
  %s11 = inlined_call_operand.hbm [shape: bf16[16,768], index: 11, kind: output, shape index: {2}]
  %12 = xla_tuple %s9, %s10, %s11
  %s13 = sld [smem:[#allocation0]]
  $region98: #{tpu_custom_call.1} parent=0
    _
  %s15 = ssub.s32 1, %s13
  %s16 = scalar_select 0, %s15, %s13
  $region1: #{tpu_custom_call.1} parent=0
    #allocation2 [shape = 'u8[49152]{0}', space=vmem, size = 0xc000, scoped, tag = 'input window, operand 0, single buffered']
    #allocation3 [shape = 's32[1]{0}', space=sflag, size = 0x4, scoped, tag = 'scoped memory for tpu_custom_call.1']
    #allocation4 [shape = 's32[1]{0}', space=sflag, size = 0x4, scoped, tag = 'scoped memory for tpu_custom_call.1']
    #allocation5 [shape = 'u8[49152]{0}', space=vmem, size = 0xc000, scoped, tag = 'input window, operand 1, single buffered']
    #allocation6 [shape = 's32[1]{0}', space=sflag, size = 0x4, scoped, tag = 'scoped memory for tpu_custom_call.1']
    #allocation7 [shape = 'u8[49152]{0}', space=vmem, size = 0xc000, scoped, tag = 'input window, operand 2, single buffered']
    #allocation8 [shape = 'u8[1179648]{0}', space=vmem, size = 0x120000, scoped, tag = 'input window, operand 3, single buffered']
    #allocation9 [shape = 's32[1]{0}', space=sflag, size = 0x4, scoped, tag = 'scoped memory for tpu_custom_call.1']
    #allocation10 [shape = 'u8[1179648]{0}', space=vmem, size = 0x120000, scoped, tag = 'input window, operand 4, single buffered']
    #allocation11 [shape = 'u8[1179648]{0}', space=vmem, size = 0x120000, scoped, tag = 'input window, operand 5, single buffered']
    #allocation12 [shape = 's32[1]{0}', space=sflag, size = 0x4, scoped, tag = 'scoped memory for tpu_custom_call.1']
    #allocation13 [shape = 'u8[3072]{0}', space=vmem, size = 0xc00, scoped, tag = 'input window, operand 6, single buffered']
    #allocation14 [shape = 'u8[3072]{0}', space=vmem, size = 0xc00, scoped, tag = 'input window, operand 7, single buffered']
    #allocation15 [shape = 's32[1]{0}', space=sflag, size = 0x4, scoped, tag = 'scoped memory for tpu_custom_call.1']
    #allocation16 [shape = 'u8[3072]{0}', space=vmem, size = 0xc00, scoped, tag = 'input window, operand 8, single buffered']
    #allocation17 [shape = 'u8[24576]{0}', space=vmem, size = 0x6000, scoped, tag = 'output window, operand 0, single buffered']
    #allocation18 [shape = 'u8[24576]{0}', space=vmem, size = 0x6000, scoped, tag = 'output window, operand 1, single buffered']
    #allocation19 [shape = 's32[1]{0}', space=sflag, size = 0x4, scoped, tag = 'scoped memory for tpu_custom_call.1']
    #allocation20 [shape = 'u8[24576]{0}', space=vmem, size = 0x6000, scoped, tag = 'output window, operand 2, single buffered']
    %17 = vsyncpa [#allocation3], 0
    %18 = vsyncpa [#allocation6], 0
    %19 = vsyncpa [#allocation9], 0
    %20 = vsyncpa [#allocation12], 0
    %21 = vsyncpa [#allocation15], 0
    %22 = vsyncpa [#allocation4], 0
    %23 = vsyncpa [#allocation19], 0
    // Predicated region
    $region2: #{tpu_custom_call.1} parent=1 // pred_check
      _
    $region3: #{tpu_custom_call.1} parent=1 // pred_check_branch
      %25 = sbr.rel (0) target = $region5
    $region4: #{tpu_custom_call.1} parent=1 // pred_region
      %s27 = ssub.s32 1536, 1536
      %28 = vsyncadd [#allocation3], %s27
      %s29 = sshll.u32 [#allocation2], 4
      %s30 = int_to_ptr.vmem [resolvable:$true] %s29
      %35 = dma.hbm_to_vmem [thread:$0]  %s0, 1536, %s30, [#allocation3], 768, 768, 48
    $region5: #{tpu_custom_call.1} parent=1 // pred_fallthru
      _
    // Predicated region
    $region6: #{tpu_custom_call.1} parent=1 // pred_check
      _
    $region7: #{tpu_custom_call.1} parent=1 // pred_check_branch
      %37 = sbr.rel (0) target = $region9
    $region8: #{tpu_custom_call.1} parent=1 // pred_region
      %s39 = ssub.s32 1536, 1536
      %40 = vsyncadd [#allocation6], %s39
      %s41 = sshll.u32 [#allocation5], 4
      %s42 = int_to_ptr.vmem [resolvable:$true] %s41
      %47 = dma.hbm_to_vmem [thread:$0]  %s1, 1536, %s42, [#allocation6], 768, 768, 48
    $region9: #{tpu_custom_call.1} parent=1 // pred_fallthru
      _
    // Predicated region
    $region10: #{tpu_custom_call.1} parent=1 // pred_check
      _
    $region11: #{tpu_custom_call.1} parent=1 // pred_check_branch
      %49 = sbr.rel (0) target = $region13
    $region12: #{tpu_custom_call.1} parent=1 // pred_region
      %s51 = ssub.s32 1536, 1536
      %52 = vsyncadd [#allocation6], %s51
      %s53 = sshll.u32 [#allocation7], 4
      %s54 = int_to_ptr.vmem [resolvable:$true] %s53
      %59 = dma.hbm_to_vmem [thread:$0]  %s2, 1536, %s54, [#allocation6], 768, 768, 48
    $region13: #{tpu_custom_call.1} parent=1 // pred_fallthru
      _
    // Predicated region
    $region14: #{tpu_custom_call.1} parent=1 // pred_check
      _
    $region15: #{tpu_custom_call.1} parent=1 // pred_check_branch
      %61 = sbr.rel (0) target = $region17
    $region16: #{tpu_custom_call.1} parent=1 // pred_region
      %s63 = ssub.s32 36864, 36864
      %64 = vsyncadd [#allocation9], %s63
      %s65 = sshll.u32 [#allocation8], 4
      %s66 = int_to_ptr.vmem [resolvable:$true] %s65
      %71 = dma.hbm_to_vmem [thread:$0]  %s3, 36864, %s66, [#allocation9], 384, 384, 24
    $region17: #{tpu_custom_call.1} parent=1 // pred_fallthru
      _
    // Predicated region
    $region18: #{tpu_custom_call.1} parent=1 // pred_check
      _
    $region19: #{tpu_custom_call.1} parent=1 // pred_check_branch
      %73 = sbr.rel (0) target = $region21
    $region20: #{tpu_custom_call.1} parent=1 // pred_region
      %s75 = ssub.s32 36864, 36864
      %76 = vsyncadd [#allocation9], %s75
      %s77 = sshll.u32 [#allocation10], 4
      %s78 = int_to_ptr.vmem [resolvable:$true] %s77
      %83 = dma.hbm_to_vmem [thread:$0]  %s4, 36864, %s78, [#allocation9], 384, 384, 24
    $region21: #{tpu_custom_call.1} parent=1 // pred_fallthru
      _
    // Predicated region
    $region22: #{tpu_custom_call.1} parent=1 // pred_check
      _
    $region23: #{tpu_custom_call.1} parent=1 // pred_check_branch
      %85 = sbr.rel (0) target = $region25
    $region24: #{tpu_custom_call.1} parent=1 // pred_region
      %s87 = ssub.s32 36864, 36864
      %88 = vsyncadd [#allocation12], %s87
      %s89 = sshll.u32 [#allocation11], 4
      %s90 = int_to_ptr.vmem [resolvable:$true] %s89
      %95 = dma.hbm_to_vmem [thread:$0]  %s5, 36864, %s90, [#allocation12], 384, 384, 24
    $region25: #{tpu_custom_call.1} parent=1 // pred_fallthru
      _
    // Predicated region
    $region26: #{tpu_custom_call.1} parent=1 // pred_check
      _
    $region27: #{tpu_custom_call.1} parent=1 // pred_check_branch
      %97 = sbr.rel (0) target = $region29
    $region28: #{tpu_custom_call.1} parent=1 // pred_region
      %s99 = ssub.s32 96, 96
      %100 = vsyncadd [#allocation12], %s99
      %s102 = sshll.u32 [#allocation13], 4
      %s103 = int_to_ptr.vmem [resolvable:$true] %s102
      %105 = dma.hbm_to_vmem [thread:$0]  %s6, 96, %s103, [#allocation12]
    $region29: #{tpu_custom_call.1} parent=1 // pred_fallthru
      _
    // Predicated region
    $region30: #{tpu_custom_call.1} parent=1 // pred_check
      _
    $region31: #{tpu_custom_call.1} parent=1 // pred_check_branch
      %107 = sbr.rel (0) target = $region33
    $region32: #{tpu_custom_call.1} parent=1 // pred_region
      %s109 = ssub.s32 96, 96
      %110 = vsyncadd [#allocation15], %s109
      %s112 = sshll.u32 [#allocation14], 4
      %s113 = int_to_ptr.vmem [resolvable:$true] %s112
      %115 = dma.hbm_to_vmem [thread:$0]  %s7, 96, %s113, [#allocation15]
    $region33: #{tpu_custom_call.1} parent=1 // pred_fallthru
      _
    // Predicated region
    $region34: #{tpu_custom_call.1} parent=1 // pred_check
      _
    $region35: #{tpu_custom_call.1} parent=1 // pred_check_branch
      %117 = sbr.rel (0) target = $region37
    $region36: #{tpu_custom_call.1} parent=1 // pred_region
      %s119 = ssub.s32 96, 96
      %120 = vsyncadd [#allocation15], %s119
      %s122 = sshll.u32 [#allocation16], 4
      %s123 = int_to_ptr.vmem [resolvable:$true] %s122
      %125 = dma.hbm_to_vmem [thread:$0]  %s8, 96, %s123, [#allocation15]
    $region37: #{tpu_custom_call.1} parent=1 // pred_fallthru
      _
    // Predicated region
    $region38: #{tpu_custom_call.1} parent=1 // pred_check
      _
    $region39: #{tpu_custom_call.1} parent=1 // pred_check_branch
      %127 = sbr.rel (0) target = $region41
    $region40: #{tpu_custom_call.1} parent=1 // pred_region
      %128 = dma.done [#allocation3], 1536
    $region41: #{tpu_custom_call.1} parent=1 // pred_fallthru
      _
    // Predicated region
    $region42: #{tpu_custom_call.1} parent=1 // pred_check
      _
    $region43: #{tpu_custom_call.1} parent=1 // pred_check_branch
      %130 = sbr.rel (0) target = $region45
    $region44: #{tpu_custom_call.1} parent=1 // pred_region
      %131 = dma.done [#allocation6], 1536
    $region45: #{tpu_custom_call.1} parent=1 // pred_fallthru
      _
    // Predicated region
    $region46: #{tpu_custom_call.1} parent=1 // pred_check
      _
    $region47: #{tpu_custom_call.1} parent=1 // pred_check_branch
      %133 = sbr.rel (0) target = $region49
    $region48: #{tpu_custom_call.1} parent=1 // pred_region
      %134 = dma.done [#allocation6], 1536
    $region49: #{tpu_custom_call.1} parent=1 // pred_fallthru
      _
    // Predicated region
    $region50: #{tpu_custom_call.1} parent=1 // pred_check
      _
    $region51: #{tpu_custom_call.1} parent=1 // pred_check_branch
      %136 = sbr.rel (0) target = $region53
    $region52: #{tpu_custom_call.1} parent=1 // pred_region
      %137 = dma.done [#allocation9], 36864
    $region53: #{tpu_custom_call.1} parent=1 // pred_fallthru
      _
    // Predicated region
    $region54: #{tpu_custom_call.1} parent=1 // pred_check
      _
    $region55: #{tpu_custom_call.1} parent=1 // pred_check_branch
      %139 = sbr.rel (0) target = $region57
    $region56: #{tpu_custom_call.1} parent=1 // pred_region
      %140 = dma.done [#allocation9], 36864
    $region57: #{tpu_custom_call.1} parent=1 // pred_fallthru
      _
    // Predicated region
    $region58: #{tpu_custom_call.1} parent=1 // pred_check
      _
    $region59: #{tpu_custom_call.1} parent=1 // pred_check_branch
      %142 = sbr.rel (0) target = $region61
    $region60: #{tpu_custom_call.1} parent=1 // pred_region
      %143 = dma.done [#allocation12], 36864
    $region61: #{tpu_custom_call.1} parent=1 // pred_fallthru
      _
    // Predicated region
    $region62: #{tpu_custom_call.1} parent=1 // pred_check
      _
    $region63: #{tpu_custom_call.1} parent=1 // pred_check_branch
      %145 = sbr.rel (0) target = $region65
    $region64: #{tpu_custom_call.1} parent=1 // pred_region
      %146 = dma.done [#allocation12], 96
    $region65: #{tpu_custom_call.1} parent=1 // pred_fallthru
      _
    // Predicated region
    $region66: #{tpu_custom_call.1} parent=1 // pred_check
      _
    $region67: #{tpu_custom_call.1} parent=1 // pred_check_branch
      %148 = sbr.rel (0) target = $region69
    $region68: #{tpu_custom_call.1} parent=1 // pred_region
      %149 = dma.done [#allocation15], 96
    $region69: #{tpu_custom_call.1} parent=1 // pred_fallthru
      _
    // Predicated region
    $region70: #{tpu_custom_call.1} parent=1 // pred_check
      _
    $region71: #{tpu_custom_call.1} parent=1 // pred_check_branch
      %151 = sbr.rel (0) target = $region73
    $region72: #{tpu_custom_call.1} parent=1 // pred_region
      %152 = dma.done [#allocation15], 96
    $region73: #{tpu_custom_call.1} parent=1 // pred_fallthru
      _
    %v153 = vld [vmem:[#allocation2] sm:$0xff]
    %v154 = vld [vmem:[#allocation2 + $0x8] sm:$0xff]
    %v155 = vld [vmem:[#allocation2 + $0x10] sm:$0xff]
    %v156 = vld [vmem:[#allocation2 + $0x18] sm:$0xff]
    %v157 = vld [vmem:[#allocation2 + $0x20] sm:$0xff]
    %v158 = vld [vmem:[#allocation2 + $0x28] sm:$0xff]
    %v159 = vld [vmem:[#allocation2 + $0x30] sm:$0xff]
    %v160 = vld [vmem:[#allocation2 + $0x38] sm:$0xff]
    %v161 = vld [vmem:[#allocation2 + $0x40] sm:$0xff]
    %v162 = vld [vmem:[#allocation2 + $0x48] sm:$0xff]
    %v163 = vld [vmem:[#allocation2 + $0x50] sm:$0xff]
    %v164 = vld [vmem:[#allocation2 + $0x58] sm:$0xff]
    %v165 = vpack.c.bf16 %v159, %v153
    %v166 = vpack.c.bf16 %v160, %v154
    %v167 = vpack.c.bf16 %v161, %v155
    %v168 = vpack.c.bf16 %v162, %v156
    %v169 = vpack.c.bf16 %v163, %v157
    %v170 = vpack.c.bf16 %v164, %v158
    %v171 = vld [vmem:[#allocation8] sm:$0xff]
    %v172 = vld [vmem:[#allocation8 + $0x8] sm:$0xff]
    %v173 = vld [vmem:[#allocation8 + $0x10] sm:$0xff]
    %v174 = vld [vmem:[#allocation8 + $0x18] sm:$0xff]
    %v175 = vld [vmem:[#allocation8 + $0x20] sm:$0xff]
    %v176 = vld [vmem:[#allocation8 + $0x28] sm:$0xff]
    %v177 = vld [vmem:[#allocation8 + $0x30] sm:$0xff]
    %v178 = vld [vmem:[#allocation8 + $0x38] sm:$0xff]
    %v179 = vld [vmem:[#allocation8 + $0x40] sm:$0xff]
    %v180 = vld [vmem:[#allocation8 + $0x48] sm:$0xff]
    %v181 = vld [vmem:[#allocation8 + $0x50] sm:$0xff]
    %v182 = vld [vmem:[#allocation8 + $0x58] sm:$0xff]
    %v183 = vld [vmem:[#allocation8 + $0x60] sm:$0xff]
    %v184 = vld [vmem:[#allocation8 + $0x68] sm:$0xff]
    %v185 = vld [vmem:[#allocation8 + $0x70] sm:$0xff]
    %v186 = vld [vmem:[#allocation8 + $0x78] sm:$0xff]
    %v187 = vld [vmem:[#allocation8 + $0x80] sm:$0xff]
    %v188 = vld [vmem:[#allocation8 + $0x88] sm:$0xff]
    %v189 = vld [vmem:[#allocation8 + $0x90] sm:$0xff]
    %v190 = vld [vmem:[#allocation8 + $0x98] sm:$0xff]
    %v191 = vld [vmem:[#allocation8 + $0xa0] sm:$0xff]
    %v192 = vld [vmem:[#allocation8 + $0xa8] sm:$0xff]
    %v193 = vld [vmem:[#allocation8 + $0xb0] sm:$0xff]
    %v194 = vld [vmem:[#allocation8 + $0xb8] sm:$0xff]
    %v195 = vld [vmem:[#allocation8 + $0xc0] sm:$0xff]
    %v196 = vld [vmem:[#allocation8 + $0xc8] sm:$0xff]
    %v197 = vld [vmem:[#allocation8 + $0xd0] sm:$0xff]
    %v198 = vld [vmem:[#allocation8 + $0xd8] sm:$0xff]
    %v199 = vld [vmem:[#allocation8 + $0xe0] sm:$0xff]
    %v200 = vld [vmem:[#allocation8 + $0xe8] sm:$0xff]
    %v201 = vld [vmem:[#allocation8 + $0xf0] sm:$0xff]
    %v202 = vld [vmem:[#allocation8 + $0xf8] sm:$0xff]
    %v203 = vld [vmem:[#allocation8 + $0x100] sm:$0xff]
    %v204 = vld [vmem:[#allocation8 + $0x108] sm:$0xff]
    %v205 = vld [vmem:[#allocation8 + $0x110] sm:$0xff]
    %v206 = vld [vmem:[#allocation8 + $0x118] sm:$0xff]
    %v207 = vld [vmem:[#allocation8 + $0x120] sm:$0xff]
    %v208 = vld [vmem:[#allocation8 + $0x128] sm:$0xff]
    %v209 = vld [vmem:[#allocation8 + $0x130] sm:$0xff]
    %v210 = vld [vmem:[#allocation8 + $0x138] sm:$0xff]
    %v211 = vld [vmem:[#allocation8 + $0x140] sm:$0xff]
    %v212 = vld [vmem:[#allocation8 + $0x148] sm:$0xff]
    %v213 = vld [vmem:[#allocation8 + $0x150] sm:$0xff]
    %v214 = vld [vmem:[#allocation8 + $0x158] sm:$0xff]
    %v215 = vld [vmem:[#allocation8 + $0x160] sm:$0xff]
    %v216 = vld [vmem:[#allocation8 + $0x168] sm:$0xff]
    %v217 = vld [vmem:[#allocation8 + $0x170] sm:$0xff]
    %v218 = vld [vmem:[#allocation8 + $0x178] sm:$0xff]
    %v219 = vld [vmem:[#allocation8 + $0x180] sm:$0xff]
    %v220 = vld [vmem:[#allocation8 + $0x188] sm:$0xff]
    %v221 = vld [vmem:[#allocation8 + $0x190] sm:$0xff]
    %v222 = vld [vmem:[#allocation8 + $0x198] sm:$0xff]
    %v223 = vld [vmem:[#allocation8 + $0x1a0] sm:$0xff]
    %v224 = vld [vmem:[#allocation8 + $0x1a8] sm:$0xff]
    %v225 = vld [vmem:[#allocation8 + $0x1b0] sm:$0xff]
    %v226 = vld [vmem:[#allocation8 + $0x1b8] sm:$0xff]
    %v227 = vld [vmem:[#allocation8 + $0x1c0] sm:$0xff]
    %v228 = vld [vmem:[#allocation8 + $0x1c8] sm:$0xff]
    %v229 = vld [vmem:[#allocation8 + $0x1d0] sm:$0xff]
    %v230 = vld [vmem:[#allocation8 + $0x1d8] sm:$0xff]
    %v231 = vld [vmem:[#allocation8 + $0x1e0] sm:$0xff]
    %v232 = vld [vmem:[#allocation8 + $0x1e8] sm:$0xff]
    %v233 = vld [vmem:[#allocation8 + $0x1f0] sm:$0xff]
    %v234 = vld [vmem:[#allocation8 + $0x1f8] sm:$0xff]
    %v235 = vld [vmem:[#allocation8 + $0x200] sm:$0xff]
    %v236 = vld [vmem:[#allocation8 + $0x208] sm:$0xff]
    %v237 = vld [vmem:[#allocation8 + $0x210] sm:$0xff]
    %v238 = vld [vmem:[#allocation8 + $0x218] sm:$0xff]
    %v239 = vld [vmem:[#allocation8 + $0x220] sm:$0xff]
    %v240 = vld [vmem:[#allocation8 + $0x228] sm:$0xff]
    %v241 = vld [vmem:[#allocation8 + $0x230] sm:$0xff]
    %v242 = vld [vmem:[#allocation8 + $0x238] sm:$0xff]
    %v243 = vld [vmem:[#allocation8 + $0x240] sm:$0xff]
    %v244 = vld [vmem:[#allocation8 + $0x248] sm:$0xff]
    %v245 = vld [vmem:[#allocation8 + $0x250] sm:$0xff]
    %v246 = vld [vmem:[#allocation8 + $0x258] sm:$0xff]
    %v247 = vld [vmem:[#allocation8 + $0x260] sm:$0xff]
    %v248 = vld [vmem:[#allocation8 + $0x268] sm:$0xff]
    %v249 = vld [vmem:[#allocation8 + $0x270] sm:$0xff]
    %v250 = vld [vmem:[#allocation8 + $0x278] sm:$0xff]
    %v251 = vld [vmem:[#allocation8 + $0x280] sm:$0xff]
    %v252 = vld [vmem:[#allocation8 + $0x288] sm:$0xff]
    %v253 = vld [vmem:[#allocation8 + $0x290] sm:$0xff]
    %v254 = vld [vmem:[#allocation8 + $0x298] sm:$0xff]
    %v255 = vld [vmem:[#allocation8 + $0x2a0] sm:$0xff]
    %v256 = vld [vmem:[#allocation8 + $0x2a8] sm:$0xff]
    %v257 = vld [vmem:[#allocation8 + $0x2b0] sm:$0xff]
    %v258 = vld [vmem:[#allocation8 + $0x2b8] sm:$0xff]
    %v259 = vld [vmem:[#allocation8 + $0x2c0] sm:$0xff]
    %v260 = vld [vmem:[#allocation8 + $0x2c8] sm:$0xff]
    %v261 = vld [vmem:[#allocation8 + $0x2d0] sm:$0xff]
    %v262 = vld [vmem:[#allocation8 + $0x2d8] sm:$0xff]
    %v263 = vld [vmem:[#allocation8 + $0x2e0] sm:$0xff]
    %v264 = vld [vmem:[#allocation8 + $0x2e8] sm:$0xff]
    %v265 = vld [vmem:[#allocation8 + $0x2f0] sm:$0xff]
    %v266 = vld [vmem:[#allocation8 + $0x2f8] sm:$0xff]
    %v267 = vld [vmem:[#allocation8 + $0x300] sm:$0xff]
    %v268 = vld [vmem:[#allocation8 + $0x308] sm:$0xff]
    %v269 = vld [vmem:[#allocation8 + $0x310] sm:$0xff]
    %v270 = vld [vmem:[#allocation8 + $0x318] sm:$0xff]
    %v271 = vld [vmem:[#allocation8 + $0x320] sm:$0xff]
    %v272 = vld [vmem:[#allocation8 + $0x328] sm:$0xff]
    %v273 = vld [vmem:[#allocation8 + $0x330] sm:$0xff]
    %v274 = vld [vmem:[#allocation8 + $0x338] sm:$0xff]
    %v275 = vld [vmem:[#allocation8 + $0x340] sm:$0xff]
    %v276 = vld [vmem:[#allocation8 + $0x348] sm:$0xff]
    %v277 = vld [vmem:[#allocation8 + $0x350] sm:$0xff]
    %v278 = vld [vmem:[#allocation8 + $0x358] sm:$0xff]
    %v279 = vld [vmem:[#allocation8 + $0x360] sm:$0xff]
    %v280 = vld [vmem:[#allocation8 + $0x368] sm:$0xff]
    %v281 = vld [vmem:[#allocation8 + $0x370] sm:$0xff]
    %v282 = vld [vmem:[#allocation8 + $0x378] sm:$0xff]
    %v283 = vld [vmem:[#allocation8 + $0x380] sm:$0xff]
    %v284 = vld [vmem:[#allocation8 + $0x388] sm:$0xff]
    %v285 = vld [vmem:[#allocation8 + $0x390] sm:$0xff]
    %v286 = vld [vmem:[#allocation8 + $0x398] sm:$0xff]
    %v287 = vld [vmem:[#allocation8 + $0x3a0] sm:$0xff]
    %v288 = vld [vmem:[#allocation8 + $0x3a8] sm:$0xff]
    %v289 = vld [vmem:[#allocation8 + $0x3b0] sm:$0xff]
    %v290 = vld [vmem:[#allocation8 + $0x3b8] sm:$0xff]
    %v291 = vld [vmem:[#allocation8 + $0x3c0] sm:$0xff]
    %v292 = vld [vmem:[#allocation8 + $0x3c8] sm:$0xff]
    %v293 = vld [vmem:[#allocation8 + $0x3d0] sm:$0xff]
    %v294 = vld [vmem:[#allocation8 + $0x3d8] sm:$0xff]
    %v295 = vld [vmem:[#allocation8 + $0x3e0] sm:$0xff]
    %v296 = vld [vmem:[#allocation8 + $0x3e8] sm:$0xff]
    %v297 = vld [vmem:[#allocation8 + $0x3f0] sm:$0xff]
    %v298 = vld [vmem:[#allocation8 + $0x3f8] sm:$0xff]
    %v299 = vld [vmem:[#allocation8 + $0x400] sm:$0xff]
    %v300 = vld [vmem:[#allocation8 + $0x408] sm:$0xff]
    %v301 = vld [vmem:[#allocation8 + $0x410] sm:$0xff]
    %v302 = vld [vmem:[#allocation8 + $0x418] sm:$0xff]
    %v303 = vld [vmem:[#allocation8 + $0x420] sm:$0xff]
    %v304 = vld [vmem:[#allocation8 + $0x428] sm:$0xff]
    %v305 = vld [vmem:[#allocation8 + $0x430] sm:$0xff]
    %v306 = vld [vmem:[#allocation8 + $0x438] sm:$0xff]
    %v307 = vld [vmem:[#allocation8 + $0x440] sm:$0xff]
    %v308 = vld [vmem:[#allocation8 + $0x448] sm:$0xff]
    %v309 = vld [vmem:[#allocation8 + $0x450] sm:$0xff]
    %v310 = vld [vmem:[#allocation8 + $0x458] sm:$0xff]
    %v311 = vld [vmem:[#allocation8 + $0x460] sm:$0xff]
    %v312 = vld [vmem:[#allocation8 + $0x468] sm:$0xff]
    %v313 = vld [vmem:[#allocation8 + $0x470] sm:$0xff]
    %v314 = vld [vmem:[#allocation8 + $0x478] sm:$0xff]
    %v315 = vld [vmem:[#allocation8 + $0x480] sm:$0xff]
    %v316 = vld [vmem:[#allocation8 + $0x488] sm:$0xff]
    %v317 = vld [vmem:[#allocation8 + $0x490] sm:$0xff]
    %v318 = vld [vmem:[#allocation8 + $0x498] sm:$0xff]
    %v319 = vld [vmem:[#allocation8 + $0x4a0] sm:$0xff]
    %v320 = vld [vmem:[#allocation8 + $0x4a8] sm:$0xff]
    %v321 = vld [vmem:[#allocation8 + $0x4b0] sm:$0xff]
    %v322 = vld [vmem:[#allocation8 + $0x4b8] sm:$0xff]
    %v323 = vld [vmem:[#allocation8 + $0x4c0] sm:$0xff]
    %v324 = vld [vmem:[#allocation8 + $0x4c8] sm:$0xff]
    %v325 = vld [vmem:[#allocation8 + $0x4d0] sm:$0xff]
    %v326 = vld [vmem:[#allocation8 + $0x4d8] sm:$0xff]
    %v327 = vld [vmem:[#allocation8 + $0x4e0] sm:$0xff]
    %v328 = vld [vmem:[#allocation8 + $0x4e8] sm:$0xff]
    %v329 = vld [vmem:[#allocation8 + $0x4f0] sm:$0xff]
    %v330 = vld [vmem:[#allocation8 + $0x4f8] sm:$0xff]
    %v331 = vld [vmem:[#allocation8 + $0x500] sm:$0xff]
    %v332 = vld [vmem:[#allocation8 + $0x508] sm:$0xff]
    %v333 = vld [vmem:[#allocation8 + $0x510] sm:$0xff]
    %v334 = vld [vmem:[#allocation8 + $0x518] sm:$0xff]
    %v335 = vld [vmem:[#allocation8 + $0x520] sm:$0xff]
    %v336 = vld [vmem:[#allocation8 + $0x528] sm:$0xff]
    %v337 = vld [vmem:[#allocation8 + $0x530] sm:$0xff]
    %v338 = vld [vmem:[#allocation8 + $0x538] sm:$0xff]
    %v339 = vld [vmem:[#allocation8 + $0x540] sm:$0xff]
    %v340 = vld [vmem:[#allocation8 + $0x548] sm:$0xff]
    %v341 = vld [vmem:[#allocation8 + $0x550] sm:$0xff]
    %v342 = vld [vmem:[#allocation8 + $0x558] sm:$0xff]
    %v343 = vld [vmem:[#allocation8 + $0x560] sm:$0xff]
    %v344 = vld [vmem:[#allocation8 + $0x568] sm:$0xff]
    %v345 = vld [vmem:[#allocation8 + $0x570] sm:$0xff]
    %v346 = vld [vmem:[#allocation8 + $0x578] sm:$0xff]
    %v347 = vld [vmem:[#allocation8 + $0x580] sm:$0xff]
    %v348 = vld [vmem:[#allocation8 + $0x588] sm:$0xff]
    %v349 = vld [vmem:[#allocation8 + $0x590] sm:$0xff]
    %v350 = vld [vmem:[#allocation8 + $0x598] sm:$0xff]
    %v351 = vld [vmem:[#allocation8 + $0x5a0] sm:$0xff]
    %v352 = vld [vmem:[#allocation8 + $0x5a8] sm:$0xff]
    %v353 = vld [vmem:[#allocation8 + $0x5b0] sm:$0xff]
    %v354 = vld [vmem:[#allocation8 + $0x5b8] sm:$0xff]
    %v355 = vld [vmem:[#allocation8 + $0x5c0] sm:$0xff]
    %v356 = vld [vmem:[#allocation8 + $0x5c8] sm:$0xff]
    %v357 = vld [vmem:[#allocation8 + $0x5d0] sm:$0xff]
    %v358 = vld [vmem:[#allocation8 + $0x5d8] sm:$0xff]
    %v359 = vld [vmem:[#allocation8 + $0x5e0] sm:$0xff]
    %v360 = vld [vmem:[#allocation8 + $0x5e8] sm:$0xff]
    %v361 = vld [vmem:[#allocation8 + $0x5f0] sm:$0xff]
    %v362 = vld [vmem:[#allocation8 + $0x5f8] sm:$0xff]
    %v363 = vld [vmem:[#allocation8 + $0x600] sm:$0xff]
    %v364 = vld [vmem:[#allocation8 + $0x608] sm:$0xff]
    %v365 = vld [vmem:[#allocation8 + $0x610] sm:$0xff]
    %v366 = vld [vmem:[#allocation8 + $0x618] sm:$0xff]
    %v367 = vld [vmem:[#allocation8 + $0x620] sm:$0xff]
    %v368 = vld [vmem:[#allocation8 + $0x628] sm:$0xff]
    %v369 = vld [vmem:[#allocation8 + $0x630] sm:$0xff]
    %v370 = vld [vmem:[#allocation8 + $0x638] sm:$0xff]
    %v371 = vld [vmem:[#allocation8 + $0x640] sm:$0xff]
    %v372 = vld [vmem:[#allocation8 + $0x648] sm:$0xff]
    %v373 = vld [vmem:[#allocation8 + $0x650] sm:$0xff]
    %v374 = vld [vmem:[#allocation8 + $0x658] sm:$0xff]
    %v375 = vld [vmem:[#allocation8 + $0x660] sm:$0xff]
    %v376 = vld [vmem:[#allocation8 + $0x668] sm:$0xff]
    %v377 = vld [vmem:[#allocation8 + $0x670] sm:$0xff]
    %v378 = vld [vmem:[#allocation8 + $0x678] sm:$0xff]
    %v379 = vld [vmem:[#allocation8 + $0x680] sm:$0xff]
    %v380 = vld [vmem:[#allocation8 + $0x688] sm:$0xff]
    %v381 = vld [vmem:[#allocation8 + $0x690] sm:$0xff]
    %v382 = vld [vmem:[#allocation8 + $0x698] sm:$0xff]
    %v383 = vld [vmem:[#allocation8 + $0x6a0] sm:$0xff]
    %v384 = vld [vmem:[#allocation8 + $0x6a8] sm:$0xff]
    %v385 = vld [vmem:[#allocation8 + $0x6b0] sm:$0xff]
    %v386 = vld [vmem:[#allocation8 + $0x6b8] sm:$0xff]
    %v387 = vld [vmem:[#allocation8 + $0x6c0] sm:$0xff]
    %v388 = vld [vmem:[#allocation8 + $0x6c8] sm:$0xff]
    %v389 = vld [vmem:[#allocation8 + $0x6d0] sm:$0xff]
    %v390 = vld [vmem:[#allocation8 + $0x6d8] sm:$0xff]
    %v391 = vld [vmem:[#allocation8 + $0x6e0] sm:$0xff]
    %v392 = vld [vmem:[#allocation8 + $0x6e8] sm:$0xff]
    %v393 = vld [vmem:[#allocation8 + $0x6f0] sm:$0xff]
    %v394 = vld [vmem:[#allocation8 + $0x6f8] sm:$0xff]
    %v395 = vld [vmem:[#allocation8 + $0x700] sm:$0xff]
    %v396 = vld [vmem:[#allocation8 + $0x708] sm:$0xff]
    %v397 = vld [vmem:[#allocation8 + $0x710] sm:$0xff]
    %v398 = vld [vmem:[#allocation8 + $0x718] sm:$0xff]
    %v399 = vld [vmem:[#allocation8 + $0x720] sm:$0xff]
    %v400 = vld [vmem:[#allocation8 + $0x728] sm:$0xff]
    %v401 = vld [vmem:[#allocation8 + $0x730] sm:$0xff]
    %v402 = vld [vmem:[#allocation8 + $0x738] sm:$0xff]
    %v403 = vld [vmem:[#allocation8 + $0x740] sm:$0xff]
    %v404 = vld [vmem:[#allocation8 + $0x748] sm:$0xff]
    %v405 = vld [vmem:[#allocation8 + $0x750] sm:$0xff]
    %v406 = vld [vmem:[#allocation8 + $0x758] sm:$0xff]
    %v407 = vld [vmem:[#allocation8 + $0x760] sm:$0xff]
    %v408 = vld [vmem:[#allocation8 + $0x768] sm:$0xff]
    %v409 = vld [vmem:[#allocation8 + $0x770] sm:$0xff]
    %v410 = vld [vmem:[#allocation8 + $0x778] sm:$0xff]
    %v411 = vld [vmem:[#allocation8 + $0x780] sm:$0xff]
    %v412 = vld [vmem:[#allocation8 + $0x788] sm:$0xff]
    %v413 = vld [vmem:[#allocation8 + $0x790] sm:$0xff]
    %v414 = vld [vmem:[#allocation8 + $0x798] sm:$0xff]
    %v415 = vld [vmem:[#allocation8 + $0x7a0] sm:$0xff]
    %v416 = vld [vmem:[#allocation8 + $0x7a8] sm:$0xff]
    %v417 = vld [vmem:[#allocation8 + $0x7b0] sm:$0xff]
    %v418 = vld [vmem:[#allocation8 + $0x7b8] sm:$0xff]
    %v419 = vld [vmem:[#allocation8 + $0x7c0] sm:$0xff]
    %v420 = vld [vmem:[#allocation8 + $0x7c8] sm:$0xff]
    %v421 = vld [vmem:[#allocation8 + $0x7d0] sm:$0xff]
    %v422 = vld [vmem:[#allocation8 + $0x7d8] sm:$0xff]
    %v423 = vld [vmem:[#allocation8 + $0x7e0] sm:$0xff]
    %v424 = vld [vmem:[#allocation8 + $0x7e8] sm:$0xff]
    %v425 = vld [vmem:[#allocation8 + $0x7f0] sm:$0xff]
    %v426 = vld [vmem:[#allocation8 + $0x7f8] sm:$0xff]
    %v427 = vld [vmem:[#allocation8 + $0x800] sm:$0xff]
    %v428 = vld [vmem:[#allocation8 + $0x808] sm:$0xff]
    %v429 = vld [vmem:[#allocation8 + $0x810] sm:$0xff]
    %v430 = vld [vmem:[#allocation8 + $0x818] sm:$0xff]
    %v431 = vld [vmem:[#allocation8 + $0x820] sm:$0xff]
    %v432 = vld [vmem:[#allocation8 + $0x828] sm:$0xff]
    %v433 = vld [vmem:[#allocation8 + $0x830] sm:$0xff]
    %v434 = vld [vmem:[#allocation8 + $0x838] sm:$0xff]
    %v435 = vld [vmem:[#allocation8 + $0x840] sm:$0xff]
    %v436 = vld [vmem:[#allocation8 + $0x848] sm:$0xff]
    %v437 = vld [vmem:[#allocation8 + $0x850] sm:$0xff]
    %v438 = vld [vmem:[#allocation8 + $0x858] sm:$0xff]
    %v439 = vld [vmem:[#allocation8 + $0x860] sm:$0xff]
    %v440 = vld [vmem:[#allocation8 + $0x868] sm:$0xff]
    %v441 = vld [vmem:[#allocation8 + $0x870] sm:$0xff]
    %v442 = vld [vmem:[#allocation8 + $0x878] sm:$0xff]
    %v443 = vld [vmem:[#allocation8 + $0x880] sm:$0xff]
    %v444 = vld [vmem:[#allocation8 + $0x888] sm:$0xff]
    %v445 = vld [vmem:[#allocation8 + $0x890] sm:$0xff]
    %v446 = vld [vmem:[#allocation8 + $0x898] sm:$0xff]
    %v447 = vld [vmem:[#allocation8 + $0x8a0] sm:$0xff]
    %v448 = vld [vmem:[#allocation8 + $0x8a8] sm:$0xff]
    %v449 = vld [vmem:[#allocation8 + $0x8b0] sm:$0xff]
    %v450 = vld [vmem:[#allocation8 + $0x8b8] sm:$0xff]
    %v451 = vld [vmem:[#allocation8 + $0x8c0] sm:$0xff]
    %v452 = vld [vmem:[#allocation8 + $0x8c8] sm:$0xff]
    %v453 = vld [vmem:[#allocation8 + $0x8d0] sm:$0xff]
    %v454 = vld [vmem:[#allocation8 + $0x8d8] sm:$0xff]
    %v455 = vld [vmem:[#allocation8 + $0x8e0] sm:$0xff]
    %v456 = vld [vmem:[#allocation8 + $0x8e8] sm:$0xff]
    %v457 = vld [vmem:[#allocation8 + $0x8f0] sm:$0xff]
    %v458 = vld [vmem:[#allocation8 + $0x8f8] sm:$0xff]
    %v459 = vld [vmem:[#allocation13] sm:$0x3f]
    %v461 = vlaneseq
    %v462 = vshrl.u32 %v461, 7
    %v463 = vsub.s32 0, %v462
    %v464 = vrot.slane %v459, %v463
    %v465 = vlaneseq
    %v466 = vshrl.u32 %v465, 7
    %v467 = vsub.s32 1, %v466
    %v468 = vrot.slane %v459, %v467
    %v469 = vlaneseq
    %v470 = vshrl.u32 %v469, 7
    %v471 = vsub.s32 2, %v470
    %v472 = vrot.slane %v459, %v471
    %v473 = vlaneseq
    %v474 = vshrl.u32 %v473, 7
    %v475 = vsub.s32 3, %v474
    %v476 = vrot.slane %v459, %v475
    %v477 = vlaneseq
    %v478 = vshrl.u32 %v477, 7
    %v479 = vsub.s32 4, %v478
    %v480 = vrot.slane %v459, %v479
    %v481 = vlaneseq
    %v482 = vshrl.u32 %v481, 7
    %v483 = vsub.s32 5, %v482
    %v484 = vrot.slane %v459, %v483
    %v779 = vunpack.c.l.b16 %v171
    %v780 = vunpack.c.h.b16 %v171
    %v781 = vunpack.c.l.b16 %v172
    %v782 = vunpack.c.h.b16 %v172
    %v783 = vunpack.c.l.b16 %v173
    %v784 = vunpack.c.h.b16 %v173
    %v785 = vunpack.c.l.b16 %v174
    %v786 = vunpack.c.h.b16 %v174
    %v787 = vunpack.c.l.b16 %v175
    %v788 = vunpack.c.h.b16 %v175
    %v789 = vunpack.c.l.b16 %v176
    %v790 = vunpack.c.h.b16 %v176
    %v791 = vunpack.c.l.b16 %v177
    %v792 = vunpack.c.h.b16 %v177
    %v793 = vunpack.c.l.b16 %v178
    %v794 = vunpack.c.h.b16 %v178
    %v795 = vunpack.c.l.b16 %v179
    %v796 = vunpack.c.h.b16 %v179
    %v797 = vunpack.c.l.b16 %v180
    %v798 = vunpack.c.h.b16 %v180
    %v799 = vunpack.c.l.b16 %v181
    %v800 = vunpack.c.h.b16 %v181
    %v801 = vunpack.c.l.b16 %v182
    %v802 = vunpack.c.h.b16 %v182
    %v803 = vunpack.c.l.b16 %v183
    %v804 = vunpack.c.h.b16 %v183
    %v805 = vunpack.c.l.b16 %v184
    %v806 = vunpack.c.h.b16 %v184
    %v807 = vunpack.c.l.b16 %v185
    %v808 = vunpack.c.h.b16 %v185
    %v809 = vunpack.c.l.b16 %v186
    %v810 = vunpack.c.h.b16 %v186
    %v811 = vunpack.c.l.b16 %v187
    %v812 = vunpack.c.h.b16 %v187
    %v813 = vunpack.c.l.b16 %v188
    %v814 = vunpack.c.h.b16 %v188
    %v815 = vunpack.c.l.b16 %v189
    %v816 = vunpack.c.h.b16 %v189
    %v817 = vunpack.c.l.b16 %v190
    %v818 = vunpack.c.h.b16 %v190
    %v819 = vunpack.c.l.b16 %v191
    %v820 = vunpack.c.h.b16 %v191
    %v821 = vunpack.c.l.b16 %v192
    %v822 = vunpack.c.h.b16 %v192
    %v823 = vunpack.c.l.b16 %v193
    %v824 = vunpack.c.h.b16 %v193
    %v825 = vunpack.c.l.b16 %v194
    %v826 = vunpack.c.h.b16 %v194
    %v827 = vunpack.c.l.b16 %v195
    %v828 = vunpack.c.h.b16 %v195
    %v829 = vunpack.c.l.b16 %v196
    %v830 = vunpack.c.h.b16 %v196
    %v831 = vunpack.c.l.b16 %v197
    %v832 = vunpack.c.h.b16 %v197
    %v833 = vunpack.c.l.b16 %v198
    %v834 = vunpack.c.h.b16 %v198
    %v835 = vunpack.c.l.b16 %v199
    %v836 = vunpack.c.h.b16 %v199
    %v837 = vunpack.c.l.b16 %v200
    %v838 = vunpack.c.h.b16 %v200
    %v839 = vunpack.c.l.b16 %v201
    %v840 = vunpack.c.h.b16 %v201
    %v841 = vunpack.c.l.b16 %v202
    %v842 = vunpack.c.h.b16 %v202
    %v843 = vunpack.c.l.b16 %v203
    %v844 = vunpack.c.h.b16 %v203
    %v845 = vunpack.c.l.b16 %v204
    %v846 = vunpack.c.h.b16 %v204
    %v847 = vunpack.c.l.b16 %v205
    %v848 = vunpack.c.h.b16 %v205
    %v849 = vunpack.c.l.b16 %v206
    %v850 = vunpack.c.h.b16 %v206
    %v851 = vunpack.c.l.b16 %v207
    %v852 = vunpack.c.h.b16 %v207
    %v853 = vunpack.c.l.b16 %v208
    %v854 = vunpack.c.h.b16 %v208
    %v855 = vunpack.c.l.b16 %v209
    %v856 = vunpack.c.h.b16 %v209
    %v857 = vunpack.c.l.b16 %v210
    %v858 = vunpack.c.h.b16 %v210
    %v859 = vunpack.c.l.b16 %v211
    %v860 = vunpack.c.h.b16 %v211
    %v861 = vunpack.c.l.b16 %v212
    %v862 = vunpack.c.h.b16 %v212
    %v863 = vunpack.c.l.b16 %v213
    %v864 = vunpack.c.h.b16 %v213
    %v865 = vunpack.c.l.b16 %v214
    %v866 = vunpack.c.h.b16 %v214
    %v867 = vunpack.c.l.b16 %v215
    %v868 = vunpack.c.h.b16 %v215
    %v869 = vunpack.c.l.b16 %v216
    %v870 = vunpack.c.h.b16 %v216
    %v871 = vunpack.c.l.b16 %v217
    %v872 = vunpack.c.h.b16 %v217
    %v873 = vunpack.c.l.b16 %v218
    %v874 = vunpack.c.h.b16 %v218
    %v875 = vunpack.c.l.b16 %v219
    %v876 = vunpack.c.h.b16 %v219
    %v877 = vunpack.c.l.b16 %v220
    %v878 = vunpack.c.h.b16 %v220
    %v879 = vunpack.c.l.b16 %v221
    %v880 = vunpack.c.h.b16 %v221
    %v881 = vunpack.c.l.b16 %v222
    %v882 = vunpack.c.h.b16 %v222
    %v883 = vunpack.c.l.b16 %v223
    %v884 = vunpack.c.h.b16 %v223
    %v885 = vunpack.c.l.b16 %v224
    %v886 = vunpack.c.h.b16 %v224
    %v887 = vunpack.c.l.b16 %v225
    %v888 = vunpack.c.h.b16 %v225
    %v889 = vunpack.c.l.b16 %v226
    %v890 = vunpack.c.h.b16 %v226
    %v891 = vunpack.c.l.b16 %v227
    %v892 = vunpack.c.h.b16 %v227
    %v893 = vunpack.c.l.b16 %v228
    %v894 = vunpack.c.h.b16 %v228
    %v895 = vunpack.c.l.b16 %v229
    %v896 = vunpack.c.h.b16 %v229
    %v897 = vunpack.c.l.b16 %v230
    %v898 = vunpack.c.h.b16 %v230
    %v899 = vunpack.c.l.b16 %v231
    %v900 = vunpack.c.h.b16 %v231
    %v901 = vunpack.c.l.b16 %v232
    %v902 = vunpack.c.h.b16 %v232
    %v903 = vunpack.c.l.b16 %v233
    %v904 = vunpack.c.h.b16 %v233
    %v905 = vunpack.c.l.b16 %v234
    %v906 = vunpack.c.h.b16 %v234
    %v907 = vunpack.c.l.b16 %v235
    %v908 = vunpack.c.h.b16 %v235
    %v909 = vunpack.c.l.b16 %v236
    %v910 = vunpack.c.h.b16 %v236
    %v911 = vunpack.c.l.b16 %v237
    %v912 = vunpack.c.h.b16 %v237
    %v913 = vunpack.c.l.b16 %v238
    %v914 = vunpack.c.h.b16 %v238
    %v915 = vunpack.c.l.b16 %v239
    %v916 = vunpack.c.h.b16 %v239
    %v917 = vunpack.c.l.b16 %v240
    %v918 = vunpack.c.h.b16 %v240
    %v919 = vunpack.c.l.b16 %v241
    %v920 = vunpack.c.h.b16 %v241
    %v921 = vunpack.c.l.b16 %v242
    %v922 = vunpack.c.h.b16 %v242
    %v923 = vunpack.c.l.b16 %v243
    %v924 = vunpack.c.h.b16 %v243
    %v925 = vunpack.c.l.b16 %v244
    %v926 = vunpack.c.h.b16 %v244
    %v927 = vunpack.c.l.b16 %v245
    %v928 = vunpack.c.h.b16 %v245
    %v929 = vunpack.c.l.b16 %v246
    %v930 = vunpack.c.h.b16 %v246
    %v931 = vunpack.c.l.b16 %v247
    %v932 = vunpack.c.h.b16 %v247
    %v933 = vunpack.c.l.b16 %v248
    %v934 = vunpack.c.h.b16 %v248
    %v935 = vunpack.c.l.b16 %v249
    %v936 = vunpack.c.h.b16 %v249
    %v937 = vunpack.c.l.b16 %v250
    %v938 = vunpack.c.h.b16 %v250
    %v939 = vunpack.c.l.b16 %v251
    %v940 = vunpack.c.h.b16 %v251
    %v941 = vunpack.c.l.b16 %v252
    %v942 = vunpack.c.h.b16 %v252
    %v943 = vunpack.c.l.b16 %v253
    %v944 = vunpack.c.h.b16 %v253
    %v945 = vunpack.c.l.b16 %v254
    %v946 = vunpack.c.h.b16 %v254
    %v947 = vunpack.c.l.b16 %v255
    %v948 = vunpack.c.h.b16 %v255
    %v949 = vunpack.c.l.b16 %v256
    %v950 = vunpack.c.h.b16 %v256
    %v951 = vunpack.c.l.b16 %v257
    %v952 = vunpack.c.h.b16 %v257
    %v953 = vunpack.c.l.b16 %v258
    %v954 = vunpack.c.h.b16 %v258
    %v955 = vunpack.c.l.b16 %v259
    %v956 = vunpack.c.h.b16 %v259
    %v957 = vunpack.c.l.b16 %v260
    %v958 = vunpack.c.h.b16 %v260
    %v959 = vunpack.c.l.b16 %v261
    %v960 = vunpack.c.h.b16 %v261
    %v961 = vunpack.c.l.b16 %v262
    %v962 = vunpack.c.h.b16 %v262
    %v963 = vunpack.c.l.b16 %v263
    %v964 = vunpack.c.h.b16 %v263
    %v965 = vunpack.c.l.b16 %v264
    %v966 = vunpack.c.h.b16 %v264
    %v967 = vunpack.c.l.b16 %v265
    %v968 = vunpack.c.h.b16 %v265
    %v969 = vunpack.c.l.b16 %v266
    %v970 = vunpack.c.h.b16 %v266
    %v971 = vunpack.c.l.b16 %v267
    %v972 = vunpack.c.h.b16 %v267
    %v973 = vunpack.c.l.b16 %v268
    %v974 = vunpack.c.h.b16 %v268
    %v975 = vunpack.c.l.b16 %v269
    %v976 = vunpack.c.h.b16 %v269
    %v977 = vunpack.c.l.b16 %v270
    %v978 = vunpack.c.h.b16 %v270
    %v979 = vunpack.c.l.b16 %v271
    %v980 = vunpack.c.h.b16 %v271
    %v981 = vunpack.c.l.b16 %v272
    %v982 = vunpack.c.h.b16 %v272
    %v983 = vunpack.c.l.b16 %v273
    %v984 = vunpack.c.h.b16 %v273
    %v985 = vunpack.c.l.b16 %v274
    %v986 = vunpack.c.h.b16 %v274
    %v987 = vunpack.c.l.b16 %v275
    %v988 = vunpack.c.h.b16 %v275
    %v989 = vunpack.c.l.b16 %v276
    %v990 = vunpack.c.h.b16 %v276
    %v991 = vunpack.c.l.b16 %v277
    %v992 = vunpack.c.h.b16 %v277
    %v993 = vunpack.c.l.b16 %v278
    %v994 = vunpack.c.h.b16 %v278
    %v995 = vunpack.c.l.b16 %v279
    %v996 = vunpack.c.h.b16 %v279
    %v997 = vunpack.c.l.b16 %v280
    %v998 = vunpack.c.h.b16 %v280
    %v999 = vunpack.c.l.b16 %v281
    %v1000 = vunpack.c.h.b16 %v281
    %v1001 = vunpack.c.l.b16 %v282
    %v1002 = vunpack.c.h.b16 %v282
    %v1003 = vunpack.c.l.b16 %v283
    %v1004 = vunpack.c.h.b16 %v283
    %v1005 = vunpack.c.l.b16 %v284
    %v1006 = vunpack.c.h.b16 %v284
    %v1007 = vunpack.c.l.b16 %v285
    %v1008 = vunpack.c.h.b16 %v285
    %v1009 = vunpack.c.l.b16 %v286
    %v1010 = vunpack.c.h.b16 %v286
    %v1011 = vunpack.c.l.b16 %v287
    %v1012 = vunpack.c.h.b16 %v287
    %v1013 = vunpack.c.l.b16 %v288
    %v1014 = vunpack.c.h.b16 %v288
    %v1015 = vunpack.c.l.b16 %v289
    %v1016 = vunpack.c.h.b16 %v289
    %v1017 = vunpack.c.l.b16 %v290
    %v1018 = vunpack.c.h.b16 %v290
    %v1019 = vunpack.c.l.b16 %v291
    %v1020 = vunpack.c.h.b16 %v291
    %v1021 = vunpack.c.l.b16 %v292
    %v1022 = vunpack.c.h.b16 %v292
    %v1023 = vunpack.c.l.b16 %v293
    %v1024 = vunpack.c.h.b16 %v293
    %v1025 = vunpack.c.l.b16 %v294
    %v1026 = vunpack.c.h.b16 %v294
    %v1027 = vunpack.c.l.b16 %v295
    %v1028 = vunpack.c.h.b16 %v295
    %v1029 = vunpack.c.l.b16 %v296
    %v1030 = vunpack.c.h.b16 %v296
    %v1031 = vunpack.c.l.b16 %v297
    %v1032 = vunpack.c.h.b16 %v297
    %v1033 = vunpack.c.l.b16 %v298
    %v1034 = vunpack.c.h.b16 %v298
    %v1035 = vunpack.c.l.b16 %v299
    %v1036 = vunpack.c.h.b16 %v299
    %v1037 = vunpack.c.l.b16 %v300
    %v1038 = vunpack.c.h.b16 %v300
    %v1039 = vunpack.c.l.b16 %v301
    %v1040 = vunpack.c.h.b16 %v301
    %v1041 = vunpack.c.l.b16 %v302
    %v1042 = vunpack.c.h.b16 %v302
    %v1043 = vunpack.c.l.b16 %v303
    %v1044 = vunpack.c.h.b16 %v303
    %v1045 = vunpack.c.l.b16 %v304
    %v1046 = vunpack.c.h.b16 %v304
    %v1047 = vunpack.c.l.b16 %v305
    %v1048 = vunpack.c.h.b16 %v305
    %v1049 = vunpack.c.l.b16 %v306
    %v1050 = vunpack.c.h.b16 %v306
    %v1051 = vunpack.c.l.b16 %v307
    %v1052 = vunpack.c.h.b16 %v307
    %v1053 = vunpack.c.l.b16 %v308
    %v1054 = vunpack.c.h.b16 %v308
    %v1055 = vunpack.c.l.b16 %v309
    %v1056 = vunpack.c.h.b16 %v309
    %v1057 = vunpack.c.l.b16 %v310
    %v1058 = vunpack.c.h.b16 %v310
    %v1059 = vunpack.c.l.b16 %v311
    %v1060 = vunpack.c.h.b16 %v311
    %v1061 = vunpack.c.l.b16 %v312
    %v1062 = vunpack.c.h.b16 %v312
    %v1063 = vunpack.c.l.b16 %v313
    %v1064 = vunpack.c.h.b16 %v313
    %v1065 = vunpack.c.l.b16 %v314
    %v1066 = vunpack.c.h.b16 %v314
    %v1067 = vunpack.c.l.b16 %v315
    %v1068 = vunpack.c.h.b16 %v315
    %v1069 = vunpack.c.l.b16 %v316
    %v1070 = vunpack.c.h.b16 %v316
    %v1071 = vunpack.c.l.b16 %v317
    %v1072 = vunpack.c.h.b16 %v317
    %v1073 = vunpack.c.l.b16 %v318
    %v1074 = vunpack.c.h.b16 %v318
    %v1075 = vunpack.c.l.b16 %v319
    %v1076 = vunpack.c.h.b16 %v319
    %v1077 = vunpack.c.l.b16 %v320
    %v1078 = vunpack.c.h.b16 %v320
    %v1079 = vunpack.c.l.b16 %v321
    %v1080 = vunpack.c.h.b16 %v321
    %v1081 = vunpack.c.l.b16 %v322
    %v1082 = vunpack.c.h.b16 %v322
    %v1083 = vunpack.c.l.b16 %v323
    %v1084 = vunpack.c.h.b16 %v323
    %v1085 = vunpack.c.l.b16 %v324
    %v1086 = vunpack.c.h.b16 %v324
    %v1087 = vunpack.c.l.b16 %v325
    %v1088 = vunpack.c.h.b16 %v325
    %v1089 = vunpack.c.l.b16 %v326
    %v1090 = vunpack.c.h.b16 %v326
    %v1091 = vunpack.c.l.b16 %v327
    %v1092 = vunpack.c.h.b16 %v327
    %v1093 = vunpack.c.l.b16 %v328
    %v1094 = vunpack.c.h.b16 %v328
    %v1095 = vunpack.c.l.b16 %v329
    %v1096 = vunpack.c.h.b16 %v329
    %v1097 = vunpack.c.l.b16 %v330
    %v1098 = vunpack.c.h.b16 %v330
    %v1099 = vunpack.c.l.b16 %v331
    %v1100 = vunpack.c.h.b16 %v331
    %v1101 = vunpack.c.l.b16 %v332
    %v1102 = vunpack.c.h.b16 %v332
    %v1103 = vunpack.c.l.b16 %v333
    %v1104 = vunpack.c.h.b16 %v333
    %v1105 = vunpack.c.l.b16 %v334
    %v1106 = vunpack.c.h.b16 %v334
    %v1107 = vunpack.c.l.b16 %v335
    %v1108 = vunpack.c.h.b16 %v335
    %v1109 = vunpack.c.l.b16 %v336
    %v1110 = vunpack.c.h.b16 %v336
    %v1111 = vunpack.c.l.b16 %v337
    %v1112 = vunpack.c.h.b16 %v337
    %v1113 = vunpack.c.l.b16 %v338
    %v1114 = vunpack.c.h.b16 %v338
    %v1115 = vunpack.c.l.b16 %v339
    %v1116 = vunpack.c.h.b16 %v339
    %v1117 = vunpack.c.l.b16 %v340
    %v1118 = vunpack.c.h.b16 %v340
    %v1119 = vunpack.c.l.b16 %v341
    %v1120 = vunpack.c.h.b16 %v341
    %v1121 = vunpack.c.l.b16 %v342
    %v1122 = vunpack.c.h.b16 %v342
    %v1123 = vunpack.c.l.b16 %v343
    %v1124 = vunpack.c.h.b16 %v343
    %v1125 = vunpack.c.l.b16 %v344
    %v1126 = vunpack.c.h.b16 %v344
    %v1127 = vunpack.c.l.b16 %v345
    %v1128 = vunpack.c.h.b16 %v345
    %v1129 = vunpack.c.l.b16 %v346
    %v1130 = vunpack.c.h.b16 %v346
    %v1131 = vunpack.c.l.b16 %v347
    %v1132 = vunpack.c.h.b16 %v347
    %v1133 = vunpack.c.l.b16 %v348
    %v1134 = vunpack.c.h.b16 %v348
    %v1135 = vunpack.c.l.b16 %v349
    %v1136 = vunpack.c.h.b16 %v349
    %v1137 = vunpack.c.l.b16 %v350
    %v1138 = vunpack.c.h.b16 %v350
    %v1139 = vunpack.c.l.b16 %v351
    %v1140 = vunpack.c.h.b16 %v351
    %v1141 = vunpack.c.l.b16 %v352
    %v1142 = vunpack.c.h.b16 %v352
    %v1143 = vunpack.c.l.b16 %v353
    %v1144 = vunpack.c.h.b16 %v353
    %v1145 = vunpack.c.l.b16 %v354
    %v1146 = vunpack.c.h.b16 %v354
    %v1147 = vunpack.c.l.b16 %v355
    %v1148 = vunpack.c.h.b16 %v355
    %v1149 = vunpack.c.l.b16 %v356
    %v1150 = vunpack.c.h.b16 %v356
    %v1151 = vunpack.c.l.b16 %v357
    %v1152 = vunpack.c.h.b16 %v357
    %v1153 = vunpack.c.l.b16 %v358
    %v1154 = vunpack.c.h.b16 %v358
    %v1155 = vunpack.c.l.b16 %v359
    %v1156 = vunpack.c.h.b16 %v359
    %v1157 = vunpack.c.l.b16 %v360
    %v1158 = vunpack.c.h.b16 %v360
    %v1159 = vunpack.c.l.b16 %v361
    %v1160 = vunpack.c.h.b16 %v361
    %v1161 = vunpack.c.l.b16 %v362
    %v1162 = vunpack.c.h.b16 %v362
    %v1163 = vunpack.c.l.b16 %v363
    %v1164 = vunpack.c.h.b16 %v363
    %v1165 = vunpack.c.l.b16 %v364
    %v1166 = vunpack.c.h.b16 %v364
    %v1167 = vunpack.c.l.b16 %v365
    %v1168 = vunpack.c.h.b16 %v365
    %v1169 = vunpack.c.l.b16 %v366
    %v1170 = vunpack.c.h.b16 %v366
    %v1171 = vunpack.c.l.b16 %v367
    %v1172 = vunpack.c.h.b16 %v367
    %v1173 = vunpack.c.l.b16 %v368
    %v1174 = vunpack.c.h.b16 %v368
    %v1175 = vunpack.c.l.b16 %v369
    %v1176 = vunpack.c.h.b16 %v369
    %v1177 = vunpack.c.l.b16 %v370
    %v1178 = vunpack.c.h.b16 %v370
    %v1179 = vunpack.c.l.b16 %v371
    %v1180 = vunpack.c.h.b16 %v371
    %v1181 = vunpack.c.l.b16 %v372
    %v1182 = vunpack.c.h.b16 %v372
    %v1183 = vunpack.c.l.b16 %v373
    %v1184 = vunpack.c.h.b16 %v373
    %v1185 = vunpack.c.l.b16 %v374
    %v1186 = vunpack.c.h.b16 %v374
    %v1187 = vunpack.c.l.b16 %v375
    %v1188 = vunpack.c.h.b16 %v375
    %v1189 = vunpack.c.l.b16 %v376
    %v1190 = vunpack.c.h.b16 %v376
    %v1191 = vunpack.c.l.b16 %v377
    %v1192 = vunpack.c.h.b16 %v377
    %v1193 = vunpack.c.l.b16 %v378
    %v1194 = vunpack.c.h.b16 %v378
    %v1195 = vunpack.c.l.b16 %v379
    %v1196 = vunpack.c.h.b16 %v379
    %v1197 = vunpack.c.l.b16 %v380
    %v1198 = vunpack.c.h.b16 %v380
    %v1199 = vunpack.c.l.b16 %v381
    %v1200 = vunpack.c.h.b16 %v381
    %v1201 = vunpack.c.l.b16 %v382
    %v1202 = vunpack.c.h.b16 %v382
    %v1203 = vunpack.c.l.b16 %v383
    %v1204 = vunpack.c.h.b16 %v383
    %v1205 = vunpack.c.l.b16 %v384
    %v1206 = vunpack.c.h.b16 %v384
    %v1207 = vunpack.c.l.b16 %v385
    %v1208 = vunpack.c.h.b16 %v385
    %v1209 = vunpack.c.l.b16 %v386
    %v1210 = vunpack.c.h.b16 %v386
    %v1211 = vunpack.c.l.b16 %v387
    %v1212 = vunpack.c.h.b16 %v387
    %v1213 = vunpack.c.l.b16 %v388
    %v1214 = vunpack.c.h.b16 %v388
    %v1215 = vunpack.c.l.b16 %v389
    %v1216 = vunpack.c.h.b16 %v389
    %v1217 = vunpack.c.l.b16 %v390
    %v1218 = vunpack.c.h.b16 %v390
    %v1219 = vunpack.c.l.b16 %v391
    %v1220 = vunpack.c.h.b16 %v391
    %v1221 = vunpack.c.l.b16 %v392
    %v1222 = vunpack.c.h.b16 %v392
    %v1223 = vunpack.c.l.b16 %v393
    %v1224 = vunpack.c.h.b16 %v393
    %v1225 = vunpack.c.l.b16 %v394
    %v1226 = vunpack.c.h.b16 %v394
    %v1227 = vunpack.c.l.b16 %v395
    %v1228 = vunpack.c.h.b16 %v395
    %v1229 = vunpack.c.l.b16 %v396
    %v1230 = vunpack.c.h.b16 %v396
    %v1231 = vunpack.c.l.b16 %v397
    %v1232 = vunpack.c.h.b16 %v397
    %v1233 = vunpack.c.l.b16 %v398
    %v1234 = vunpack.c.h.b16 %v398
    %v1235 = vunpack.c.l.b16 %v399
    %v1236 = vunpack.c.h.b16 %v399
    %v1237 = vunpack.c.l.b16 %v400
    %v1238 = vunpack.c.h.b16 %v400
    %v1239 = vunpack.c.l.b16 %v401
    %v1240 = vunpack.c.h.b16 %v401
    %v1241 = vunpack.c.l.b16 %v402
    %v1242 = vunpack.c.h.b16 %v402
    %v1243 = vunpack.c.l.b16 %v403
    %v1244 = vunpack.c.h.b16 %v403
    %v1245 = vunpack.c.l.b16 %v404
    %v1246 = vunpack.c.h.b16 %v404
    %v1247 = vunpack.c.l.b16 %v405
    %v1248 = vunpack.c.h.b16 %v405
    %v1249 = vunpack.c.l.b16 %v406
    %v1250 = vunpack.c.h.b16 %v406
    %v1251 = vunpack.c.l.b16 %v407
    %v1252 = vunpack.c.h.b16 %v407
    %v1253 = vunpack.c.l.b16 %v408
    %v1254 = vunpack.c.h.b16 %v408
    %v1255 = vunpack.c.l.b16 %v409
    %v1256 = vunpack.c.h.b16 %v409
    %v1257 = vunpack.c.l.b16 %v410
    %v1258 = vunpack.c.h.b16 %v410
    %v1259 = vunpack.c.l.b16 %v411
    %v1260 = vunpack.c.h.b16 %v411
    %v1261 = vunpack.c.l.b16 %v412
    %v1262 = vunpack.c.h.b16 %v412
    %v1263 = vunpack.c.l.b16 %v413
    %v1264 = vunpack.c.h.b16 %v413
    %v1265 = vunpack.c.l.b16 %v414
    %v1266 = vunpack.c.h.b16 %v414
    %v1267 = vunpack.c.l.b16 %v415
    %v1268 = vunpack.c.h.b16 %v415
    %v1269 = vunpack.c.l.b16 %v416
    %v1270 = vunpack.c.h.b16 %v416
    %v1271 = vunpack.c.l.b16 %v417
    %v1272 = vunpack.c.h.b16 %v417
    %v1273 = vunpack.c.l.b16 %v418
    %v1274 = vunpack.c.h.b16 %v418
    %v1275 = vunpack.c.l.b16 %v419
    %v1276 = vunpack.c.h.b16 %v419
    %v1277 = vunpack.c.l.b16 %v420
    %v1278 = vunpack.c.h.b16 %v420
    %v1279 = vunpack.c.l.b16 %v421
    %v1280 = vunpack.c.h.b16 %v421
    %v1281 = vunpack.c.l.b16 %v422
    %v1282 = vunpack.c.h.b16 %v422
    %v1283 = vunpack.c.l.b16 %v423
    %v1284 = vunpack.c.h.b16 %v423
    %v1285 = vunpack.c.l.b16 %v424
    %v1286 = vunpack.c.h.b16 %v424
    %v1287 = vunpack.c.l.b16 %v425
    %v1288 = vunpack.c.h.b16 %v425
    %v1289 = vunpack.c.l.b16 %v426
    %v1290 = vunpack.c.h.b16 %v426
    %v1291 = vunpack.c.l.b16 %v427
    %v1292 = vunpack.c.h.b16 %v427
    %v1293 = vunpack.c.l.b16 %v428
    %v1294 = vunpack.c.h.b16 %v428
    %v1295 = vunpack.c.l.b16 %v429
    %v1296 = vunpack.c.h.b16 %v429
    %v1297 = vunpack.c.l.b16 %v430
    %v1298 = vunpack.c.h.b16 %v430
    %v1299 = vunpack.c.l.b16 %v431
    %v1300 = vunpack.c.h.b16 %v431
    %v1301 = vunpack.c.l.b16 %v432
    %v1302 = vunpack.c.h.b16 %v432
    %v1303 = vunpack.c.l.b16 %v433
    %v1304 = vunpack.c.h.b16 %v433
    %v1305 = vunpack.c.l.b16 %v434
    %v1306 = vunpack.c.h.b16 %v434
    %v1307 = vunpack.c.l.b16 %v435
    %v1308 = vunpack.c.h.b16 %v435
    %v1309 = vunpack.c.l.b16 %v436
    %v1310 = vunpack.c.h.b16 %v436
    %v1311 = vunpack.c.l.b16 %v437
    %v1312 = vunpack.c.h.b16 %v437
    %v1313 = vunpack.c.l.b16 %v438
    %v1314 = vunpack.c.h.b16 %v438
    %v1315 = vunpack.c.l.b16 %v439
    %v1316 = vunpack.c.h.b16 %v439
    %v1317 = vunpack.c.l.b16 %v440
    %v1318 = vunpack.c.h.b16 %v440
    %v1319 = vunpack.c.l.b16 %v441
    %v1320 = vunpack.c.h.b16 %v441
    %v1321 = vunpack.c.l.b16 %v442
    %v1322 = vunpack.c.h.b16 %v442
    %v1323 = vunpack.c.l.b16 %v443
    %v1324 = vunpack.c.h.b16 %v443
    %v1325 = vunpack.c.l.b16 %v444
    %v1326 = vunpack.c.h.b16 %v444
    %v1327 = vunpack.c.l.b16 %v445
    %v1328 = vunpack.c.h.b16 %v445
    %v1329 = vunpack.c.l.b16 %v446
    %v1330 = vunpack.c.h.b16 %v446
    %v1331 = vunpack.c.l.b16 %v447
    %v1332 = vunpack.c.h.b16 %v447
    %v1333 = vunpack.c.l.b16 %v448
    %v1334 = vunpack.c.h.b16 %v448
    %v1335 = vunpack.c.l.b16 %v449
    %v1336 = vunpack.c.h.b16 %v449
    %v1337 = vunpack.c.l.b16 %v450
    %v1338 = vunpack.c.h.b16 %v450
    %v1339 = vunpack.c.l.b16 %v451
    %v1340 = vunpack.c.h.b16 %v451
    %v1341 = vunpack.c.l.b16 %v452
    %v1342 = vunpack.c.h.b16 %v452
    %v1343 = vunpack.c.l.b16 %v453
    %v1344 = vunpack.c.h.b16 %v453
    %v1345 = vunpack.c.l.b16 %v454
    %v1346 = vunpack.c.h.b16 %v454
    %v1347 = vunpack.c.l.b16 %v455
    %v1348 = vunpack.c.h.b16 %v455
    %v1349 = vunpack.c.l.b16 %v456
    %v1350 = vunpack.c.h.b16 %v456
    %v1351 = vunpack.c.l.b16 %v457
    %v1352 = vunpack.c.h.b16 %v457
    %v1353 = vunpack.c.l.b16 %v458
    %v1354 = vunpack.c.h.b16 %v458
    %v1355 = vpack.c.b16 %v785, %v779
    %v1356 = vpack.c.b16 %v786, %v780
    %v1357 = vpack.c.b16 %v787, %v781
    %v1358 = vpack.c.b16 %v788, %v782
    %v1359 = vpack.c.b16 %v789, %v783
    %v1360 = vpack.c.b16 %v790, %v784
    %v1361 = vpack.c.b16 %v797, %v791
    %v1362 = vpack.c.b16 %v798, %v792
    %v1363 = vpack.c.b16 %v799, %v793
    %v1364 = vpack.c.b16 %v800, %v794
    %v1365 = vpack.c.b16 %v801, %v795
    %v1366 = vpack.c.b16 %v802, %v796
    %v1367 = vpack.c.b16 %v809, %v803
    %v1368 = vpack.c.b16 %v810, %v804
    %v1369 = vpack.c.b16 %v811, %v805
    %v1370 = vpack.c.b16 %v812, %v806
    %v1371 = vpack.c.b16 %v813, %v807
    %v1372 = vpack.c.b16 %v814, %v808
    %v1373 = vpack.c.b16 %v821, %v815
    %v1374 = vpack.c.b16 %v822, %v816
    %v1375 = vpack.c.b16 %v823, %v817
    %v1376 = vpack.c.b16 %v824, %v818
    %v1377 = vpack.c.b16 %v825, %v819
    %v1378 = vpack.c.b16 %v826, %v820
    %v1379 = vpack.c.b16 %v833, %v827
    %v1380 = vpack.c.b16 %v834, %v828
    %v1381 = vpack.c.b16 %v835, %v829
    %v1382 = vpack.c.b16 %v836, %v830
    %v1383 = vpack.c.b16 %v837, %v831
    %v1384 = vpack.c.b16 %v838, %v832
    %v1385 = vpack.c.b16 %v845, %v839
    %v1386 = vpack.c.b16 %v846, %v840
    %v1387 = vpack.c.b16 %v847, %v841
    %v1388 = vpack.c.b16 %v848, %v842
    %v1389 = vpack.c.b16 %v849, %v843
    %v1390 = vpack.c.b16 %v850, %v844
    %v1391 = vpack.c.b16 %v857, %v851
    %v1392 = vpack.c.b16 %v858, %v852
    %v1393 = vpack.c.b16 %v859, %v853
    %v1394 = vpack.c.b16 %v860, %v854
    %v1395 = vpack.c.b16 %v861, %v855
    %v1396 = vpack.c.b16 %v862, %v856
    %v1397 = vpack.c.b16 %v869, %v863
    %v1398 = vpack.c.b16 %v870, %v864
    %v1399 = vpack.c.b16 %v871, %v865
    %v1400 = vpack.c.b16 %v872, %v866
    %v1401 = vpack.c.b16 %v873, %v867
    %v1402 = vpack.c.b16 %v874, %v868
    %v1403 = vpack.c.b16 %v881, %v875
    %v1404 = vpack.c.b16 %v882, %v876
    %v1405 = vpack.c.b16 %v883, %v877
    %v1406 = vpack.c.b16 %v884, %v878
    %v1407 = vpack.c.b16 %v885, %v879
    %v1408 = vpack.c.b16 %v886, %v880
    %v1409 = vpack.c.b16 %v893, %v887
    %v1410 = vpack.c.b16 %v894, %v888
    %v1411 = vpack.c.b16 %v895, %v889
    %v1412 = vpack.c.b16 %v896, %v890
    %v1413 = vpack.c.b16 %v897, %v891
    %v1414 = vpack.c.b16 %v898, %v892
    %v1415 = vpack.c.b16 %v905, %v899
    %v1416 = vpack.c.b16 %v906, %v900
    %v1417 = vpack.c.b16 %v907, %v901
    %v1418 = vpack.c.b16 %v908, %v902
    %v1419 = vpack.c.b16 %v909, %v903
    %v1420 = vpack.c.b16 %v910, %v904
    %v1421 = vpack.c.b16 %v917, %v911
    %v1422 = vpack.c.b16 %v918, %v912
    %v1423 = vpack.c.b16 %v919, %v913
    %v1424 = vpack.c.b16 %v920, %v914
    %v1425 = vpack.c.b16 %v921, %v915
    %v1426 = vpack.c.b16 %v922, %v916
    %v1427 = vpack.c.b16 %v929, %v923
    %v1428 = vpack.c.b16 %v930, %v924
    %v1429 = vpack.c.b16 %v931, %v925
    %v1430 = vpack.c.b16 %v932, %v926
    %v1431 = vpack.c.b16 %v933, %v927
    %v1432 = vpack.c.b16 %v934, %v928
    %v1433 = vpack.c.b16 %v941, %v935
    %v1434 = vpack.c.b16 %v942, %v936
    %v1435 = vpack.c.b16 %v943, %v937
    %v1436 = vpack.c.b16 %v944, %v938
    %v1437 = vpack.c.b16 %v945, %v939
    %v1438 = vpack.c.b16 %v946, %v940
    %v1439 = vpack.c.b16 %v953, %v947
    %v1440 = vpack.c.b16 %v954, %v948
    %v1441 = vpack.c.b16 %v955, %v949
    %v1442 = vpack.c.b16 %v956, %v950
    %v1443 = vpack.c.b16 %v957, %v951
    %v1444 = vpack.c.b16 %v958, %v952
    %v1445 = vpack.c.b16 %v965, %v959
    %v1446 = vpack.c.b16 %v966, %v960
    %v1447 = vpack.c.b16 %v967, %v961
    %v1448 = vpack.c.b16 %v968, %v962
    %v1449 = vpack.c.b16 %v969, %v963
    %v1450 = vpack.c.b16 %v970, %v964
    %v1451 = vpack.c.b16 %v977, %v971
    %v1452 = vpack.c.b16 %v978, %v972
    %v1453 = vpack.c.b16 %v979, %v973
    %v1454 = vpack.c.b16 %v980, %v974
    %v1455 = vpack.c.b16 %v981, %v975
    %v1456 = vpack.c.b16 %v982, %v976
    %v1457 = vpack.c.b16 %v989, %v983
    %v1458 = vpack.c.b16 %v990, %v984
    %v1459 = vpack.c.b16 %v991, %v985
    %v1460 = vpack.c.b16 %v992, %v986
    %v1461 = vpack.c.b16 %v993, %v987
    %v1462 = vpack.c.b16 %v994, %v988
    %v1463 = vpack.c.b16 %v1001, %v995
    %v1464 = vpack.c.b16 %v1002, %v996
    %v1465 = vpack.c.b16 %v1003, %v997
    %v1466 = vpack.c.b16 %v1004, %v998
    %v1467 = vpack.c.b16 %v1005, %v999
    %v1468 = vpack.c.b16 %v1006, %v1000
    %v1469 = vpack.c.b16 %v1013, %v1007
    %v1470 = vpack.c.b16 %v1014, %v1008
    %v1471 = vpack.c.b16 %v1015, %v1009
    %v1472 = vpack.c.b16 %v1016, %v1010
    %v1473 = vpack.c.b16 %v1017, %v1011
    %v1474 = vpack.c.b16 %v1018, %v1012
    %v1475 = vpack.c.b16 %v1025, %v1019
    %v1476 = vpack.c.b16 %v1026, %v1020
    %v1477 = vpack.c.b16 %v1027, %v1021
    %v1478 = vpack.c.b16 %v1028, %v1022
    %v1479 = vpack.c.b16 %v1029, %v1023
    %v1480 = vpack.c.b16 %v1030, %v1024
    %v1481 = vpack.c.b16 %v1037, %v1031
    %v1482 = vpack.c.b16 %v1038, %v1032
    %v1483 = vpack.c.b16 %v1039, %v1033
    %v1484 = vpack.c.b16 %v1040, %v1034
    %v1485 = vpack.c.b16 %v1041, %v1035
    %v1486 = vpack.c.b16 %v1042, %v1036
    %v1487 = vpack.c.b16 %v1049, %v1043
    %v1488 = vpack.c.b16 %v1050, %v1044
    %v1489 = vpack.c.b16 %v1051, %v1045
    %v1490 = vpack.c.b16 %v1052, %v1046
    %v1491 = vpack.c.b16 %v1053, %v1047
    %v1492 = vpack.c.b16 %v1054, %v1048
    %v1493 = vpack.c.b16 %v1061, %v1055
    %v1494 = vpack.c.b16 %v1062, %v1056
    %v1495 = vpack.c.b16 %v1063, %v1057
    %v1496 = vpack.c.b16 %v1064, %v1058
    %v1497 = vpack.c.b16 %v1065, %v1059
    %v1498 = vpack.c.b16 %v1066, %v1060
    %v1499 = vpack.c.b16 %v1073, %v1067
    %v1500 = vpack.c.b16 %v1074, %v1068
    %v1501 = vpack.c.b16 %v1075, %v1069
    %v1502 = vpack.c.b16 %v1076, %v1070
    %v1503 = vpack.c.b16 %v1077, %v1071
    %v1504 = vpack.c.b16 %v1078, %v1072
    %v1505 = vpack.c.b16 %v1085, %v1079
    %v1506 = vpack.c.b16 %v1086, %v1080
    %v1507 = vpack.c.b16 %v1087, %v1081
    %v1508 = vpack.c.b16 %v1088, %v1082
    %v1509 = vpack.c.b16 %v1089, %v1083
    %v1510 = vpack.c.b16 %v1090, %v1084
    %v1511 = vpack.c.b16 %v1097, %v1091
    %v1512 = vpack.c.b16 %v1098, %v1092
    %v1513 = vpack.c.b16 %v1099, %v1093
    %v1514 = vpack.c.b16 %v1100, %v1094
    %v1515 = vpack.c.b16 %v1101, %v1095
    %v1516 = vpack.c.b16 %v1102, %v1096
    %v1517 = vpack.c.b16 %v1109, %v1103
    %v1518 = vpack.c.b16 %v1110, %v1104
    %v1519 = vpack.c.b16 %v1111, %v1105
    %v1520 = vpack.c.b16 %v1112, %v1106
    %v1521 = vpack.c.b16 %v1113, %v1107
    %v1522 = vpack.c.b16 %v1114, %v1108
    %v1523 = vpack.c.b16 %v1121, %v1115
    %v1524 = vpack.c.b16 %v1122, %v1116
    %v1525 = vpack.c.b16 %v1123, %v1117
    %v1526 = vpack.c.b16 %v1124, %v1118
    %v1527 = vpack.c.b16 %v1125, %v1119
    %v1528 = vpack.c.b16 %v1126, %v1120
    %v1529 = vpack.c.b16 %v1133, %v1127
    %v1530 = vpack.c.b16 %v1134, %v1128
    %v1531 = vpack.c.b16 %v1135, %v1129
    %v1532 = vpack.c.b16 %v1136, %v1130
    %v1533 = vpack.c.b16 %v1137, %v1131
    %v1534 = vpack.c.b16 %v1138, %v1132
    %v1535 = vpack.c.b16 %v1145, %v1139
    %v1536 = vpack.c.b16 %v1146, %v1140
    %v1537 = vpack.c.b16 %v1147, %v1141
    %v1538 = vpack.c.b16 %v1148, %v1142
    %v1539 = vpack.c.b16 %v1149, %v1143
    %v1540 = vpack.c.b16 %v1150, %v1144
    %v1541 = vpack.c.b16 %v1157, %v1151
    %v1542 = vpack.c.b16 %v1158, %v1152
    %v1543 = vpack.c.b16 %v1159, %v1153
    %v1544 = vpack.c.b16 %v1160, %v1154
    %v1545 = vpack.c.b16 %v1161, %v1155
    %v1546 = vpack.c.b16 %v1162, %v1156
    %v1547 = vpack.c.b16 %v1169, %v1163
    %v1548 = vpack.c.b16 %v1170, %v1164
    %v1549 = vpack.c.b16 %v1171, %v1165
    %v1550 = vpack.c.b16 %v1172, %v1166
    %v1551 = vpack.c.b16 %v1173, %v1167
    %v1552 = vpack.c.b16 %v1174, %v1168
    %v1553 = vpack.c.b16 %v1181, %v1175
    %v1554 = vpack.c.b16 %v1182, %v1176
    %v1555 = vpack.c.b16 %v1183, %v1177
    %v1556 = vpack.c.b16 %v1184, %v1178
    %v1557 = vpack.c.b16 %v1185, %v1179
    %v1558 = vpack.c.b16 %v1186, %v1180
    %v1559 = vpack.c.b16 %v1193, %v1187
    %v1560 = vpack.c.b16 %v1194, %v1188
    %v1561 = vpack.c.b16 %v1195, %v1189
    %v1562 = vpack.c.b16 %v1196, %v1190
    %v1563 = vpack.c.b16 %v1197, %v1191
    %v1564 = vpack.c.b16 %v1198, %v1192
    %v1565 = vpack.c.b16 %v1205, %v1199
    %v1566 = vpack.c.b16 %v1206, %v1200
    %v1567 = vpack.c.b16 %v1207, %v1201
    %v1568 = vpack.c.b16 %v1208, %v1202
    %v1569 = vpack.c.b16 %v1209, %v1203
    %v1570 = vpack.c.b16 %v1210, %v1204
    %v1571 = vpack.c.b16 %v1217, %v1211
    %v1572 = vpack.c.b16 %v1218, %v1212
    %v1573 = vpack.c.b16 %v1219, %v1213
    %v1574 = vpack.c.b16 %v1220, %v1214
    %v1575 = vpack.c.b16 %v1221, %v1215
    %v1576 = vpack.c.b16 %v1222, %v1216
    %v1577 = vpack.c.b16 %v1229, %v1223
    %v1578 = vpack.c.b16 %v1230, %v1224
    %v1579 = vpack.c.b16 %v1231, %v1225
    %v1580 = vpack.c.b16 %v1232, %v1226
    %v1581 = vpack.c.b16 %v1233, %v1227
    %v1582 = vpack.c.b16 %v1234, %v1228
    %v1583 = vpack.c.b16 %v1241, %v1235
    %v1584 = vpack.c.b16 %v1242, %v1236
    %v1585 = vpack.c.b16 %v1243, %v1237
    %v1586 = vpack.c.b16 %v1244, %v1238
    %v1587 = vpack.c.b16 %v1245, %v1239
    %v1588 = vpack.c.b16 %v1246, %v1240
    %v1589 = vpack.c.b16 %v1253, %v1247
    %v1590 = vpack.c.b16 %v1254, %v1248
    %v1591 = vpack.c.b16 %v1255, %v1249
    %v1592 = vpack.c.b16 %v1256, %v1250
    %v1593 = vpack.c.b16 %v1257, %v1251
    %v1594 = vpack.c.b16 %v1258, %v1252
    %v1595 = vpack.c.b16 %v1265, %v1259
    %v1596 = vpack.c.b16 %v1266, %v1260
    %v1597 = vpack.c.b16 %v1267, %v1261
    %v1598 = vpack.c.b16 %v1268, %v1262
    %v1599 = vpack.c.b16 %v1269, %v1263
    %v1600 = vpack.c.b16 %v1270, %v1264
    %v1601 = vpack.c.b16 %v1277, %v1271
    %v1602 = vpack.c.b16 %v1278, %v1272
    %v1603 = vpack.c.b16 %v1279, %v1273
    %v1604 = vpack.c.b16 %v1280, %v1274
    %v1605 = vpack.c.b16 %v1281, %v1275
    %v1606 = vpack.c.b16 %v1282, %v1276
    %v1607 = vpack.c.b16 %v1289, %v1283
    %v1608 = vpack.c.b16 %v1290, %v1284
    %v1609 = vpack.c.b16 %v1291, %v1285
    %v1610 = vpack.c.b16 %v1292, %v1286
    %v1611 = vpack.c.b16 %v1293, %v1287
    %v1612 = vpack.c.b16 %v1294, %v1288
    %v1613 = vpack.c.b16 %v1301, %v1295
    %v1614 = vpack.c.b16 %v1302, %v1296
    %v1615 = vpack.c.b16 %v1303, %v1297
    %v1616 = vpack.c.b16 %v1304, %v1298
    %v1617 = vpack.c.b16 %v1305, %v1299
    %v1618 = vpack.c.b16 %v1306, %v1300
    %v1619 = vpack.c.b16 %v1313, %v1307
    %v1620 = vpack.c.b16 %v1314, %v1308
    %v1621 = vpack.c.b16 %v1315, %v1309
    %v1622 = vpack.c.b16 %v1316, %v1310
    %v1623 = vpack.c.b16 %v1317, %v1311
    %v1624 = vpack.c.b16 %v1318, %v1312
    %v1625 = vpack.c.b16 %v1325, %v1319
    %v1626 = vpack.c.b16 %v1326, %v1320
    %v1627 = vpack.c.b16 %v1327, %v1321
    %v1628 = vpack.c.b16 %v1328, %v1322
    %v1629 = vpack.c.b16 %v1329, %v1323
    %v1630 = vpack.c.b16 %v1330, %v1324
    %v1631 = vpack.c.b16 %v1337, %v1331
    %v1632 = vpack.c.b16 %v1338, %v1332
    %v1633 = vpack.c.b16 %v1339, %v1333
    %v1634 = vpack.c.b16 %v1340, %v1334
    %v1635 = vpack.c.b16 %v1341, %v1335
    %v1636 = vpack.c.b16 %v1342, %v1336
    %v1637 = vpack.c.b16 %v1349, %v1343
    %v1638 = vpack.c.b16 %v1350, %v1344
    %v1639 = vpack.c.b16 %v1351, %v1345
    %v1640 = vpack.c.b16 %v1352, %v1346
    %v1641 = vpack.c.b16 %v1353, %v1347
    %v1642 = vpack.c.b16 %v1354, %v1348
    %1931 = vmatprep.subr.bf16.mxu0 %v1356
    %1932 = vmatpush1.bf16.msra.mxu0 %v1355
    %1933 = vmatprep.subr.bf16.mxu0 %v1362
    %1934 = vmatpush1.bf16.msra.mxu0 %v1361
    %1935 = vmatprep.subr.bf16.mxu0 %v1368
    %1936 = vmatpush1.bf16.msra.mxu0 %v1367
    %1937 = vmatprep.subr.bf16.mxu0 %v1374
    %1938 = vmatpush1.bf16.msra.mxu0 %v1373
    %1939 = vmatprep.subr.bf16.mxu0 %v1380
    %1940 = vmatpush1.bf16.msra.mxu0 %v1379
    %1941 = vmatprep.subr.bf16.mxu0 %v1386
    %1942 = vmatpush1.bf16.msra.mxu0 %v1385
    %1943 = vmatprep.subr.bf16.mxu0 %v1392
    %1944 = vmatpush1.bf16.msra.mxu0 %v1391
    %1945 = vmatprep.subr.bf16.mxu0 %v1398
    %1946 = vmatpush1.bf16.msra.mxu0 %v1397
    %1947 = vmatprep.subr.bf16.mxu0 %v1404
    %1948 = vmatpush1.bf16.msra.mxu0 %v1403
    %1949 = vmatprep.subr.bf16.mxu0 %v1410
    %1950 = vmatpush1.bf16.msra.mxu0 %v1409
    %1951 = vmatprep.subr.bf16.mxu0 %v1416
    %1952 = vmatpush1.bf16.msra.mxu0 %v1415
    %1953 = vmatprep.subr.bf16.mxu0 %v1422
    %1954 = vmatpush1.bf16.msra.mxu0 %v1421
    %1955 = vmatprep.subr.bf16.mxu0 %v1428
    %1956 = vmatpush1.bf16.msra.mxu0 %v1427
    %1957 = vmatprep.subr.bf16.mxu0 %v1434
    %1958 = vmatpush1.bf16.msra.mxu0 %v1433
    %1959 = vmatprep.subr.bf16.mxu0 %v1440
    %1960 = vmatpush1.bf16.msra.mxu0 %v1439
    %1961 = vmatprep.subr.bf16.mxu0 %v1446
    %1962 = vmatpush1.bf16.msra.mxu0 %v1445
    %1963 = vmatprep.mubr.bf16.mxu0 %v166
    %1964 = vmatmul.mubr.bf16.gmra.mrb[0].mxu0 %v165
    %v1965 = vpop.f32.mrb[0].mxu0
    %v1966 = vadd.f32 %v464, %v1965
    %v1967 = vpop.f32.mrb[0].mxu0
    %v1968 = vadd.f32 %v468, %v1967
    %v1969 = vpop.f32.mrb[0].mxu0
    %v1970 = vadd.f32 %v464, %v1969
    %v1971 = vpop.f32.mrb[0].mxu0
    %v1972 = vadd.f32 %v468, %v1971
    %1973 = vdwg.mxu0
    %1974 = vmatprep.subr.bf16.mxu0 %v1452
    %1975 = vmatpush1.bf16.msra.mxu0 %v1451
    %1976 = vmatprep.subr.bf16.mxu0 %v1458
    %1977 = vmatpush1.bf16.msra.mxu0 %v1457
    %1978 = vmatprep.subr.bf16.mxu0 %v1464
    %1979 = vmatpush1.bf16.msra.mxu0 %v1463
    %1980 = vmatprep.subr.bf16.mxu0 %v1470
    %1981 = vmatpush1.bf16.msra.mxu0 %v1469
    %1982 = vmatprep.subr.bf16.mxu0 %v1476
    %1983 = vmatpush1.bf16.msra.mxu0 %v1475
    %1984 = vmatprep.subr.bf16.mxu0 %v1482
    %1985 = vmatpush1.bf16.msra.mxu0 %v1481
    %1986 = vmatprep.subr.bf16.mxu0 %v1488
    %1987 = vmatpush1.bf16.msra.mxu0 %v1487
    %1988 = vmatprep.subr.bf16.mxu0 %v1494
    %1989 = vmatpush1.bf16.msra.mxu0 %v1493
    %1990 = vmatprep.subr.bf16.mxu0 %v1500
    %1991 = vmatpush1.bf16.msra.mxu0 %v1499
    %1992 = vmatprep.subr.bf16.mxu0 %v1506
    %1993 = vmatpush1.bf16.msra.mxu0 %v1505
    %1994 = vmatprep.subr.bf16.mxu0 %v1512
    %1995 = vmatpush1.bf16.msra.mxu0 %v1511
    %1996 = vmatprep.subr.bf16.mxu0 %v1518
    %1997 = vmatpush1.bf16.msra.mxu0 %v1517
    %1998 = vmatprep.subr.bf16.mxu0 %v1524
    %1999 = vmatpush1.bf16.msra.mxu0 %v1523
    %2000 = vmatprep.subr.bf16.mxu0 %v1530
    %2001 = vmatpush1.bf16.msra.mxu0 %v1529
    %2002 = vmatprep.subr.bf16.mxu0 %v1536
    %2003 = vmatpush1.bf16.msra.mxu0 %v1535
    %2004 = vmatprep.subr.bf16.mxu0 %v1542
    %2005 = vmatpush1.bf16.msra.mxu0 %v1541
    %2006 = vmatprep.mubr.bf16.mxu0 %v168
    %2007 = vmatmul.mubr.bf16.gmra.mrb[0].mxu0 %v167
    %v2008 = vpop.f32.mrb[0].mxu0
    %v2009 = vadd.f32 %v1966, %v2008
    %v2010 = vpop.f32.mrb[0].mxu0
    %v2011 = vadd.f32 %v1968, %v2010
    %v2012 = vpop.f32.mrb[0].mxu0
    %v2013 = vadd.f32 %v1970, %v2012
    %v2014 = vpop.f32.mrb[0].mxu0
    %v2015 = vadd.f32 %v1972, %v2014
    %2016 = vdwg.mxu0
    %2017 = vmatprep.subr.bf16.mxu0 %v1548
    %2018 = vmatpush1.bf16.msra.mxu0 %v1547
    %2019 = vmatprep.subr.bf16.mxu0 %v1554
    %2020 = vmatpush1.bf16.msra.mxu0 %v1553
    %2021 = vmatprep.subr.bf16.mxu0 %v1560
    %2022 = vmatpush1.bf16.msra.mxu0 %v1559
    %2023 = vmatprep.subr.bf16.mxu0 %v1566
    %2024 = vmatpush1.bf16.msra.mxu0 %v1565
    %2025 = vmatprep.subr.bf16.mxu0 %v1572
    %2026 = vmatpush1.bf16.msra.mxu0 %v1571
    %2027 = vmatprep.subr.bf16.mxu0 %v1578
    %2028 = vmatpush1.bf16.msra.mxu0 %v1577
    %2029 = vmatprep.subr.bf16.mxu0 %v1584
    %2030 = vmatpush1.bf16.msra.mxu0 %v1583
    %2031 = vmatprep.subr.bf16.mxu0 %v1590
    %2032 = vmatpush1.bf16.msra.mxu0 %v1589
    %2033 = vmatprep.subr.bf16.mxu0 %v1596
    %2034 = vmatpush1.bf16.msra.mxu0 %v1595
    %2035 = vmatprep.subr.bf16.mxu0 %v1602
    %2036 = vmatpush1.bf16.msra.mxu0 %v1601
    %2037 = vmatprep.subr.bf16.mxu0 %v1608
    %2038 = vmatpush1.bf16.msra.mxu0 %v1607
    %2039 = vmatprep.subr.bf16.mxu0 %v1614
    %2040 = vmatpush1.bf16.msra.mxu0 %v1613
    %2041 = vmatprep.subr.bf16.mxu0 %v1620
    %2042 = vmatpush1.bf16.msra.mxu0 %v1619
    %2043 = vmatprep.subr.bf16.mxu0 %v1626
    %2044 = vmatpush1.bf16.msra.mxu0 %v1625
    %2045 = vmatprep.subr.bf16.mxu0 %v1632
    %2046 = vmatpush1.bf16.msra.mxu0 %v1631
    %2047 = vmatprep.subr.bf16.mxu0 %v1638
    %2048 = vmatpush1.bf16.msra.mxu0 %v1637
    %2049 = vmatprep.mubr.bf16.mxu0 %v170
    %2050 = vmatmul.mubr.bf16.gmra.mrb[0].mxu0 %v169
    %v2051 = vpop.f32.mrb[0].mxu0
    %v2052 = vadd.f32 %v2009, %v2051
    %v2053 = vpop.f32.mrb[0].mxu0
    %v2054 = vadd.f32 %v2011, %v2053
    %v2055 = vpop.f32.mrb[0].mxu0
    %v2056 = vadd.f32 %v2013, %v2055
    %v2057 = vpop.f32.mrb[0].mxu0
    %v2058 = vadd.f32 %v2015, %v2057
    %2059 = vdwg.mxu0
    %2060 = vmatprep.subr.bf16.mxu0 %v1358
    %2061 = vmatpush1.bf16.msra.mxu0 %v1357
    %2062 = vmatprep.subr.bf16.mxu0 %v1364
    %2063 = vmatpush1.bf16.msra.mxu0 %v1363
    %2064 = vmatprep.subr.bf16.mxu0 %v1370
    %2065 = vmatpush1.bf16.msra.mxu0 %v1369
    %2066 = vmatprep.subr.bf16.mxu0 %v1376
    %2067 = vmatpush1.bf16.msra.mxu0 %v1375
    %2068 = vmatprep.subr.bf16.mxu0 %v1382
    %2069 = vmatpush1.bf16.msra.mxu0 %v1381
    %2070 = vmatprep.subr.bf16.mxu0 %v1388
    %2071 = vmatpush1.bf16.msra.mxu0 %v1387
    %2072 = vmatprep.subr.bf16.mxu0 %v1394
    %2073 = vmatpush1.bf16.msra.mxu0 %v1393
    %2074 = vmatprep.subr.bf16.mxu0 %v1400
    %2075 = vmatpush1.bf16.msra.mxu0 %v1399
    %2076 = vmatprep.subr.bf16.mxu0 %v1406
    %2077 = vmatpush1.bf16.msra.mxu0 %v1405
    %2078 = vmatprep.subr.bf16.mxu0 %v1412
    %2079 = vmatpush1.bf16.msra.mxu0 %v1411
    %2080 = vmatprep.subr.bf16.mxu0 %v1418
    %2081 = vmatpush1.bf16.msra.mxu0 %v1417
    %2082 = vmatprep.subr.bf16.mxu0 %v1424
    %2083 = vmatpush1.bf16.msra.mxu0 %v1423
    %2084 = vmatprep.subr.bf16.mxu0 %v1430
    %2085 = vmatpush1.bf16.msra.mxu0 %v1429
    %2086 = vmatprep.subr.bf16.mxu0 %v1436
    %2087 = vmatpush1.bf16.msra.mxu0 %v1435
    %2088 = vmatprep.subr.bf16.mxu0 %v1442
    %2089 = vmatpush1.bf16.msra.mxu0 %v1441
    %2090 = vmatprep.subr.bf16.mxu0 %v1448
    %2091 = vmatpush1.bf16.msra.mxu0 %v1447
    %2092 = vmatprep.mubr.bf16.mxu0 %v166
    %2093 = vmatmul.mubr.bf16.gmra.mrb[0].mxu0 %v165
    %v2094 = vpop.f32.mrb[0].mxu0
    %v2095 = vadd.f32 %v472, %v2094
    %v2096 = vpop.f32.mrb[0].mxu0
    %v2097 = vadd.f32 %v476, %v2096
    %v2098 = vpop.f32.mrb[0].mxu0
    %v2099 = vadd.f32 %v472, %v2098
    %v2100 = vpop.f32.mrb[0].mxu0
    %v2101 = vadd.f32 %v476, %v2100
    %2102 = vdwg.mxu0
    %2103 = vmatprep.subr.bf16.mxu0 %v1454
    %2104 = vmatpush1.bf16.msra.mxu0 %v1453
    %2105 = vmatprep.subr.bf16.mxu0 %v1460
    %2106 = vmatpush1.bf16.msra.mxu0 %v1459
    %2107 = vmatprep.subr.bf16.mxu0 %v1466
    %2108 = vmatpush1.bf16.msra.mxu0 %v1465
    %2109 = vmatprep.subr.bf16.mxu0 %v1472
    %2110 = vmatpush1.bf16.msra.mxu0 %v1471
    %2111 = vmatprep.subr.bf16.mxu0 %v1478
    %2112 = vmatpush1.bf16.msra.mxu0 %v1477
    %2113 = vmatprep.subr.bf16.mxu0 %v1484
    %2114 = vmatpush1.bf16.msra.mxu0 %v1483
    %2115 = vmatprep.subr.bf16.mxu0 %v1490
    %2116 = vmatpush1.bf16.msra.mxu0 %v1489
    %2117 = vmatprep.subr.bf16.mxu0 %v1496
    %2118 = vmatpush1.bf16.msra.mxu0 %v1495
    %2119 = vmatprep.subr.bf16.mxu0 %v1502
    %2120 = vmatpush1.bf16.msra.mxu0 %v1501
    %2121 = vmatprep.subr.bf16.mxu0 %v1508
    %2122 = vmatpush1.bf16.msra.mxu0 %v1507
    %2123 = vmatprep.subr.bf16.mxu0 %v1514
    %2124 = vmatpush1.bf16.msra.mxu0 %v1513
    %2125 = vmatprep.subr.bf16.mxu0 %v1520
    %2126 = vmatpush1.bf16.msra.mxu0 %v1519
    %2127 = vmatprep.subr.bf16.mxu0 %v1526
    %2128 = vmatpush1.bf16.msra.mxu0 %v1525
    %2129 = vmatprep.subr.bf16.mxu0 %v1532
    %2130 = vmatpush1.bf16.msra.mxu0 %v1531
    %2131 = vmatprep.subr.bf16.mxu0 %v1538
    %2132 = vmatpush1.bf16.msra.mxu0 %v1537
    %2133 = vmatprep.subr.bf16.mxu0 %v1544
    %2134 = vmatpush1.bf16.msra.mxu0 %v1543
    %2135 = vmatprep.mubr.bf16.mxu0 %v168
    %2136 = vmatmul.mubr.bf16.gmra.mrb[0].mxu0 %v167
    %v2137 = vpop.f32.mrb[0].mxu0
    %v2138 = vadd.f32 %v2095, %v2137
    %v2139 = vpop.f32.mrb[0].mxu0
    %v2140 = vadd.f32 %v2097, %v2139
    %v2141 = vpop.f32.mrb[0].mxu0
    %v2142 = vadd.f32 %v2099, %v2141
    %v2143 = vpop.f32.mrb[0].mxu0
    %v2144 = vadd.f32 %v2101, %v2143
    %2145 = vdwg.mxu0
    %2146 = vmatprep.subr.bf16.mxu0 %v1550
    %2147 = vmatpush1.bf16.msra.mxu0 %v1549
    %2148 = vmatprep.subr.bf16.mxu0 %v1556
    %2149 = vmatpush1.bf16.msra.mxu0 %v1555
    %2150 = vmatprep.subr.bf16.mxu0 %v1562
    %2151 = vmatpush1.bf16.msra.mxu0 %v1561
    %2152 = vmatprep.subr.bf16.mxu0 %v1568
    %2153 = vmatpush1.bf16.msra.mxu0 %v1567
    %2154 = vmatprep.subr.bf16.mxu0 %v1574
    %2155 = vmatpush1.bf16.msra.mxu0 %v1573
    %2156 = vmatprep.subr.bf16.mxu0 %v1580
    %2157 = vmatpush1.bf16.msra.mxu0 %v1579
    %2158 = vmatprep.subr.bf16.mxu0 %v1586
    %2159 = vmatpush1.bf16.msra.mxu0 %v1585
    %2160 = vmatprep.subr.bf16.mxu0 %v1592
    %2161 = vmatpush1.bf16.msra.mxu0 %v1591
    %2162 = vmatprep.subr.bf16.mxu0 %v1598
    %2163 = vmatpush1.bf16.msra.mxu0 %v1597
    %2164 = vmatprep.subr.bf16.mxu0 %v1604
    %2165 = vmatpush1.bf16.msra.mxu0 %v1603
    %2166 = vmatprep.subr.bf16.mxu0 %v1610
    %2167 = vmatpush1.bf16.msra.mxu0 %v1609
    %2168 = vmatprep.subr.bf16.mxu0 %v1616
    %2169 = vmatpush1.bf16.msra.mxu0 %v1615
    %2170 = vmatprep.subr.bf16.mxu0 %v1622
    %2171 = vmatpush1.bf16.msra.mxu0 %v1621
    %2172 = vmatprep.subr.bf16.mxu0 %v1628
    %2173 = vmatpush1.bf16.msra.mxu0 %v1627
    %2174 = vmatprep.subr.bf16.mxu0 %v1634
    %2175 = vmatpush1.bf16.msra.mxu0 %v1633
    %2176 = vmatprep.subr.bf16.mxu0 %v1640
    %2177 = vmatpush1.bf16.msra.mxu0 %v1639
    %2178 = vmatprep.mubr.bf16.mxu0 %v170
    %2179 = vmatmul.mubr.bf16.gmra.mrb[0].mxu0 %v169
    %v2180 = vpop.f32.mrb[0].mxu0
    %v2181 = vadd.f32 %v2138, %v2180
    %v2182 = vpop.f32.mrb[0].mxu0
    %v2183 = vadd.f32 %v2140, %v2182
    %v2184 = vpop.f32.mrb[0].mxu0
    %v2185 = vadd.f32 %v2142, %v2184
    %v2186 = vpop.f32.mrb[0].mxu0
    %v2187 = vadd.f32 %v2144, %v2186
    %2188 = vdwg.mxu0
    %2189 = vmatprep.subr.bf16.mxu0 %v1360
    %2190 = vmatpush1.bf16.msra.mxu0 %v1359
    %2191 = vmatprep.subr.bf16.mxu0 %v1366
    %2192 = vmatpush1.bf16.msra.mxu0 %v1365
    %2193 = vmatprep.subr.bf16.mxu0 %v1372
    %2194 = vmatpush1.bf16.msra.mxu0 %v1371
    %2195 = vmatprep.subr.bf16.mxu0 %v1378
    %2196 = vmatpush1.bf16.msra.mxu0 %v1377
    %2197 = vmatprep.subr.bf16.mxu0 %v1384
    %2198 = vmatpush1.bf16.msra.mxu0 %v1383
    %2199 = vmatprep.subr.bf16.mxu0 %v1390
    %2200 = vmatpush1.bf16.msra.mxu0 %v1389
    %2201 = vmatprep.subr.bf16.mxu0 %v1396
    %2202 = vmatpush1.bf16.msra.mxu0 %v1395
    %2203 = vmatprep.subr.bf16.mxu0 %v1402
    %2204 = vmatpush1.bf16.msra.mxu0 %v1401
    %2205 = vmatprep.subr.bf16.mxu0 %v1408
    %2206 = vmatpush1.bf16.msra.mxu0 %v1407
    %2207 = vmatprep.subr.bf16.mxu0 %v1414
    %2208 = vmatpush1.bf16.msra.mxu0 %v1413
    %2209 = vmatprep.subr.bf16.mxu0 %v1420
    %2210 = vmatpush1.bf16.msra.mxu0 %v1419
    %2211 = vmatprep.subr.bf16.mxu0 %v1426
    %2212 = vmatpush1.bf16.msra.mxu0 %v1425
    %2213 = vmatprep.subr.bf16.mxu0 %v1432
    %2214 = vmatpush1.bf16.msra.mxu0 %v1431
    %2215 = vmatprep.subr.bf16.mxu0 %v1438
    %2216 = vmatpush1.bf16.msra.mxu0 %v1437
    %2217 = vmatprep.subr.bf16.mxu0 %v1444
    %2218 = vmatpush1.bf16.msra.mxu0 %v1443
    %2219 = vmatprep.subr.bf16.mxu0 %v1450
    %2220 = vmatpush1.bf16.msra.mxu0 %v1449
    %2221 = vmatprep.mubr.bf16.mxu0 %v166
    %2222 = vmatmul.mubr.bf16.gmra.mrb[0].mxu0 %v165
    %v2223 = vpop.f32.mrb[0].mxu0
    %v2224 = vadd.f32 %v480, %v2223
    %v2225 = vpop.f32.mrb[0].mxu0
    %v2226 = vadd.f32 %v484, %v2225
    %v2227 = vpop.f32.mrb[0].mxu0
    %v2228 = vadd.f32 %v480, %v2227
    %v2229 = vpop.f32.mrb[0].mxu0
    %v2230 = vadd.f32 %v484, %v2229
    %2231 = vdwg.mxu0
    %2232 = vmatprep.subr.bf16.mxu0 %v1456
    %2233 = vmatpush1.bf16.msra.mxu0 %v1455
    %2234 = vmatprep.subr.bf16.mxu0 %v1462
    %2235 = vmatpush1.bf16.msra.mxu0 %v1461
    %2236 = vmatprep.subr.bf16.mxu0 %v1468
    %2237 = vmatpush1.bf16.msra.mxu0 %v1467
    %2238 = vmatprep.subr.bf16.mxu0 %v1474
    %2239 = vmatpush1.bf16.msra.mxu0 %v1473
    %2240 = vmatprep.subr.bf16.mxu0 %v1480
    %2241 = vmatpush1.bf16.msra.mxu0 %v1479
    %2242 = vmatprep.subr.bf16.mxu0 %v1486
    %2243 = vmatpush1.bf16.msra.mxu0 %v1485
    %2244 = vmatprep.subr.bf16.mxu0 %v1492
    %2245 = vmatpush1.bf16.msra.mxu0 %v1491
    %2246 = vmatprep.subr.bf16.mxu0 %v1498
    %2247 = vmatpush1.bf16.msra.mxu0 %v1497
    %2248 = vmatprep.subr.bf16.mxu0 %v1504
    %2249 = vmatpush1.bf16.msra.mxu0 %v1503
    %2250 = vmatprep.subr.bf16.mxu0 %v1510
    %2251 = vmatpush1.bf16.msra.mxu0 %v1509
    %2252 = vmatprep.subr.bf16.mxu0 %v1516
    %2253 = vmatpush1.bf16.msra.mxu0 %v1515
    %2254 = vmatprep.subr.bf16.mxu0 %v1522
    %2255 = vmatpush1.bf16.msra.mxu0 %v1521
    %2256 = vmatprep.subr.bf16.mxu0 %v1528
    %2257 = vmatpush1.bf16.msra.mxu0 %v1527
    %2258 = vmatprep.subr.bf16.mxu0 %v1534
    %2259 = vmatpush1.bf16.msra.mxu0 %v1533
    %2260 = vmatprep.subr.bf16.mxu0 %v1540
    %2261 = vmatpush1.bf16.msra.mxu0 %v1539
    %2262 = vmatprep.subr.bf16.mxu0 %v1546
    %2263 = vmatpush1.bf16.msra.mxu0 %v1545
    %2264 = vmatprep.mubr.bf16.mxu0 %v168
    %2265 = vmatmul.mubr.bf16.gmra.mrb[0].mxu0 %v167
    %v2266 = vpop.f32.mrb[0].mxu0
    %v2267 = vadd.f32 %v2224, %v2266
    %v2268 = vpop.f32.mrb[0].mxu0
    %v2269 = vadd.f32 %v2226, %v2268
    %v2270 = vpop.f32.mrb[0].mxu0
    %v2271 = vadd.f32 %v2228, %v2270
    %v2272 = vpop.f32.mrb[0].mxu0
    %v2273 = vadd.f32 %v2230, %v2272
    %2274 = vdwg.mxu0
    %2275 = vmatprep.subr.bf16.mxu0 %v1552
    %2276 = vmatpush1.bf16.msra.mxu0 %v1551
    %2277 = vmatprep.subr.bf16.mxu0 %v1558
    %2278 = vmatpush1.bf16.msra.mxu0 %v1557
    %2279 = vmatprep.subr.bf16.mxu0 %v1564
    %2280 = vmatpush1.bf16.msra.mxu0 %v1563
    %2281 = vmatprep.subr.bf16.mxu0 %v1570
    %2282 = vmatpush1.bf16.msra.mxu0 %v1569
    %2283 = vmatprep.subr.bf16.mxu0 %v1576
    %2284 = vmatpush1.bf16.msra.mxu0 %v1575
    %2285 = vmatprep.subr.bf16.mxu0 %v1582
    %2286 = vmatpush1.bf16.msra.mxu0 %v1581
    %2287 = vmatprep.subr.bf16.mxu0 %v1588
    %2288 = vmatpush1.bf16.msra.mxu0 %v1587
    %2289 = vmatprep.subr.bf16.mxu0 %v1594
    %2290 = vmatpush1.bf16.msra.mxu0 %v1593
    %2291 = vmatprep.subr.bf16.mxu0 %v1600
    %2292 = vmatpush1.bf16.msra.mxu0 %v1599
    %2293 = vmatprep.subr.bf16.mxu0 %v1606
    %2294 = vmatpush1.bf16.msra.mxu0 %v1605
    %2295 = vmatprep.subr.bf16.mxu0 %v1612
    %2296 = vmatpush1.bf16.msra.mxu0 %v1611
    %2297 = vmatprep.subr.bf16.mxu0 %v1618
    %2298 = vmatpush1.bf16.msra.mxu0 %v1617
    %2299 = vmatprep.subr.bf16.mxu0 %v1624
    %2300 = vmatpush1.bf16.msra.mxu0 %v1623
    %2301 = vmatprep.subr.bf16.mxu0 %v1630
    %2302 = vmatpush1.bf16.msra.mxu0 %v1629
    %2303 = vmatprep.subr.bf16.mxu0 %v1636
    %2304 = vmatpush1.bf16.msra.mxu0 %v1635
    %2305 = vmatprep.subr.bf16.mxu0 %v1642
    %2306 = vmatpush1.bf16.msra.mxu0 %v1641
    %2307 = vmatprep.mubr.bf16.mxu0 %v170
    %2308 = vmatmul.mubr.bf16.gmra.mrb[0].mxu0 %v169
    %v2309 = vpop.f32.mrb[0].mxu0
    %v2310 = vadd.f32 %v2267, %v2309
    %v2311 = vpop.f32.mrb[0].mxu0
    %v2312 = vadd.f32 %v2269, %v2311
    %v2313 = vpop.f32.mrb[0].mxu0
    %v2314 = vadd.f32 %v2271, %v2313
    %v2315 = vpop.f32.mrb[0].mxu0
    %v2316 = vadd.f32 %v2273, %v2315
    %2317 = vdwg.mxu0
    %v2318 = vpack.c.bf16 %v2056, %v2052
    %v2319 = vpack.c.bf16 %v2058, %v2054
    %v2320 = vpack.c.bf16 %v2185, %v2181
    %v2321 = vpack.c.bf16 %v2187, %v2183
    %v2322 = vpack.c.bf16 %v2314, %v2310
    %v2323 = vpack.c.bf16 %v2316, %v2312
    %v2330 = vunpack.c.l.b16 %v2318
    %v2331 = vunpack.c.l.b16 %v2319
    %v2332 = vunpack.c.l.b16 %v2320
    %v2333 = vunpack.c.l.b16 %v2321
    %v2334 = vunpack.c.l.b16 %v2322
    %v2335 = vunpack.c.l.b16 %v2323
    %v2336 = vunpack.c.h.b16 %v2318
    %v2337 = vunpack.c.h.b16 %v2319
    %v2338 = vunpack.c.h.b16 %v2320
    %v2339 = vunpack.c.h.b16 %v2321
    %v2340 = vunpack.c.h.b16 %v2322
    %v2341 = vunpack.c.h.b16 %v2323
    %v2342 = vpack.c.b16 %v2331, %v2330
    %v2343 = vpack.c.b16 %v2333, %v2332
    %v2344 = vpack.c.b16 %v2335, %v2334
    %v2345 = vpack.c.b16 %v2337, %v2336
    %v2346 = vpack.c.b16 %v2339, %v2338
    %v2347 = vpack.c.b16 %v2341, %v2340
    %2354 = vst [vmem:[#allocation17] sm:$0xff] %v2342
    %2355 = vst [vmem:[#allocation17 + $0x8] sm:$0xff] %v2343
    %2356 = vst [vmem:[#allocation17 + $0x10] sm:$0xff] %v2344
    %2357 = vst [vmem:[#allocation17 + $0x18] sm:$0xff] %v2345
    %2358 = vst [vmem:[#allocation17 + $0x20] sm:$0xff] %v2346
    %2359 = vst [vmem:[#allocation17 + $0x28] sm:$0xff] %v2347
    %v2360 = vld [vmem:[#allocation5] sm:$0xff]
    %v2361 = vld [vmem:[#allocation5 + $0x8] sm:$0xff]
    %v2362 = vld [vmem:[#allocation5 + $0x10] sm:$0xff]
    %v2363 = vld [vmem:[#allocation5 + $0x18] sm:$0xff]
    %v2364 = vld [vmem:[#allocation5 + $0x20] sm:$0xff]
    %v2365 = vld [vmem:[#allocation5 + $0x28] sm:$0xff]
    %v2366 = vld [vmem:[#allocation5 + $0x30] sm:$0xff]
    %v2367 = vld [vmem:[#allocation5 + $0x38] sm:$0xff]
    %v2368 = vld [vmem:[#allocation5 + $0x40] sm:$0xff]
    %v2369 = vld [vmem:[#allocation5 + $0x48] sm:$0xff]
    %v2370 = vld [vmem:[#allocation5 + $0x50] sm:$0xff]
    %v2371 = vld [vmem:[#allocation5 + $0x58] sm:$0xff]
    %v2372 = vpack.c.bf16 %v2366, %v2360
    %v2373 = vpack.c.bf16 %v2367, %v2361
    %v2374 = vpack.c.bf16 %v2368, %v2362
    %v2375 = vpack.c.bf16 %v2369, %v2363
    %v2376 = vpack.c.bf16 %v2370, %v2364
    %v2377 = vpack.c.bf16 %v2371, %v2365
    %v2378 = vld [vmem:[#allocation10] sm:$0xff]
    %v2379 = vld [vmem:[#allocation10 + $0x8] sm:$0xff]
    %v2380 = vld [vmem:[#allocation10 + $0x10] sm:$0xff]
    %v2381 = vld [vmem:[#allocation10 + $0x18] sm:$0xff]
    %v2382 = vld [vmem:[#allocation10 + $0x20] sm:$0xff]
    %v2383 = vld [vmem:[#allocation10 + $0x28] sm:$0xff]
    %v2384 = vld [vmem:[#allocation10 + $0x30] sm:$0xff]
    %v2385 = vld [vmem:[#allocation10 + $0x38] sm:$0xff]
    %v2386 = vld [vmem:[#allocation10 + $0x40] sm:$0xff]
    %v2387 = vld [vmem:[#allocation10 + $0x48] sm:$0xff]
    %v2388 = vld [vmem:[#allocation10 + $0x50] sm:$0xff]
    %v2389 = vld [vmem:[#allocation10 + $0x58] sm:$0xff]
    %v2390 = vld [vmem:[#allocation10 + $0x60] sm:$0xff]
    %v2391 = vld [vmem:[#allocation10 + $0x68] sm:$0xff]
    %v2392 = vld [vmem:[#allocation10 + $0x70] sm:$0xff]
    %v2393 = vld [vmem:[#allocation10 + $0x78] sm:$0xff]
    %v2394 = vld [vmem:[#allocation10 + $0x80] sm:$0xff]
    %v2395 = vld [vmem:[#allocation10 + $0x88] sm:$0xff]
    %v2396 = vld [vmem:[#allocation10 + $0x90] sm:$0xff]
    %v2397 = vld [vmem:[#allocation10 + $0x98] sm:$0xff]
    %v2398 = vld [vmem:[#allocation10 + $0xa0] sm:$0xff]
    %v2399 = vld [vmem:[#allocation10 + $0xa8] sm:$0xff]
    %v2400 = vld [vmem:[#allocation10 + $0xb0] sm:$0xff]
    %v2401 = vld [vmem:[#allocation10 + $0xb8] sm:$0xff]
    %v2402 = vld [vmem:[#allocation10 + $0xc0] sm:$0xff]
    %v2403 = vld [vmem:[#allocation10 + $0xc8] sm:$0xff]
    %v2404 = vld [vmem:[#allocation10 + $0xd0] sm:$0xff]
    %v2405 = vld [vmem:[#allocation10 + $0xd8] sm:$0xff]
    %v2406 = vld [vmem:[#allocation10 + $0xe0] sm:$0xff]
    %v2407 = vld [vmem:[#allocation10 + $0xe8] sm:$0xff]
    %v2408 = vld [vmem:[#allocation10 + $0xf0] sm:$0xff]
    %v2409 = vld [vmem:[#allocation10 + $0xf8] sm:$0xff]
    %v2410 = vld [vmem:[#allocation10 + $0x100] sm:$0xff]
    %v2411 = vld [vmem:[#allocation10 + $0x108] sm:$0xff]
    %v2412 = vld [vmem:[#allocation10 + $0x110] sm:$0xff]
    %v2413 = vld [vmem:[#allocation10 + $0x118] sm:$0xff]
    %v2414 = vld [vmem:[#allocation10 + $0x120] sm:$0xff]
    %v2415 = vld [vmem:[#allocation10 + $0x128] sm:$0xff]
    %v2416 = vld [vmem:[#allocation10 + $0x130] sm:$0xff]
    %v2417 = vld [vmem:[#allocation10 + $0x138] sm:$0xff]
    %v2418 = vld [vmem:[#allocation10 + $0x140] sm:$0xff]
    %v2419 = vld [vmem:[#allocation10 + $0x148] sm:$0xff]
    %v2420 = vld [vmem:[#allocation10 + $0x150] sm:$0xff]
    %v2421 = vld [vmem:[#allocation10 + $0x158] sm:$0xff]
    %v2422 = vld [vmem:[#allocation10 + $0x160] sm:$0xff]
    %v2423 = vld [vmem:[#allocation10 + $0x168] sm:$0xff]
    %v2424 = vld [vmem:[#allocation10 + $0x170] sm:$0xff]
    %v2425 = vld [vmem:[#allocation10 + $0x178] sm:$0xff]
    %v2426 = vld [vmem:[#allocation10 + $0x180] sm:$0xff]
    %v2427 = vld [vmem:[#allocation10 + $0x188] sm:$0xff]
    %v2428 = vld [vmem:[#allocation10 + $0x190] sm:$0xff]
    %v2429 = vld [vmem:[#allocation10 + $0x198] sm:$0xff]
    %v2430 = vld [vmem:[#allocation10 + $0x1a0] sm:$0xff]
    %v2431 = vld [vmem:[#allocation10 + $0x1a8] sm:$0xff]
    %v2432 = vld [vmem:[#allocation10 + $0x1b0] sm:$0xff]
    %v2433 = vld [vmem:[#allocation10 + $0x1b8] sm:$0xff]
    %v2434 = vld [vmem:[#allocation10 + $0x1c0] sm:$0xff]
    %v2435 = vld [vmem:[#allocation10 + $0x1c8] sm:$0xff]
    %v2436 = vld [vmem:[#allocation10 + $0x1d0] sm:$0xff]
    %v2437 = vld [vmem:[#allocation10 + $0x1d8] sm:$0xff]
    %v2438 = vld [vmem:[#allocation10 + $0x1e0] sm:$0xff]
    %v2439 = vld [vmem:[#allocation10 + $0x1e8] sm:$0xff]
    %v2440 = vld [vmem:[#allocation10 + $0x1f0] sm:$0xff]
    %v2441 = vld [vmem:[#allocation10 + $0x1f8] sm:$0xff]
    %v2442 = vld [vmem:[#allocation10 + $0x200] sm:$0xff]
    %v2443 = vld [vmem:[#allocation10 + $0x208] sm:$0xff]
    %v2444 = vld [vmem:[#allocation10 + $0x210] sm:$0xff]
    %v2445 = vld [vmem:[#allocation10 + $0x218] sm:$0xff]
    %v2446 = vld [vmem:[#allocation10 + $0x220] sm:$0xff]
    %v2447 = vld [vmem:[#allocation10 + $0x228] sm:$0xff]
    %v2448 = vld [vmem:[#allocation10 + $0x230] sm:$0xff]
    %v2449 = vld [vmem:[#allocation10 + $0x238] sm:$0xff]
    %v2450 = vld [vmem:[#allocation10 + $0x240] sm:$0xff]
    %v2451 = vld [vmem:[#allocation10 + $0x248] sm:$0xff]
    %v2452 = vld [vmem:[#allocation10 + $0x250] sm:$0xff]
    %v2453 = vld [vmem:[#allocation10 + $0x258] sm:$0xff]
    %v2454 = vld [vmem:[#allocation10 + $0x260] sm:$0xff]
    %v2455 = vld [vmem:[#allocation10 + $0x268] sm:$0xff]
    %v2456 = vld [vmem:[#allocation10 + $0x270] sm:$0xff]
    %v2457 = vld [vmem:[#allocation10 + $0x278] sm:$0xff]
    %v2458 = vld [vmem:[#allocation10 + $0x280] sm:$0xff]
    %v2459 = vld [vmem:[#allocation10 + $0x288] sm:$0xff]
    %v2460 = vld [vmem:[#allocation10 + $0x290] sm:$0xff]
    %v2461 = vld [vmem:[#allocation10 + $0x298] sm:$0xff]
    %v2462 = vld [vmem:[#allocation10 + $0x2a0] sm:$0xff]
    %v2463 = vld [vmem:[#allocation10 + $0x2a8] sm:$0xff]
    %v2464 = vld [vmem:[#allocation10 + $0x2b0] sm:$0xff]
    %v2465 = vld [vmem:[#allocation10 + $0x2b8] sm:$0xff]
    %v2466 = vld [vmem:[#allocation10 + $0x2c0] sm:$0xff]
    %v2467 = vld [vmem:[#allocation10 + $0x2c8] sm:$0xff]
    %v2468 = vld [vmem:[#allocation10 + $0x2d0] sm:$0xff]
    %v2469 = vld [vmem:[#allocation10 + $0x2d8] sm:$0xff]
    %v2470 = vld [vmem:[#allocation10 + $0x2e0] sm:$0xff]
    %v2471 = vld [vmem:[#allocation10 + $0x2e8] sm:$0xff]
    %v2472 = vld [vmem:[#allocation10 + $0x2f0] sm:$0xff]
    %v2473 = vld [vmem:[#allocation10 + $0x2f8] sm:$0xff]
    %v2474 = vld [vmem:[#allocation10 + $0x300] sm:$0xff]
    %v2475 = vld [vmem:[#allocation10 + $0x308] sm:$0xff]
    %v2476 = vld [vmem:[#allocation10 + $0x310] sm:$0xff]
    %v2477 = vld [vmem:[#allocation10 + $0x318] sm:$0xff]
    %v2478 = vld [vmem:[#allocation10 + $0x320] sm:$0xff]
    %v2479 = vld [vmem:[#allocation10 + $0x328] sm:$0xff]
    %v2480 = vld [vmem:[#allocation10 + $0x330] sm:$0xff]
    %v2481 = vld [vmem:[#allocation10 + $0x338] sm:$0xff]
    %v2482 = vld [vmem:[#allocation10 + $0x340] sm:$0xff]
    %v2483 = vld [vmem:[#allocation10 + $0x348] sm:$0xff]
    %v2484 = vld [vmem:[#allocation10 + $0x350] sm:$0xff]
    %v2485 = vld [vmem:[#allocation10 + $0x358] sm:$0xff]
    %v2486 = vld [vmem:[#allocation10 + $0x360] sm:$0xff]
    %v2487 = vld [vmem:[#allocation10 + $0x368] sm:$0xff]
    %v2488 = vld [vmem:[#allocation10 + $0x370] sm:$0xff]
    %v2489 = vld [vmem:[#allocation10 + $0x378] sm:$0xff]
    %v2490 = vld [vmem:[#allocation10 + $0x380] sm:$0xff]
    %v2491 = vld [vmem:[#allocation10 + $0x388] sm:$0xff]
    %v2492 = vld [vmem:[#allocation10 + $0x390] sm:$0xff]
    %v2493 = vld [vmem:[#allocation10 + $0x398] sm:$0xff]
    %v2494 = vld [vmem:[#allocation10 + $0x3a0] sm:$0xff]
    %v2495 = vld [vmem:[#allocation10 + $0x3a8] sm:$0xff]
    %v2496 = vld [vmem:[#allocation10 + $0x3b0] sm:$0xff]
    %v2497 = vld [vmem:[#allocation10 + $0x3b8] sm:$0xff]
    %v2498 = vld [vmem:[#allocation10 + $0x3c0] sm:$0xff]
    %v2499 = vld [vmem:[#allocation10 + $0x3c8] sm:$0xff]
    %v2500 = vld [vmem:[#allocation10 + $0x3d0] sm:$0xff]
    %v2501 = vld [vmem:[#allocation10 + $0x3d8] sm:$0xff]
    %v2502 = vld [vmem:[#allocation10 + $0x3e0] sm:$0xff]
    %v2503 = vld [vmem:[#allocation10 + $0x3e8] sm:$0xff]
    %v2504 = vld [vmem:[#allocation10 + $0x3f0] sm:$0xff]
    %v2505 = vld [vmem:[#allocation10 + $0x3f8] sm:$0xff]
    %v2506 = vld [vmem:[#allocation10 + $0x400] sm:$0xff]
    %v2507 = vld [vmem:[#allocation10 + $0x408] sm:$0xff]
    %v2508 = vld [vmem:[#allocation10 + $0x410] sm:$0xff]
    %v2509 = vld [vmem:[#allocation10 + $0x418] sm:$0xff]
    %v2510 = vld [vmem:[#allocation10 + $0x420] sm:$0xff]
    %v2511 = vld [vmem:[#allocation10 + $0x428] sm:$0xff]
    %v2512 = vld [vmem:[#allocation10 + $0x430] sm:$0xff]
    %v2513 = vld [vmem:[#allocation10 + $0x438] sm:$0xff]
    %v2514 = vld [vmem:[#allocation10 + $0x440] sm:$0xff]
    %v2515 = vld [vmem:[#allocation10 + $0x448] sm:$0xff]
    %v2516 = vld [vmem:[#allocation10 + $0x450] sm:$0xff]
    %v2517 = vld [vmem:[#allocation10 + $0x458] sm:$0xff]
    %v2518 = vld [vmem:[#allocation10 + $0x460] sm:$0xff]
    %v2519 = vld [vmem:[#allocation10 + $0x468] sm:$0xff]
    %v2520 = vld [vmem:[#allocation10 + $0x470] sm:$0xff]
    %v2521 = vld [vmem:[#allocation10 + $0x478] sm:$0xff]
    %v2522 = vld [vmem:[#allocation10 + $0x480] sm:$0xff]
    %v2523 = vld [vmem:[#allocation10 + $0x488] sm:$0xff]
    %v2524 = vld [vmem:[#allocation10 + $0x490] sm:$0xff]
    %v2525 = vld [vmem:[#allocation10 + $0x498] sm:$0xff]
    %v2526 = vld [vmem:[#allocation10 + $0x4a0] sm:$0xff]
    %v2527 = vld [vmem:[#allocation10 + $0x4a8] sm:$0xff]
    %v2528 = vld [vmem:[#allocation10 + $0x4b0] sm:$0xff]
    %v2529 = vld [vmem:[#allocation10 + $0x4b8] sm:$0xff]
    %v2530 = vld [vmem:[#allocation10 + $0x4c0] sm:$0xff]
    %v2531 = vld [vmem:[#allocation10 + $0x4c8] sm:$0xff]
    %v2532 = vld [vmem:[#allocation10 + $0x4d0] sm:$0xff]
    %v2533 = vld [vmem:[#allocation10 + $0x4d8] sm:$0xff]
    %v2534 = vld [vmem:[#allocation10 + $0x4e0] sm:$0xff]
    %v2535 = vld [vmem:[#allocation10 + $0x4e8] sm:$0xff]
    %v2536 = vld [vmem:[#allocation10 + $0x4f0] sm:$0xff]
    %v2537 = vld [vmem:[#allocation10 + $0x4f8] sm:$0xff]
    %v2538 = vld [vmem:[#allocation10 + $0x500] sm:$0xff]
    %v2539 = vld [vmem:[#allocation10 + $0x508] sm:$0xff]
    %v2540 = vld [vmem:[#allocation10 + $0x510] sm:$0xff]
    %v2541 = vld [vmem:[#allocation10 + $0x518] sm:$0xff]
    %v2542 = vld [vmem:[#allocation10 + $0x520] sm:$0xff]
    %v2543 = vld [vmem:[#allocation10 + $0x528] sm:$0xff]
    %v2544 = vld [vmem:[#allocation10 + $0x530] sm:$0xff]
    %v2545 = vld [vmem:[#allocation10 + $0x538] sm:$0xff]
    %v2546 = vld [vmem:[#allocation10 + $0x540] sm:$0xff]
    %v2547 = vld [vmem:[#allocation10 + $0x548] sm:$0xff]
    %v2548 = vld [vmem:[#allocation10 + $0x550] sm:$0xff]
    %v2549 = vld [vmem:[#allocation10 + $0x558] sm:$0xff]
    %v2550 = vld [vmem:[#allocation10 + $0x560] sm:$0xff]
    %v2551 = vld [vmem:[#allocation10 + $0x568] sm:$0xff]
    %v2552 = vld [vmem:[#allocation10 + $0x570] sm:$0xff]
    %v2553 = vld [vmem:[#allocation10 + $0x578] sm:$0xff]
    %v2554 = vld [vmem:[#allocation10 + $0x580] sm:$0xff]
    %v2555 = vld [vmem:[#allocation10 + $0x588] sm:$0xff]
    %v2556 = vld [vmem:[#allocation10 + $0x590] sm:$0xff]
    %v2557 = vld [vmem:[#allocation10 + $0x598] sm:$0xff]
    %v2558 = vld [vmem:[#allocation10 + $0x5a0] sm:$0xff]
    %v2559 = vld [vmem:[#allocation10 + $0x5a8] sm:$0xff]
    %v2560 = vld [vmem:[#allocation10 + $0x5b0] sm:$0xff]
    %v2561 = vld [vmem:[#allocation10 + $0x5b8] sm:$0xff]
    %v2562 = vld [vmem:[#allocation10 + $0x5c0] sm:$0xff]
    %v2563 = vld [vmem:[#allocation10 + $0x5c8] sm:$0xff]
    %v2564 = vld [vmem:[#allocation10 + $0x5d0] sm:$0xff]
    %v2565 = vld [vmem:[#allocation10 + $0x5d8] sm:$0xff]
    %v2566 = vld [vmem:[#allocation10 + $0x5e0] sm:$0xff]
    %v2567 = vld [vmem:[#allocation10 + $0x5e8] sm:$0xff]
    %v2568 = vld [vmem:[#allocation10 + $0x5f0] sm:$0xff]
    %v2569 = vld [vmem:[#allocation10 + $0x5f8] sm:$0xff]
    %v2570 = vld [vmem:[#allocation10 + $0x600] sm:$0xff]
    %v2571 = vld [vmem:[#allocation10 + $0x608] sm:$0xff]
    %v2572 = vld [vmem:[#allocation10 + $0x610] sm:$0xff]
    %v2573 = vld [vmem:[#allocation10 + $0x618] sm:$0xff]
    %v2574 = vld [vmem:[#allocation10 + $0x620] sm:$0xff]
    %v2575 = vld [vmem:[#allocation10 + $0x628] sm:$0xff]
    %v2576 = vld [vmem:[#allocation10 + $0x630] sm:$0xff]
    %v2577 = vld [vmem:[#allocation10 + $0x638] sm:$0xff]
    %v2578 = vld [vmem:[#allocation10 + $0x640] sm:$0xff]
    %v2579 = vld [vmem:[#allocation10 + $0x648] sm:$0xff]
    %v2580 = vld [vmem:[#allocation10 + $0x650] sm:$0xff]
    %v2581 = vld [vmem:[#allocation10 + $0x658] sm:$0xff]
    %v2582 = vld [vmem:[#allocation10 + $0x660] sm:$0xff]
    %v2583 = vld [vmem:[#allocation10 + $0x668] sm:$0xff]
    %v2584 = vld [vmem:[#allocation10 + $0x670] sm:$0xff]
    %v2585 = vld [vmem:[#allocation10 + $0x678] sm:$0xff]
    %v2586 = vld [vmem:[#allocation10 + $0x680] sm:$0xff]
    %v2587 = vld [vmem:[#allocation10 + $0x688] sm:$0xff]
    %v2588 = vld [vmem:[#allocation10 + $0x690] sm:$0xff]
    %v2589 = vld [vmem:[#allocation10 + $0x698] sm:$0xff]
    %v2590 = vld [vmem:[#allocation10 + $0x6a0] sm:$0xff]
    %v2591 = vld [vmem:[#allocation10 + $0x6a8] sm:$0xff]
    %v2592 = vld [vmem:[#allocation10 + $0x6b0] sm:$0xff]
    %v2593 = vld [vmem:[#allocation10 + $0x6b8] sm:$0xff]
    %v2594 = vld [vmem:[#allocation10 + $0x6c0] sm:$0xff]
    %v2595 = vld [vmem:[#allocation10 + $0x6c8] sm:$0xff]
    %v2596 = vld [vmem:[#allocation10 + $0x6d0] sm:$0xff]
    %v2597 = vld [vmem:[#allocation10 + $0x6d8] sm:$0xff]
    %v2598 = vld [vmem:[#allocation10 + $0x6e0] sm:$0xff]
    %v2599 = vld [vmem:[#allocation10 + $0x6e8] sm:$0xff]
    %v2600 = vld [vmem:[#allocation10 + $0x6f0] sm:$0xff]
    %v2601 = vld [vmem:[#allocation10 + $0x6f8] sm:$0xff]
    %v2602 = vld [vmem:[#allocation10 + $0x700] sm:$0xff]
    %v2603 = vld [vmem:[#allocation10 + $0x708] sm:$0xff]
    %v2604 = vld [vmem:[#allocation10 + $0x710] sm:$0xff]
    %v2605 = vld [vmem:[#allocation10 + $0x718] sm:$0xff]
    %v2606 = vld [vmem:[#allocation10 + $0x720] sm:$0xff]
    %v2607 = vld [vmem:[#allocation10 + $0x728] sm:$0xff]
    %v2608 = vld [vmem:[#allocation10 + $0x730] sm:$0xff]
    %v2609 = vld [vmem:[#allocation10 + $0x738] sm:$0xff]
    %v2610 = vld [vmem:[#allocation10 + $0x740] sm:$0xff]
    %v2611 = vld [vmem:[#allocation10 + $0x748] sm:$0xff]
    %v2612 = vld [vmem:[#allocation10 + $0x750] sm:$0xff]
    %v2613 = vld [vmem:[#allocation10 + $0x758] sm:$0xff]
    %v2614 = vld [vmem:[#allocation10 + $0x760] sm:$0xff]
    %v2615 = vld [vmem:[#allocation10 + $0x768] sm:$0xff]
    %v2616 = vld [vmem:[#allocation10 + $0x770] sm:$0xff]
    %v2617 = vld [vmem:[#allocation10 + $0x778] sm:$0xff]
    %v2618 = vld [vmem:[#allocation10 + $0x780] sm:$0xff]
    %v2619 = vld [vmem:[#allocation10 + $0x788] sm:$0xff]
    %v2620 = vld [vmem:[#allocation10 + $0x790] sm:$0xff]
    %v2621 = vld [vmem:[#allocation10 + $0x798] sm:$0xff]
    %v2622 = vld [vmem:[#allocation10 + $0x7a0] sm:$0xff]
    %v2623 = vld [vmem:[#allocation10 + $0x7a8] sm:$0xff]
    %v2624 = vld [vmem:[#allocation10 + $0x7b0] sm:$0xff]
    %v2625 = vld [vmem:[#allocation10 + $0x7b8] sm:$0xff]
    %v2626 = vld [vmem:[#allocation10 + $0x7c0] sm:$0xff]
    %v2627 = vld [vmem:[#allocation10 + $0x7c8] sm:$0xff]
    %v2628 = vld [vmem:[#allocation10 + $0x7d0] sm:$0xff]
    %v2629 = vld [vmem:[#allocation10 + $0x7d8] sm:$0xff]
    %v2630 = vld [vmem:[#allocation10 + $0x7e0] sm:$0xff]
    %v2631 = vld [vmem:[#allocation10 + $0x7e8] sm:$0xff]
    %v2632 = vld [vmem:[#allocation10 + $0x7f0] sm:$0xff]
    %v2633 = vld [vmem:[#allocation10 + $0x7f8] sm:$0xff]
    %v2634 = vld [vmem:[#allocation10 + $0x800] sm:$0xff]
    %v2635 = vld [vmem:[#allocation10 + $0x808] sm:$0xff]
    %v2636 = vld [vmem:[#allocation10 + $0x810] sm:$0xff]
    %v2637 = vld [vmem:[#allocation10 + $0x818] sm:$0xff]
    %v2638 = vld [vmem:[#allocation10 + $0x820] sm:$0xff]
    %v2639 = vld [vmem:[#allocation10 + $0x828] sm:$0xff]
    %v2640 = vld [vmem:[#allocation10 + $0x830] sm:$0xff]
    %v2641 = vld [vmem:[#allocation10 + $0x838] sm:$0xff]
    %v2642 = vld [vmem:[#allocation10 + $0x840] sm:$0xff]
    %v2643 = vld [vmem:[#allocation10 + $0x848] sm:$0xff]
    %v2644 = vld [vmem:[#allocation10 + $0x850] sm:$0xff]
    %v2645 = vld [vmem:[#allocation10 + $0x858] sm:$0xff]
    %v2646 = vld [vmem:[#allocation10 + $0x860] sm:$0xff]
    %v2647 = vld [vmem:[#allocation10 + $0x868] sm:$0xff]
    %v2648 = vld [vmem:[#allocation10 + $0x870] sm:$0xff]
    %v2649 = vld [vmem:[#allocation10 + $0x878] sm:$0xff]
    %v2650 = vld [vmem:[#allocation10 + $0x880] sm:$0xff]
    %v2651 = vld [vmem:[#allocation10 + $0x888] sm:$0xff]
    %v2652 = vld [vmem:[#allocation10 + $0x890] sm:$0xff]
    %v2653 = vld [vmem:[#allocation10 + $0x898] sm:$0xff]
    %v2654 = vld [vmem:[#allocation10 + $0x8a0] sm:$0xff]
    %v2655 = vld [vmem:[#allocation10 + $0x8a8] sm:$0xff]
    %v2656 = vld [vmem:[#allocation10 + $0x8b0] sm:$0xff]
    %v2657 = vld [vmem:[#allocation10 + $0x8b8] sm:$0xff]
    %v2658 = vld [vmem:[#allocation10 + $0x8c0] sm:$0xff]
    %v2659 = vld [vmem:[#allocation10 + $0x8c8] sm:$0xff]
    %v2660 = vld [vmem:[#allocation10 + $0x8d0] sm:$0xff]
    %v2661 = vld [vmem:[#allocation10 + $0x8d8] sm:$0xff]
    %v2662 = vld [vmem:[#allocation10 + $0x8e0] sm:$0xff]
    %v2663 = vld [vmem:[#allocation10 + $0x8e8] sm:$0xff]
    %v2664 = vld [vmem:[#allocation10 + $0x8f0] sm:$0xff]
    %v2665 = vld [vmem:[#allocation10 + $0x8f8] sm:$0xff]
    %v2666 = vld [vmem:[#allocation14] sm:$0x3f]
    %v2668 = vlaneseq
    %v2669 = vshrl.u32 %v2668, 7
    %v2670 = vsub.s32 0, %v2669
    %v2671 = vrot.slane %v2666, %v2670
    %v2672 = vlaneseq
    %v2673 = vshrl.u32 %v2672, 7
    %v2674 = vsub.s32 1, %v2673
    %v2675 = vrot.slane %v2666, %v2674
    %v2676 = vlaneseq
    %v2677 = vshrl.u32 %v2676, 7
    %v2678 = vsub.s32 2, %v2677
    %v2679 = vrot.slane %v2666, %v2678
    %v2680 = vlaneseq
    %v2681 = vshrl.u32 %v2680, 7
    %v2682 = vsub.s32 3, %v2681
    %v2683 = vrot.slane %v2666, %v2682
    %v2684 = vlaneseq
    %v2685 = vshrl.u32 %v2684, 7
    %v2686 = vsub.s32 4, %v2685
    %v2687 = vrot.slane %v2666, %v2686
    %v2688 = vlaneseq
    %v2689 = vshrl.u32 %v2688, 7
    %v2690 = vsub.s32 5, %v2689
    %v2691 = vrot.slane %v2666, %v2690
    %v2986 = vunpack.c.l.b16 %v2378
    %v2987 = vunpack.c.h.b16 %v2378
    %v2988 = vunpack.c.l.b16 %v2379
    %v2989 = vunpack.c.h.b16 %v2379
    %v2990 = vunpack.c.l.b16 %v2380
    %v2991 = vunpack.c.h.b16 %v2380
    %v2992 = vunpack.c.l.b16 %v2381
    %v2993 = vunpack.c.h.b16 %v2381
    %v2994 = vunpack.c.l.b16 %v2382
    %v2995 = vunpack.c.h.b16 %v2382
    %v2996 = vunpack.c.l.b16 %v2383
    %v2997 = vunpack.c.h.b16 %v2383
    %v2998 = vunpack.c.l.b16 %v2384
    %v2999 = vunpack.c.h.b16 %v2384
    %v3000 = vunpack.c.l.b16 %v2385
    %v3001 = vunpack.c.h.b16 %v2385
    %v3002 = vunpack.c.l.b16 %v2386
    %v3003 = vunpack.c.h.b16 %v2386
    %v3004 = vunpack.c.l.b16 %v2387
    %v3005 = vunpack.c.h.b16 %v2387
    %v3006 = vunpack.c.l.b16 %v2388
    %v3007 = vunpack.c.h.b16 %v2388
    %v3008 = vunpack.c.l.b16 %v2389
    %v3009 = vunpack.c.h.b16 %v2389
    %v3010 = vunpack.c.l.b16 %v2390
    %v3011 = vunpack.c.h.b16 %v2390
    %v3012 = vunpack.c.l.b16 %v2391
    %v3013 = vunpack.c.h.b16 %v2391
    %v3014 = vunpack.c.l.b16 %v2392
    %v3015 = vunpack.c.h.b16 %v2392
    %v3016 = vunpack.c.l.b16 %v2393
    %v3017 = vunpack.c.h.b16 %v2393
    %v3018 = vunpack.c.l.b16 %v2394
    %v3019 = vunpack.c.h.b16 %v2394
    %v3020 = vunpack.c.l.b16 %v2395
    %v3021 = vunpack.c.h.b16 %v2395
    %v3022 = vunpack.c.l.b16 %v2396
    %v3023 = vunpack.c.h.b16 %v2396
    %v3024 = vunpack.c.l.b16 %v2397
    %v3025 = vunpack.c.h.b16 %v2397
    %v3026 = vunpack.c.l.b16 %v2398
    %v3027 = vunpack.c.h.b16 %v2398
    %v3028 = vunpack.c.l.b16 %v2399
    %v3029 = vunpack.c.h.b16 %v2399
    %v3030 = vunpack.c.l.b16 %v2400
    %v3031 = vunpack.c.h.b16 %v2400
    %v3032 = vunpack.c.l.b16 %v2401
    %v3033 = vunpack.c.h.b16 %v2401
    %v3034 = vunpack.c.l.b16 %v2402
    %v3035 = vunpack.c.h.b16 %v2402
    %v3036 = vunpack.c.l.b16 %v2403
    %v3037 = vunpack.c.h.b16 %v2403
    %v3038 = vunpack.c.l.b16 %v2404
    %v3039 = vunpack.c.h.b16 %v2404
    %v3040 = vunpack.c.l.b16 %v2405
    %v3041 = vunpack.c.h.b16 %v2405
    %v3042 = vunpack.c.l.b16 %v2406
    %v3043 = vunpack.c.h.b16 %v2406
    %v3044 = vunpack.c.l.b16 %v2407
    %v3045 = vunpack.c.h.b16 %v2407
    %v3046 = vunpack.c.l.b16 %v2408
    %v3047 = vunpack.c.h.b16 %v2408
    %v3048 = vunpack.c.l.b16 %v2409
    %v3049 = vunpack.c.h.b16 %v2409
    %v3050 = vunpack.c.l.b16 %v2410
    %v3051 = vunpack.c.h.b16 %v2410
    %v3052 = vunpack.c.l.b16 %v2411
    %v3053 = vunpack.c.h.b16 %v2411
    %v3054 = vunpack.c.l.b16 %v2412
    %v3055 = vunpack.c.h.b16 %v2412
    %v3056 = vunpack.c.l.b16 %v2413
    %v3057 = vunpack.c.h.b16 %v2413
    %v3058 = vunpack.c.l.b16 %v2414
    %v3059 = vunpack.c.h.b16 %v2414
    %v3060 = vunpack.c.l.b16 %v2415
    %v3061 = vunpack.c.h.b16 %v2415
    %v3062 = vunpack.c.l.b16 %v2416
    %v3063 = vunpack.c.h.b16 %v2416
    %v3064 = vunpack.c.l.b16 %v2417
    %v3065 = vunpack.c.h.b16 %v2417
    %v3066 = vunpack.c.l.b16 %v2418
    %v3067 = vunpack.c.h.b16 %v2418
    %v3068 = vunpack.c.l.b16 %v2419
    %v3069 = vunpack.c.h.b16 %v2419
    %v3070 = vunpack.c.l.b16 %v2420
    %v3071 = vunpack.c.h.b16 %v2420
    %v3072 = vunpack.c.l.b16 %v2421
    %v3073 = vunpack.c.h.b16 %v2421
    %v3074 = vunpack.c.l.b16 %v2422
    %v3075 = vunpack.c.h.b16 %v2422
    %v3076 = vunpack.c.l.b16 %v2423
    %v3077 = vunpack.c.h.b16 %v2423
    %v3078 = vunpack.c.l.b16 %v2424
    %v3079 = vunpack.c.h.b16 %v2424
    %v3080 = vunpack.c.l.b16 %v2425
    %v3081 = vunpack.c.h.b16 %v2425
    %v3082 = vunpack.c.l.b16 %v2426
    %v3083 = vunpack.c.h.b16 %v2426
    %v3084 = vunpack.c.l.b16 %v2427
    %v3085 = vunpack.c.h.b16 %v2427
    %v3086 = vunpack.c.l.b16 %v2428
    %v3087 = vunpack.c.h.b16 %v2428
    %v3088 = vunpack.c.l.b16 %v2429
    %v3089 = vunpack.c.h.b16 %v2429
    %v3090 = vunpack.c.l.b16 %v2430
    %v3091 = vunpack.c.h.b16 %v2430
    %v3092 = vunpack.c.l.b16 %v2431
    %v3093 = vunpack.c.h.b16 %v2431
    %v3094 = vunpack.c.l.b16 %v2432
    %v3095 = vunpack.c.h.b16 %v2432
    %v3096 = vunpack.c.l.b16 %v2433
    %v3097 = vunpack.c.h.b16 %v2433
    %v3098 = vunpack.c.l.b16 %v2434
    %v3099 = vunpack.c.h.b16 %v2434
    %v3100 = vunpack.c.l.b16 %v2435
    %v3101 = vunpack.c.h.b16 %v2435
    %v3102 = vunpack.c.l.b16 %v2436
    %v3103 = vunpack.c.h.b16 %v2436
    %v3104 = vunpack.c.l.b16 %v2437
    %v3105 = vunpack.c.h.b16 %v2437
    %v3106 = vunpack.c.l.b16 %v2438
    %v3107 = vunpack.c.h.b16 %v2438
    %v3108 = vunpack.c.l.b16 %v2439
    %v3109 = vunpack.c.h.b16 %v2439
    %v3110 = vunpack.c.l.b16 %v2440
    %v3111 = vunpack.c.h.b16 %v2440
    %v3112 = vunpack.c.l.b16 %v2441
    %v3113 = vunpack.c.h.b16 %v2441
    %v3114 = vunpack.c.l.b16 %v2442
    %v3115 = vunpack.c.h.b16 %v2442
    %v3116 = vunpack.c.l.b16 %v2443
    %v3117 = vunpack.c.h.b16 %v2443
    %v3118 = vunpack.c.l.b16 %v2444
    %v3119 = vunpack.c.h.b16 %v2444
    %v3120 = vunpack.c.l.b16 %v2445
    %v3121 = vunpack.c.h.b16 %v2445
    %v3122 = vunpack.c.l.b16 %v2446
    %v3123 = vunpack.c.h.b16 %v2446
    %v3124 = vunpack.c.l.b16 %v2447
    %v3125 = vunpack.c.h.b16 %v2447
    %v3126 = vunpack.c.l.b16 %v2448
    %v3127 = vunpack.c.h.b16 %v2448
    %v3128 = vunpack.c.l.b16 %v2449
    %v3129 = vunpack.c.h.b16 %v2449
    %v3130 = vunpack.c.l.b16 %v2450
    %v3131 = vunpack.c.h.b16 %v2450
    %v3132 = vunpack.c.l.b16 %v2451
    %v3133 = vunpack.c.h.b16 %v2451
    %v3134 = vunpack.c.l.b16 %v2452
    %v3135 = vunpack.c.h.b16 %v2452
    %v3136 = vunpack.c.l.b16 %v2453
    %v3137 = vunpack.c.h.b16 %v2453
    %v3138 = vunpack.c.l.b16 %v2454
    %v3139 = vunpack.c.h.b16 %v2454
    %v3140 = vunpack.c.l.b16 %v2455
    %v3141 = vunpack.c.h.b16 %v2455
    %v3142 = vunpack.c.l.b16 %v2456
    %v3143 = vunpack.c.h.b16 %v2456
    %v3144 = vunpack.c.l.b16 %v2457
    %v3145 = vunpack.c.h.b16 %v2457
    %v3146 = vunpack.c.l.b16 %v2458
    %v3147 = vunpack.c.h.b16 %v2458
    %v3148 = vunpack.c.l.b16 %v2459
    %v3149 = vunpack.c.h.b16 %v2459
    %v3150 = vunpack.c.l.b16 %v2460
    %v3151 = vunpack.c.h.b16 %v2460
    %v3152 = vunpack.c.l.b16 %v2461
    %v3153 = vunpack.c.h.b16 %v2461
    %v3154 = vunpack.c.l.b16 %v2462
    %v3155 = vunpack.c.h.b16 %v2462
    %v3156 = vunpack.c.l.b16 %v2463
    %v3157 = vunpack.c.h.b16 %v2463
    %v3158 = vunpack.c.l.b16 %v2464
    %v3159 = vunpack.c.h.b16 %v2464
    %v3160 = vunpack.c.l.b16 %v2465
    %v3161 = vunpack.c.h.b16 %v2465
    %v3162 = vunpack.c.l.b16 %v2466
    %v3163 = vunpack.c.h.b16 %v2466
    %v3164 = vunpack.c.l.b16 %v2467
    %v3165 = vunpack.c.h.b16 %v2467
    %v3166 = vunpack.c.l.b16 %v2468
    %v3167 = vunpack.c.h.b16 %v2468
    %v3168 = vunpack.c.l.b16 %v2469
    %v3169 = vunpack.c.h.b16 %v2469
    %v3170 = vunpack.c.l.b16 %v2470
    %v3171 = vunpack.c.h.b16 %v2470
    %v3172 = vunpack.c.l.b16 %v2471
    %v3173 = vunpack.c.h.b16 %v2471
    %v3174 = vunpack.c.l.b16 %v2472
    %v3175 = vunpack.c.h.b16 %v2472
    %v3176 = vunpack.c.l.b16 %v2473
    %v3177 = vunpack.c.h.b16 %v2473
    %v3178 = vunpack.c.l.b16 %v2474
    %v3179 = vunpack.c.h.b16 %v2474
    %v3180 = vunpack.c.l.b16 %v2475
    %v3181 = vunpack.c.h.b16 %v2475
    %v3182 = vunpack.c.l.b16 %v2476
    %v3183 = vunpack.c.h.b16 %v2476
    %v3184 = vunpack.c.l.b16 %v2477
    %v3185 = vunpack.c.h.b16 %v2477
    %v3186 = vunpack.c.l.b16 %v2478
    %v3187 = vunpack.c.h.b16 %v2478
    %v3188 = vunpack.c.l.b16 %v2479
    %v3189 = vunpack.c.h.b16 %v2479
    %v3190 = vunpack.c.l.b16 %v2480
    %v3191 = vunpack.c.h.b16 %v2480
    %v3192 = vunpack.c.l.b16 %v2481
    %v3193 = vunpack.c.h.b16 %v2481
    %v3194 = vunpack.c.l.b16 %v2482
    %v3195 = vunpack.c.h.b16 %v2482
    %v3196 = vunpack.c.l.b16 %v2483
    %v3197 = vunpack.c.h.b16 %v2483
    %v3198 = vunpack.c.l.b16 %v2484
    %v3199 = vunpack.c.h.b16 %v2484
    %v3200 = vunpack.c.l.b16 %v2485
    %v3201 = vunpack.c.h.b16 %v2485
    %v3202 = vunpack.c.l.b16 %v2486
    %v3203 = vunpack.c.h.b16 %v2486
    %v3204 = vunpack.c.l.b16 %v2487
    %v3205 = vunpack.c.h.b16 %v2487
    %v3206 = vunpack.c.l.b16 %v2488
    %v3207 = vunpack.c.h.b16 %v2488
    %v3208 = vunpack.c.l.b16 %v2489
    %v3209 = vunpack.c.h.b16 %v2489
    %v3210 = vunpack.c.l.b16 %v2490
    %v3211 = vunpack.c.h.b16 %v2490
    %v3212 = vunpack.c.l.b16 %v2491
    %v3213 = vunpack.c.h.b16 %v2491
    %v3214 = vunpack.c.l.b16 %v2492
    %v3215 = vunpack.c.h.b16 %v2492
    %v3216 = vunpack.c.l.b16 %v2493
    %v3217 = vunpack.c.h.b16 %v2493
    %v3218 = vunpack.c.l.b16 %v2494
    %v3219 = vunpack.c.h.b16 %v2494
    %v3220 = vunpack.c.l.b16 %v2495
    %v3221 = vunpack.c.h.b16 %v2495
    %v3222 = vunpack.c.l.b16 %v2496
    %v3223 = vunpack.c.h.b16 %v2496
    %v3224 = vunpack.c.l.b16 %v2497
    %v3225 = vunpack.c.h.b16 %v2497
    %v3226 = vunpack.c.l.b16 %v2498
    %v3227 = vunpack.c.h.b16 %v2498
    %v3228 = vunpack.c.l.b16 %v2499
    %v3229 = vunpack.c.h.b16 %v2499
    %v3230 = vunpack.c.l.b16 %v2500
    %v3231 = vunpack.c.h.b16 %v2500
    %v3232 = vunpack.c.l.b16 %v2501
    %v3233 = vunpack.c.h.b16 %v2501
    %v3234 = vunpack.c.l.b16 %v2502
    %v3235 = vunpack.c.h.b16 %v2502
    %v3236 = vunpack.c.l.b16 %v2503
    %v3237 = vunpack.c.h.b16 %v2503
    %v3238 = vunpack.c.l.b16 %v2504
    %v3239 = vunpack.c.h.b16 %v2504
    %v3240 = vunpack.c.l.b16 %v2505
    %v3241 = vunpack.c.h.b16 %v2505
    %v3242 = vunpack.c.l.b16 %v2506
    %v3243 = vunpack.c.h.b16 %v2506
    %v3244 = vunpack.c.l.b16 %v2507
    %v3245 = vunpack.c.h.b16 %v2507
    %v3246 = vunpack.c.l.b16 %v2508
    %v3247 = vunpack.c.h.b16 %v2508
    %v3248 = vunpack.c.l.b16 %v2509
    %v3249 = vunpack.c.h.b16 %v2509
    %v3250 = vunpack.c.l.b16 %v2510
    %v3251 = vunpack.c.h.b16 %v2510
    %v3252 = vunpack.c.l.b16 %v2511
    %v3253 = vunpack.c.h.b16 %v2511
    %v3254 = vunpack.c.l.b16 %v2512
    %v3255 = vunpack.c.h.b16 %v2512
    %v3256 = vunpack.c.l.b16 %v2513
    %v3257 = vunpack.c.h.b16 %v2513
    %v3258 = vunpack.c.l.b16 %v2514
    %v3259 = vunpack.c.h.b16 %v2514
    %v3260 = vunpack.c.l.b16 %v2515
    %v3261 = vunpack.c.h.b16 %v2515
    %v3262 = vunpack.c.l.b16 %v2516
    %v3263 = vunpack.c.h.b16 %v2516
    %v3264 = vunpack.c.l.b16 %v2517
    %v3265 = vunpack.c.h.b16 %v2517
    %v3266 = vunpack.c.l.b16 %v2518
    %v3267 = vunpack.c.h.b16 %v2518
    %v3268 = vunpack.c.l.b16 %v2519
    %v3269 = vunpack.c.h.b16 %v2519
    %v3270 = vunpack.c.l.b16 %v2520
    %v3271 = vunpack.c.h.b16 %v2520
    %v3272 = vunpack.c.l.b16 %v2521
    %v3273 = vunpack.c.h.b16 %v2521
    %v3274 = vunpack.c.l.b16 %v2522
    %v3275 = vunpack.c.h.b16 %v2522
    %v3276 = vunpack.c.l.b16 %v2523
    %v3277 = vunpack.c.h.b16 %v2523
    %v3278 = vunpack.c.l.b16 %v2524
    %v3279 = vunpack.c.h.b16 %v2524
    %v3280 = vunpack.c.l.b16 %v2525
    %v3281 = vunpack.c.h.b16 %v2525
    %v3282 = vunpack.c.l.b16 %v2526
    %v3283 = vunpack.c.h.b16 %v2526
    %v3284 = vunpack.c.l.b16 %v2527
    %v3285 = vunpack.c.h.b16 %v2527
    %v3286 = vunpack.c.l.b16 %v2528
    %v3287 = vunpack.c.h.b16 %v2528
    %v3288 = vunpack.c.l.b16 %v2529
    %v3289 = vunpack.c.h.b16 %v2529
    %v3290 = vunpack.c.l.b16 %v2530
    %v3291 = vunpack.c.h.b16 %v2530
    %v3292 = vunpack.c.l.b16 %v2531
    %v3293 = vunpack.c.h.b16 %v2531
    %v3294 = vunpack.c.l.b16 %v2532
    %v3295 = vunpack.c.h.b16 %v2532
    %v3296 = vunpack.c.l.b16 %v2533
    %v3297 = vunpack.c.h.b16 %v2533
    %v3298 = vunpack.c.l.b16 %v2534
    %v3299 = vunpack.c.h.b16 %v2534
    %v3300 = vunpack.c.l.b16 %v2535
    %v3301 = vunpack.c.h.b16 %v2535
    %v3302 = vunpack.c.l.b16 %v2536
    %v3303 = vunpack.c.h.b16 %v2536
    %v3304 = vunpack.c.l.b16 %v2537
    %v3305 = vunpack.c.h.b16 %v2537
    %v3306 = vunpack.c.l.b16 %v2538
    %v3307 = vunpack.c.h.b16 %v2538
    %v3308 = vunpack.c.l.b16 %v2539
    %v3309 = vunpack.c.h.b16 %v2539
    %v3310 = vunpack.c.l.b16 %v2540
    %v3311 = vunpack.c.h.b16 %v2540
    %v3312 = vunpack.c.l.b16 %v2541
    %v3313 = vunpack.c.h.b16 %v2541
    %v3314 = vunpack.c.l.b16 %v2542
    %v3315 = vunpack.c.h.b16 %v2542
    %v3316 = vunpack.c.l.b16 %v2543
    %v3317 = vunpack.c.h.b16 %v2543
    %v3318 = vunpack.c.l.b16 %v2544
    %v3319 = vunpack.c.h.b16 %v2544
    %v3320 = vunpack.c.l.b16 %v2545
    %v3321 = vunpack.c.h.b16 %v2545
    %v3322 = vunpack.c.l.b16 %v2546
    %v3323 = vunpack.c.h.b16 %v2546
    %v3324 = vunpack.c.l.b16 %v2547
    %v3325 = vunpack.c.h.b16 %v2547
    %v3326 = vunpack.c.l.b16 %v2548
    %v3327 = vunpack.c.h.b16 %v2548
    %v3328 = vunpack.c.l.b16 %v2549
    %v3329 = vunpack.c.h.b16 %v2549
    %v3330 = vunpack.c.l.b16 %v2550
    %v3331 = vunpack.c.h.b16 %v2550
    %v3332 = vunpack.c.l.b16 %v2551
    %v3333 = vunpack.c.h.b16 %v2551
    %v3334 = vunpack.c.l.b16 %v2552
    %v3335 = vunpack.c.h.b16 %v2552
    %v3336 = vunpack.c.l.b16 %v2553
    %v3337 = vunpack.c.h.b16 %v2553
    %v3338 = vunpack.c.l.b16 %v2554
    %v3339 = vunpack.c.h.b16 %v2554
    %v3340 = vunpack.c.l.b16 %v2555
    %v3341 = vunpack.c.h.b16 %v2555
    %v3342 = vunpack.c.l.b16 %v2556
    %v3343 = vunpack.c.h.b16 %v2556
    %v3344 = vunpack.c.l.b16 %v2557
    %v3345 = vunpack.c.h.b16 %v2557
    %v3346 = vunpack.c.l.b16 %v2558
    %v3347 = vunpack.c.h.b16 %v2558
    %v3348 = vunpack.c.l.b16 %v2559
    %v3349 = vunpack.c.h.b16 %v2559
    %v3350 = vunpack.c.l.b16 %v2560
    %v3351 = vunpack.c.h.b16 %v2560
    %v3352 = vunpack.c.l.b16 %v2561
    %v3353 = vunpack.c.h.b16 %v2561
    %v3354 = vunpack.c.l.b16 %v2562
    %v3355 = vunpack.c.h.b16 %v2562
    %v3356 = vunpack.c.l.b16 %v2563
    %v3357 = vunpack.c.h.b16 %v2563
    %v3358 = vunpack.c.l.b16 %v2564
    %v3359 = vunpack.c.h.b16 %v2564
    %v3360 = vunpack.c.l.b16 %v2565
    %v3361 = vunpack.c.h.b16 %v2565
    %v3362 = vunpack.c.l.b16 %v2566
    %v3363 = vunpack.c.h.b16 %v2566
    %v3364 = vunpack.c.l.b16 %v2567
    %v3365 = vunpack.c.h.b16 %v2567
    %v3366 = vunpack.c.l.b16 %v2568
    %v3367 = vunpack.c.h.b16 %v2568
    %v3368 = vunpack.c.l.b16 %v2569
    %v3369 = vunpack.c.h.b16 %v2569
    %v3370 = vunpack.c.l.b16 %v2570
    %v3371 = vunpack.c.h.b16 %v2570
    %v3372 = vunpack.c.l.b16 %v2571
    %v3373 = vunpack.c.h.b16 %v2571
    %v3374 = vunpack.c.l.b16 %v2572
    %v3375 = vunpack.c.h.b16 %v2572
    %v3376 = vunpack.c.l.b16 %v2573
    %v3377 = vunpack.c.h.b16 %v2573
    %v3378 = vunpack.c.l.b16 %v2574
    %v3379 = vunpack.c.h.b16 %v2574
    %v3380 = vunpack.c.l.b16 %v2575
    %v3381 = vunpack.c.h.b16 %v2575
    %v3382 = vunpack.c.l.b16 %v2576
    %v3383 = vunpack.c.h.b16 %v2576
    %v3384 = vunpack.c.l.b16 %v2577
    %v3385 = vunpack.c.h.b16 %v2577
    %v3386 = vunpack.c.l.b16 %v2578
    %v3387 = vunpack.c.h.b16 %v2578
    %v3388 = vunpack.c.l.b16 %v2579
    %v3389 = vunpack.c.h.b16 %v2579
    %v3390 = vunpack.c.l.b16 %v2580
    %v3391 = vunpack.c.h.b16 %v2580
    %v3392 = vunpack.c.l.b16 %v2581
    %v3393 = vunpack.c.h.b16 %v2581
    %v3394 = vunpack.c.l.b16 %v2582
    %v3395 = vunpack.c.h.b16 %v2582
    %v3396 = vunpack.c.l.b16 %v2583
    %v3397 = vunpack.c.h.b16 %v2583
    %v3398 = vunpack.c.l.b16 %v2584
    %v3399 = vunpack.c.h.b16 %v2584
    %v3400 = vunpack.c.l.b16 %v2585
    %v3401 = vunpack.c.h.b16 %v2585
    %v3402 = vunpack.c.l.b16 %v2586
    %v3403 = vunpack.c.h.b16 %v2586
    %v3404 = vunpack.c.l.b16 %v2587
    %v3405 = vunpack.c.h.b16 %v2587
    %v3406 = vunpack.c.l.b16 %v2588
    %v3407 = vunpack.c.h.b16 %v2588
    %v3408 = vunpack.c.l.b16 %v2589
    %v3409 = vunpack.c.h.b16 %v2589
    %v3410 = vunpack.c.l.b16 %v2590
    %v3411 = vunpack.c.h.b16 %v2590
    %v3412 = vunpack.c.l.b16 %v2591
    %v3413 = vunpack.c.h.b16 %v2591
    %v3414 = vunpack.c.l.b16 %v2592
    %v3415 = vunpack.c.h.b16 %v2592
    %v3416 = vunpack.c.l.b16 %v2593
    %v3417 = vunpack.c.h.b16 %v2593
    %v3418 = vunpack.c.l.b16 %v2594
    %v3419 = vunpack.c.h.b16 %v2594
    %v3420 = vunpack.c.l.b16 %v2595
    %v3421 = vunpack.c.h.b16 %v2595
    %v3422 = vunpack.c.l.b16 %v2596
    %v3423 = vunpack.c.h.b16 %v2596
    %v3424 = vunpack.c.l.b16 %v2597
    %v3425 = vunpack.c.h.b16 %v2597
    %v3426 = vunpack.c.l.b16 %v2598
    %v3427 = vunpack.c.h.b16 %v2598
    %v3428 = vunpack.c.l.b16 %v2599
    %v3429 = vunpack.c.h.b16 %v2599
    %v3430 = vunpack.c.l.b16 %v2600
    %v3431 = vunpack.c.h.b16 %v2600
    %v3432 = vunpack.c.l.b16 %v2601
    %v3433 = vunpack.c.h.b16 %v2601
    %v3434 = vunpack.c.l.b16 %v2602
    %v3435 = vunpack.c.h.b16 %v2602
    %v3436 = vunpack.c.l.b16 %v2603
    %v3437 = vunpack.c.h.b16 %v2603
    %v3438 = vunpack.c.l.b16 %v2604
    %v3439 = vunpack.c.h.b16 %v2604
    %v3440 = vunpack.c.l.b16 %v2605
    %v3441 = vunpack.c.h.b16 %v2605
    %v3442 = vunpack.c.l.b16 %v2606
    %v3443 = vunpack.c.h.b16 %v2606
    %v3444 = vunpack.c.l.b16 %v2607
    %v3445 = vunpack.c.h.b16 %v2607
    %v3446 = vunpack.c.l.b16 %v2608
    %v3447 = vunpack.c.h.b16 %v2608
    %v3448 = vunpack.c.l.b16 %v2609
    %v3449 = vunpack.c.h.b16 %v2609
    %v3450 = vunpack.c.l.b16 %v2610
    %v3451 = vunpack.c.h.b16 %v2610
    %v3452 = vunpack.c.l.b16 %v2611
    %v3453 = vunpack.c.h.b16 %v2611
    %v3454 = vunpack.c.l.b16 %v2612
    %v3455 = vunpack.c.h.b16 %v2612
    %v3456 = vunpack.c.l.b16 %v2613
    %v3457 = vunpack.c.h.b16 %v2613
    %v3458 = vunpack.c.l.b16 %v2614
    %v3459 = vunpack.c.h.b16 %v2614
    %v3460 = vunpack.c.l.b16 %v2615
    %v3461 = vunpack.c.h.b16 %v2615
    %v3462 = vunpack.c.l.b16 %v2616
    %v3463 = vunpack.c.h.b16 %v2616
    %v3464 = vunpack.c.l.b16 %v2617
    %v3465 = vunpack.c.h.b16 %v2617
    %v3466 = vunpack.c.l.b16 %v2618
    %v3467 = vunpack.c.h.b16 %v2618
    %v3468 = vunpack.c.l.b16 %v2619
    %v3469 = vunpack.c.h.b16 %v2619
    %v3470 = vunpack.c.l.b16 %v2620
    %v3471 = vunpack.c.h.b16 %v2620
    %v3472 = vunpack.c.l.b16 %v2621
    %v3473 = vunpack.c.h.b16 %v2621
    %v3474 = vunpack.c.l.b16 %v2622
    %v3475 = vunpack.c.h.b16 %v2622
    %v3476 = vunpack.c.l.b16 %v2623
    %v3477 = vunpack.c.h.b16 %v2623
    %v3478 = vunpack.c.l.b16 %v2624
    %v3479 = vunpack.c.h.b16 %v2624
    %v3480 = vunpack.c.l.b16 %v2625
    %v3481 = vunpack.c.h.b16 %v2625
    %v3482 = vunpack.c.l.b16 %v2626
    %v3483 = vunpack.c.h.b16 %v2626
    %v3484 = vunpack.c.l.b16 %v2627
    %v3485 = vunpack.c.h.b16 %v2627
    %v3486 = vunpack.c.l.b16 %v2628
    %v3487 = vunpack.c.h.b16 %v2628
    %v3488 = vunpack.c.l.b16 %v2629
    %v3489 = vunpack.c.h.b16 %v2629
    %v3490 = vunpack.c.l.b16 %v2630
    %v3491 = vunpack.c.h.b16 %v2630
    %v3492 = vunpack.c.l.b16 %v2631
    %v3493 = vunpack.c.h.b16 %v2631
    %v3494 = vunpack.c.l.b16 %v2632
    %v3495 = vunpack.c.h.b16 %v2632
    %v3496 = vunpack.c.l.b16 %v2633
    %v3497 = vunpack.c.h.b16 %v2633
    %v3498 = vunpack.c.l.b16 %v2634
    %v3499 = vunpack.c.h.b16 %v2634
    %v3500 = vunpack.c.l.b16 %v2635
    %v3501 = vunpack.c.h.b16 %v2635
    %v3502 = vunpack.c.l.b16 %v2636
    %v3503 = vunpack.c.h.b16 %v2636
    %v3504 = vunpack.c.l.b16 %v2637
    %v3505 = vunpack.c.h.b16 %v2637
    %v3506 = vunpack.c.l.b16 %v2638
    %v3507 = vunpack.c.h.b16 %v2638
    %v3508 = vunpack.c.l.b16 %v2639
    %v3509 = vunpack.c.h.b16 %v2639
    %v3510 = vunpack.c.l.b16 %v2640
    %v3511 = vunpack.c.h.b16 %v2640
    %v3512 = vunpack.c.l.b16 %v2641
    %v3513 = vunpack.c.h.b16 %v2641
    %v3514 = vunpack.c.l.b16 %v2642
    %v3515 = vunpack.c.h.b16 %v2642
    %v3516 = vunpack.c.l.b16 %v2643
    %v3517 = vunpack.c.h.b16 %v2643
    %v3518 = vunpack.c.l.b16 %v2644
    %v3519 = vunpack.c.h.b16 %v2644
    %v3520 = vunpack.c.l.b16 %v2645
    %v3521 = vunpack.c.h.b16 %v2645
    %v3522 = vunpack.c.l.b16 %v2646
    %v3523 = vunpack.c.h.b16 %v2646
    %v3524 = vunpack.c.l.b16 %v2647
    %v3525 = vunpack.c.h.b16 %v2647
    %v3526 = vunpack.c.l.b16 %v2648
    %v3527 = vunpack.c.h.b16 %v2648
    %v3528 = vunpack.c.l.b16 %v2649
    %v3529 = vunpack.c.h.b16 %v2649
    %v3530 = vunpack.c.l.b16 %v2650
    %v3531 = vunpack.c.h.b16 %v2650
    %v3532 = vunpack.c.l.b16 %v2651
    %v3533 = vunpack.c.h.b16 %v2651
    %v3534 = vunpack.c.l.b16 %v2652
    %v3535 = vunpack.c.h.b16 %v2652
    %v3536 = vunpack.c.l.b16 %v2653
    %v3537 = vunpack.c.h.b16 %v2653
    %v3538 = vunpack.c.l.b16 %v2654
    %v3539 = vunpack.c.h.b16 %v2654
    %v3540 = vunpack.c.l.b16 %v2655
    %v3541 = vunpack.c.h.b16 %v2655
    %v3542 = vunpack.c.l.b16 %v2656
    %v3543 = vunpack.c.h.b16 %v2656
    %v3544 = vunpack.c.l.b16 %v2657
    %v3545 = vunpack.c.h.b16 %v2657
    %v3546 = vunpack.c.l.b16 %v2658
    %v3547 = vunpack.c.h.b16 %v2658
    %v3548 = vunpack.c.l.b16 %v2659
    %v3549 = vunpack.c.h.b16 %v2659
    %v3550 = vunpack.c.l.b16 %v2660
    %v3551 = vunpack.c.h.b16 %v2660
    %v3552 = vunpack.c.l.b16 %v2661
    %v3553 = vunpack.c.h.b16 %v2661
    %v3554 = vunpack.c.l.b16 %v2662
    %v3555 = vunpack.c.h.b16 %v2662
    %v3556 = vunpack.c.l.b16 %v2663
    %v3557 = vunpack.c.h.b16 %v2663
    %v3558 = vunpack.c.l.b16 %v2664
    %v3559 = vunpack.c.h.b16 %v2664
    %v3560 = vunpack.c.l.b16 %v2665
    %v3561 = vunpack.c.h.b16 %v2665
    %v3562 = vpack.c.b16 %v2992, %v2986
    %v3563 = vpack.c.b16 %v2993, %v2987
    %v3564 = vpack.c.b16 %v2994, %v2988
    %v3565 = vpack.c.b16 %v2995, %v2989
    %v3566 = vpack.c.b16 %v2996, %v2990
    %v3567 = vpack.c.b16 %v2997, %v2991
    %v3568 = vpack.c.b16 %v3004, %v2998
    %v3569 = vpack.c.b16 %v3005, %v2999
    %v3570 = vpack.c.b16 %v3006, %v3000
    %v3571 = vpack.c.b16 %v3007, %v3001
    %v3572 = vpack.c.b16 %v3008, %v3002
    %v3573 = vpack.c.b16 %v3009, %v3003
    %v3574 = vpack.c.b16 %v3016, %v3010
    %v3575 = vpack.c.b16 %v3017, %v3011
    %v3576 = vpack.c.b16 %v3018, %v3012
    %v3577 = vpack.c.b16 %v3019, %v3013
    %v3578 = vpack.c.b16 %v3020, %v3014
    %v3579 = vpack.c.b16 %v3021, %v3015
    %v3580 = vpack.c.b16 %v3028, %v3022
    %v3581 = vpack.c.b16 %v3029, %v3023
    %v3582 = vpack.c.b16 %v3030, %v3024
    %v3583 = vpack.c.b16 %v3031, %v3025
    %v3584 = vpack.c.b16 %v3032, %v3026
    %v3585 = vpack.c.b16 %v3033, %v3027
    %v3586 = vpack.c.b16 %v3040, %v3034
    %v3587 = vpack.c.b16 %v3041, %v3035
    %v3588 = vpack.c.b16 %v3042, %v3036
    %v3589 = vpack.c.b16 %v3043, %v3037
    %v3590 = vpack.c.b16 %v3044, %v3038
    %v3591 = vpack.c.b16 %v3045, %v3039
    %v3592 = vpack.c.b16 %v3052, %v3046
    %v3593 = vpack.c.b16 %v3053, %v3047
    %v3594 = vpack.c.b16 %v3054, %v3048
    %v3595 = vpack.c.b16 %v3055, %v3049
    %v3596 = vpack.c.b16 %v3056, %v3050
    %v3597 = vpack.c.b16 %v3057, %v3051
    %v3598 = vpack.c.b16 %v3064, %v3058
    %v3599 = vpack.c.b16 %v3065, %v3059
    %v3600 = vpack.c.b16 %v3066, %v3060
    %v3601 = vpack.c.b16 %v3067, %v3061
    %v3602 = vpack.c.b16 %v3068, %v3062
    %v3603 = vpack.c.b16 %v3069, %v3063
    %v3604 = vpack.c.b16 %v3076, %v3070
    %v3605 = vpack.c.b16 %v3077, %v3071
    %v3606 = vpack.c.b16 %v3078, %v3072
    %v3607 = vpack.c.b16 %v3079, %v3073
    %v3608 = vpack.c.b16 %v3080, %v3074
    %v3609 = vpack.c.b16 %v3081, %v3075
    %v3610 = vpack.c.b16 %v3088, %v3082
    %v3611 = vpack.c.b16 %v3089, %v3083
    %v3612 = vpack.c.b16 %v3090, %v3084
    %v3613 = vpack.c.b16 %v3091, %v3085
    %v3614 = vpack.c.b16 %v3092, %v3086
    %v3615 = vpack.c.b16 %v3093, %v3087
    %v3616 = vpack.c.b16 %v3100, %v3094
    %v3617 = vpack.c.b16 %v3101, %v3095
    %v3618 = vpack.c.b16 %v3102, %v3096
    %v3619 = vpack.c.b16 %v3103, %v3097
    %v3620 = vpack.c.b16 %v3104, %v3098
    %v3621 = vpack.c.b16 %v3105, %v3099
    %v3622 = vpack.c.b16 %v3112, %v3106
    %v3623 = vpack.c.b16 %v3113, %v3107
    %v3624 = vpack.c.b16 %v3114, %v3108
    %v3625 = vpack.c.b16 %v3115, %v3109
    %v3626 = vpack.c.b16 %v3116, %v3110
    %v3627 = vpack.c.b16 %v3117, %v3111
    %v3628 = vpack.c.b16 %v3124, %v3118
    %v3629 = vpack.c.b16 %v3125, %v3119
    %v3630 = vpack.c.b16 %v3126, %v3120
    %v3631 = vpack.c.b16 %v3127, %v3121
    %v3632 = vpack.c.b16 %v3128, %v3122
    %v3633 = vpack.c.b16 %v3129, %v3123
    %v3634 = vpack.c.b16 %v3136, %v3130
    %v3635 = vpack.c.b16 %v3137, %v3131
    %v3636 = vpack.c.b16 %v3138, %v3132
    %v3637 = vpack.c.b16 %v3139, %v3133
    %v3638 = vpack.c.b16 %v3140, %v3134
    %v3639 = vpack.c.b16 %v3141, %v3135
    %v3640 = vpack.c.b16 %v3148, %v3142
    %v3641 = vpack.c.b16 %v3149, %v3143
    %v3642 = vpack.c.b16 %v3150, %v3144
    %v3643 = vpack.c.b16 %v3151, %v3145
    %v3644 = vpack.c.b16 %v3152, %v3146
    %v3645 = vpack.c.b16 %v3153, %v3147
    %v3646 = vpack.c.b16 %v3160, %v3154
    %v3647 = vpack.c.b16 %v3161, %v3155
    %v3648 = vpack.c.b16 %v3162, %v3156
    %v3649 = vpack.c.b16 %v3163, %v3157
    %v3650 = vpack.c.b16 %v3164, %v3158
    %v3651 = vpack.c.b16 %v3165, %v3159
    %v3652 = vpack.c.b16 %v3172, %v3166
    %v3653 = vpack.c.b16 %v3173, %v3167
    %v3654 = vpack.c.b16 %v3174, %v3168
    %v3655 = vpack.c.b16 %v3175, %v3169
    %v3656 = vpack.c.b16 %v3176, %v3170
    %v3657 = vpack.c.b16 %v3177, %v3171
    %v3658 = vpack.c.b16 %v3184, %v3178
    %v3659 = vpack.c.b16 %v3185, %v3179
    %v3660 = vpack.c.b16 %v3186, %v3180
    %v3661 = vpack.c.b16 %v3187, %v3181
    %v3662 = vpack.c.b16 %v3188, %v3182
    %v3663 = vpack.c.b16 %v3189, %v3183
    %v3664 = vpack.c.b16 %v3196, %v3190
    %v3665 = vpack.c.b16 %v3197, %v3191
    %v3666 = vpack.c.b16 %v3198, %v3192
    %v3667 = vpack.c.b16 %v3199, %v3193
    %v3668 = vpack.c.b16 %v3200, %v3194
    %v3669 = vpack.c.b16 %v3201, %v3195
    %v3670 = vpack.c.b16 %v3208, %v3202
    %v3671 = vpack.c.b16 %v3209, %v3203
    %v3672 = vpack.c.b16 %v3210, %v3204
    %v3673 = vpack.c.b16 %v3211, %v3205
    %v3674 = vpack.c.b16 %v3212, %v3206
    %v3675 = vpack.c.b16 %v3213, %v3207
    %v3676 = vpack.c.b16 %v3220, %v3214
    %v3677 = vpack.c.b16 %v3221, %v3215
    %v3678 = vpack.c.b16 %v3222, %v3216
    %v3679 = vpack.c.b16 %v3223, %v3217
    %v3680 = vpack.c.b16 %v3224, %v3218
    %v3681 = vpack.c.b16 %v3225, %v3219
    %v3682 = vpack.c.b16 %v3232, %v3226
    %v3683 = vpack.c.b16 %v3233, %v3227
    %v3684 = vpack.c.b16 %v3234, %v3228
    %v3685 = vpack.c.b16 %v3235, %v3229
    %v3686 = vpack.c.b16 %v3236, %v3230
    %v3687 = vpack.c.b16 %v3237, %v3231
    %v3688 = vpack.c.b16 %v3244, %v3238
    %v3689 = vpack.c.b16 %v3245, %v3239
    %v3690 = vpack.c.b16 %v3246, %v3240
    %v3691 = vpack.c.b16 %v3247, %v3241
    %v3692 = vpack.c.b16 %v3248, %v3242
    %v3693 = vpack.c.b16 %v3249, %v3243
    %v3694 = vpack.c.b16 %v3256, %v3250
    %v3695 = vpack.c.b16 %v3257, %v3251
    %v3696 = vpack.c.b16 %v3258, %v3252
    %v3697 = vpack.c.b16 %v3259, %v3253
    %v3698 = vpack.c.b16 %v3260, %v3254
    %v3699 = vpack.c.b16 %v3261, %v3255
    %v3700 = vpack.c.b16 %v3268, %v3262
    %v3701 = vpack.c.b16 %v3269, %v3263
    %v3702 = vpack.c.b16 %v3270, %v3264
    %v3703 = vpack.c.b16 %v3271, %v3265
    %v3704 = vpack.c.b16 %v3272, %v3266
    %v3705 = vpack.c.b16 %v3273, %v3267
    %v3706 = vpack.c.b16 %v3280, %v3274
    %v3707 = vpack.c.b16 %v3281, %v3275
    %v3708 = vpack.c.b16 %v3282, %v3276
    %v3709 = vpack.c.b16 %v3283, %v3277
    %v3710 = vpack.c.b16 %v3284, %v3278
    %v3711 = vpack.c.b16 %v3285, %v3279
    %v3712 = vpack.c.b16 %v3292, %v3286
    %v3713 = vpack.c.b16 %v3293, %v3287
    %v3714 = vpack.c.b16 %v3294, %v3288
    %v3715 = vpack.c.b16 %v3295, %v3289
    %v3716 = vpack.c.b16 %v3296, %v3290
    %v3717 = vpack.c.b16 %v3297, %v3291
    %v3718 = vpack.c.b16 %v3304, %v3298
    %v3719 = vpack.c.b16 %v3305, %v3299
    %v3720 = vpack.c.b16 %v3306, %v3300
    %v3721 = vpack.c.b16 %v3307, %v3301
    %v3722 = vpack.c.b16 %v3308, %v3302
    %v3723 = vpack.c.b16 %v3309, %v3303
    %v3724 = vpack.c.b16 %v3316, %v3310
    %v3725 = vpack.c.b16 %v3317, %v3311
    %v3726 = vpack.c.b16 %v3318, %v3312
    %v3727 = vpack.c.b16 %v3319, %v3313
    %v3728 = vpack.c.b16 %v3320, %v3314
    %v3729 = vpack.c.b16 %v3321, %v3315
    %v3730 = vpack.c.b16 %v3328, %v3322
    %v3731 = vpack.c.b16 %v3329, %v3323
    %v3732 = vpack.c.b16 %v3330, %v3324
    %v3733 = vpack.c.b16 %v3331, %v3325
    %v3734 = vpack.c.b16 %v3332, %v3326
    %v3735 = vpack.c.b16 %v3333, %v3327
    %v3736 = vpack.c.b16 %v3340, %v3334
    %v3737 = vpack.c.b16 %v3341, %v3335
    %v3738 = vpack.c.b16 %v3342, %v3336
    %v3739 = vpack.c.b16 %v3343, %v3337
    %v3740 = vpack.c.b16 %v3344, %v3338
    %v3741 = vpack.c.b16 %v3345, %v3339
    %v3742 = vpack.c.b16 %v3352, %v3346
    %v3743 = vpack.c.b16 %v3353, %v3347
    %v3744 = vpack.c.b16 %v3354, %v3348
    %v3745 = vpack.c.b16 %v3355, %v3349
    %v3746 = vpack.c.b16 %v3356, %v3350
    %v3747 = vpack.c.b16 %v3357, %v3351
    %v3748 = vpack.c.b16 %v3364, %v3358
    %v3749 = vpack.c.b16 %v3365, %v3359
    %v3750 = vpack.c.b16 %v3366, %v3360
    %v3751 = vpack.c.b16 %v3367, %v3361
    %v3752 = vpack.c.b16 %v3368, %v3362
    %v3753 = vpack.c.b16 %v3369, %v3363
    %v3754 = vpack.c.b16 %v3376, %v3370
    %v3755 = vpack.c.b16 %v3377, %v3371
    %v3756 = vpack.c.b16 %v3378, %v3372
    %v3757 = vpack.c.b16 %v3379, %v3373
    %v3758 = vpack.c.b16 %v3380, %v3374
    %v3759 = vpack.c.b16 %v3381, %v3375
    %v3760 = vpack.c.b16 %v3388, %v3382
    %v3761 = vpack.c.b16 %v3389, %v3383
    %v3762 = vpack.c.b16 %v3390, %v3384
    %v3763 = vpack.c.b16 %v3391, %v3385
    %v3764 = vpack.c.b16 %v3392, %v3386
    %v3765 = vpack.c.b16 %v3393, %v3387
    %v3766 = vpack.c.b16 %v3400, %v3394
    %v3767 = vpack.c.b16 %v3401, %v3395
    %v3768 = vpack.c.b16 %v3402, %v3396
    %v3769 = vpack.c.b16 %v3403, %v3397
    %v3770 = vpack.c.b16 %v3404, %v3398
    %v3771 = vpack.c.b16 %v3405, %v3399
    %v3772 = vpack.c.b16 %v3412, %v3406
    %v3773 = vpack.c.b16 %v3413, %v3407
    %v3774 = vpack.c.b16 %v3414, %v3408
    %v3775 = vpack.c.b16 %v3415, %v3409
    %v3776 = vpack.c.b16 %v3416, %v3410
    %v3777 = vpack.c.b16 %v3417, %v3411
    %v3778 = vpack.c.b16 %v3424, %v3418
    %v3779 = vpack.c.b16 %v3425, %v3419
    %v3780 = vpack.c.b16 %v3426, %v3420
    %v3781 = vpack.c.b16 %v3427, %v3421
    %v3782 = vpack.c.b16 %v3428, %v3422
    %v3783 = vpack.c.b16 %v3429, %v3423
    %v3784 = vpack.c.b16 %v3436, %v3430
    %v3785 = vpack.c.b16 %v3437, %v3431
    %v3786 = vpack.c.b16 %v3438, %v3432
    %v3787 = vpack.c.b16 %v3439, %v3433
    %v3788 = vpack.c.b16 %v3440, %v3434
    %v3789 = vpack.c.b16 %v3441, %v3435
    %v3790 = vpack.c.b16 %v3448, %v3442
    %v3791 = vpack.c.b16 %v3449, %v3443
    %v3792 = vpack.c.b16 %v3450, %v3444
    %v3793 = vpack.c.b16 %v3451, %v3445
    %v3794 = vpack.c.b16 %v3452, %v3446
    %v3795 = vpack.c.b16 %v3453, %v3447
    %v3796 = vpack.c.b16 %v3460, %v3454
    %v3797 = vpack.c.b16 %v3461, %v3455
    %v3798 = vpack.c.b16 %v3462, %v3456
    %v3799 = vpack.c.b16 %v3463, %v3457
    %v3800 = vpack.c.b16 %v3464, %v3458
    %v3801 = vpack.c.b16 %v3465, %v3459
    %v3802 = vpack.c.b16 %v3472, %v3466
    %v3803 = vpack.c.b16 %v3473, %v3467
    %v3804 = vpack.c.b16 %v3474, %v3468
    %v3805 = vpack.c.b16 %v3475, %v3469
    %v3806 = vpack.c.b16 %v3476, %v3470
    %v3807 = vpack.c.b16 %v3477, %v3471
    %v3808 = vpack.c.b16 %v3484, %v3478
    %v3809 = vpack.c.b16 %v3485, %v3479
    %v3810 = vpack.c.b16 %v3486, %v3480
    %v3811 = vpack.c.b16 %v3487, %v3481
    %v3812 = vpack.c.b16 %v3488, %v3482
    %v3813 = vpack.c.b16 %v3489, %v3483
    %v3814 = vpack.c.b16 %v3496, %v3490
    %v3815 = vpack.c.b16 %v3497, %v3491
    %v3816 = vpack.c.b16 %v3498, %v3492
    %v3817 = vpack.c.b16 %v3499, %v3493
    %v3818 = vpack.c.b16 %v3500, %v3494
    %v3819 = vpack.c.b16 %v3501, %v3495
    %v3820 = vpack.c.b16 %v3508, %v3502
    %v3821 = vpack.c.b16 %v3509, %v3503
    %v3822 = vpack.c.b16 %v3510, %v3504
    %v3823 = vpack.c.b16 %v3511, %v3505
    %v3824 = vpack.c.b16 %v3512, %v3506
    %v3825 = vpack.c.b16 %v3513, %v3507
    %v3826 = vpack.c.b16 %v3520, %v3514
    %v3827 = vpack.c.b16 %v3521, %v3515
    %v3828 = vpack.c.b16 %v3522, %v3516
    %v3829 = vpack.c.b16 %v3523, %v3517
    %v3830 = vpack.c.b16 %v3524, %v3518
    %v3831 = vpack.c.b16 %v3525, %v3519
    %v3832 = vpack.c.b16 %v3532, %v3526
    %v3833 = vpack.c.b16 %v3533, %v3527
    %v3834 = vpack.c.b16 %v3534, %v3528
    %v3835 = vpack.c.b16 %v3535, %v3529
    %v3836 = vpack.c.b16 %v3536, %v3530
    %v3837 = vpack.c.b16 %v3537, %v3531
    %v3838 = vpack.c.b16 %v3544, %v3538
    %v3839 = vpack.c.b16 %v3545, %v3539
    %v3840 = vpack.c.b16 %v3546, %v3540
    %v3841 = vpack.c.b16 %v3547, %v3541
    %v3842 = vpack.c.b16 %v3548, %v3542
    %v3843 = vpack.c.b16 %v3549, %v3543
    %v3844 = vpack.c.b16 %v3556, %v3550
    %v3845 = vpack.c.b16 %v3557, %v3551
    %v3846 = vpack.c.b16 %v3558, %v3552
    %v3847 = vpack.c.b16 %v3559, %v3553
    %v3848 = vpack.c.b16 %v3560, %v3554
    %v3849 = vpack.c.b16 %v3561, %v3555
    %4138 = vmatprep.subr.bf16.mxu0 %v3563
    %4139 = vmatpush1.bf16.msra.mxu0 %v3562
    %4140 = vmatprep.subr.bf16.mxu0 %v3569
    %4141 = vmatpush1.bf16.msra.mxu0 %v3568
    %4142 = vmatprep.subr.bf16.mxu0 %v3575
    %4143 = vmatpush1.bf16.msra.mxu0 %v3574
    %4144 = vmatprep.subr.bf16.mxu0 %v3581
    %4145 = vmatpush1.bf16.msra.mxu0 %v3580
    %4146 = vmatprep.subr.bf16.mxu0 %v3587
    %4147 = vmatpush1.bf16.msra.mxu0 %v3586
    %4148 = vmatprep.subr.bf16.mxu0 %v3593
    %4149 = vmatpush1.bf16.msra.mxu0 %v3592
    %4150 = vmatprep.subr.bf16.mxu0 %v3599
    %4151 = vmatpush1.bf16.msra.mxu0 %v3598
    %4152 = vmatprep.subr.bf16.mxu0 %v3605
    %4153 = vmatpush1.bf16.msra.mxu0 %v3604
    %4154 = vmatprep.subr.bf16.mxu0 %v3611
    %4155 = vmatpush1.bf16.msra.mxu0 %v3610
    %4156 = vmatprep.subr.bf16.mxu0 %v3617
    %4157 = vmatpush1.bf16.msra.mxu0 %v3616
    %4158 = vmatprep.subr.bf16.mxu0 %v3623
    %4159 = vmatpush1.bf16.msra.mxu0 %v3622
    %4160 = vmatprep.subr.bf16.mxu0 %v3629
    %4161 = vmatpush1.bf16.msra.mxu0 %v3628
    %4162 = vmatprep.subr.bf16.mxu0 %v3635
    %4163 = vmatpush1.bf16.msra.mxu0 %v3634
    %4164 = vmatprep.subr.bf16.mxu0 %v3641
    %4165 = vmatpush1.bf16.msra.mxu0 %v3640
    %4166 = vmatprep.subr.bf16.mxu0 %v3647
    %4167 = vmatpush1.bf16.msra.mxu0 %v3646
    %4168 = vmatprep.subr.bf16.mxu0 %v3653
    %4169 = vmatpush1.bf16.msra.mxu0 %v3652
    %4170 = vmatprep.mubr.bf16.mxu0 %v2373
    %4171 = vmatmul.mubr.bf16.gmra.mrb[0].mxu0 %v2372
    %v4172 = vpop.f32.mrb[0].mxu0
    %v4173 = vadd.f32 %v2671, %v4172
    %v4174 = vpop.f32.mrb[0].mxu0
    %v4175 = vadd.f32 %v2675, %v4174
    %v4176 = vpop.f32.mrb[0].mxu0
    %v4177 = vadd.f32 %v2671, %v4176
    %v4178 = vpop.f32.mrb[0].mxu0
    %v4179 = vadd.f32 %v2675, %v4178
    %4180 = vdwg.mxu0
    %4181 = vmatprep.subr.bf16.mxu0 %v3659
    %4182 = vmatpush1.bf16.msra.mxu0 %v3658
    %4183 = vmatprep.subr.bf16.mxu0 %v3665
    %4184 = vmatpush1.bf16.msra.mxu0 %v3664
    %4185 = vmatprep.subr.bf16.mxu0 %v3671
    %4186 = vmatpush1.bf16.msra.mxu0 %v3670
    %4187 = vmatprep.subr.bf16.mxu0 %v3677
    %4188 = vmatpush1.bf16.msra.mxu0 %v3676
    %4189 = vmatprep.subr.bf16.mxu0 %v3683
    %4190 = vmatpush1.bf16.msra.mxu0 %v3682
    %4191 = vmatprep.subr.bf16.mxu0 %v3689
    %4192 = vmatpush1.bf16.msra.mxu0 %v3688
    %4193 = vmatprep.subr.bf16.mxu0 %v3695
    %4194 = vmatpush1.bf16.msra.mxu0 %v3694
    %4195 = vmatprep.subr.bf16.mxu0 %v3701
    %4196 = vmatpush1.bf16.msra.mxu0 %v3700
    %4197 = vmatprep.subr.bf16.mxu0 %v3707
    %4198 = vmatpush1.bf16.msra.mxu0 %v3706
    %4199 = vmatprep.subr.bf16.mxu0 %v3713
    %4200 = vmatpush1.bf16.msra.mxu0 %v3712
    %4201 = vmatprep.subr.bf16.mxu0 %v3719
    %4202 = vmatpush1.bf16.msra.mxu0 %v3718
    %4203 = vmatprep.subr.bf16.mxu0 %v3725
    %4204 = vmatpush1.bf16.msra.mxu0 %v3724
    %4205 = vmatprep.subr.bf16.mxu0 %v3731
    %4206 = vmatpush1.bf16.msra.mxu0 %v3730
    %4207 = vmatprep.subr.bf16.mxu0 %v3737
    %4208 = vmatpush1.bf16.msra.mxu0 %v3736
    %4209 = vmatprep.subr.bf16.mxu0 %v3743
    %4210 = vmatpush1.bf16.msra.mxu0 %v3742
    %4211 = vmatprep.subr.bf16.mxu0 %v3749
    %4212 = vmatpush1.bf16.msra.mxu0 %v3748
    %4213 = vmatprep.mubr.bf16.mxu0 %v2375
    %4214 = vmatmul.mubr.bf16.gmra.mrb[0].mxu0 %v2374
    %v4215 = vpop.f32.mrb[0].mxu0
    %v4216 = vadd.f32 %v4173, %v4215
    %v4217 = vpop.f32.mrb[0].mxu0
    %v4218 = vadd.f32 %v4175, %v4217
    %v4219 = vpop.f32.mrb[0].mxu0
    %v4220 = vadd.f32 %v4177, %v4219
    %v4221 = vpop.f32.mrb[0].mxu0
    %v4222 = vadd.f32 %v4179, %v4221
    %4223 = vdwg.mxu0
    %4224 = vmatprep.subr.bf16.mxu0 %v3755
    %4225 = vmatpush1.bf16.msra.mxu0 %v3754
    %4226 = vmatprep.subr.bf16.mxu0 %v3761
    %4227 = vmatpush1.bf16.msra.mxu0 %v3760
    %4228 = vmatprep.subr.bf16.mxu0 %v3767
    %4229 = vmatpush1.bf16.msra.mxu0 %v3766
    %4230 = vmatprep.subr.bf16.mxu0 %v3773
    %4231 = vmatpush1.bf16.msra.mxu0 %v3772
    %4232 = vmatprep.subr.bf16.mxu0 %v3779
    %4233 = vmatpush1.bf16.msra.mxu0 %v3778
    %4234 = vmatprep.subr.bf16.mxu0 %v3785
    %4235 = vmatpush1.bf16.msra.mxu0 %v3784
    %4236 = vmatprep.subr.bf16.mxu0 %v3791
    %4237 = vmatpush1.bf16.msra.mxu0 %v3790
    %4238 = vmatprep.subr.bf16.mxu0 %v3797
    %4239 = vmatpush1.bf16.msra.mxu0 %v3796
    %4240 = vmatprep.subr.bf16.mxu0 %v3803
    %4241 = vmatpush1.bf16.msra.mxu0 %v3802
    %4242 = vmatprep.subr.bf16.mxu0 %v3809
    %4243 = vmatpush1.bf16.msra.mxu0 %v3808
    %4244 = vmatprep.subr.bf16.mxu0 %v3815
    %4245 = vmatpush1.bf16.msra.mxu0 %v3814
    %4246 = vmatprep.subr.bf16.mxu0 %v3821
    %4247 = vmatpush1.bf16.msra.mxu0 %v3820
    %4248 = vmatprep.subr.bf16.mxu0 %v3827
    %4249 = vmatpush1.bf16.msra.mxu0 %v3826
    %4250 = vmatprep.subr.bf16.mxu0 %v3833
    %4251 = vmatpush1.bf16.msra.mxu0 %v3832
    %4252 = vmatprep.subr.bf16.mxu0 %v3839
    %4253 = vmatpush1.bf16.msra.mxu0 %v3838
    %4254 = vmatprep.subr.bf16.mxu0 %v3845
    %4255 = vmatpush1.bf16.msra.mxu0 %v3844
    %4256 = vmatprep.mubr.bf16.mxu0 %v2377
    %4257 = vmatmul.mubr.bf16.gmra.mrb[0].mxu0 %v2376
    %v4258 = vpop.f32.mrb[0].mxu0
    %v4259 = vadd.f32 %v4216, %v4258
    %v4260 = vpop.f32.mrb[0].mxu0
    %v4261 = vadd.f32 %v4218, %v4260
    %v4262 = vpop.f32.mrb[0].mxu0
    %v4263 = vadd.f32 %v4220, %v4262
    %v4264 = vpop.f32.mrb[0].mxu0
    %v4265 = vadd.f32 %v4222, %v4264
    %4266 = vdwg.mxu0
    %4267 = vmatprep.subr.bf16.mxu0 %v3565
    %4268 = vmatpush1.bf16.msra.mxu0 %v3564
    %4269 = vmatprep.subr.bf16.mxu0 %v3571
    %4270 = vmatpush1.bf16.msra.mxu0 %v3570
    %4271 = vmatprep.subr.bf16.mxu0 %v3577
    %4272 = vmatpush1.bf16.msra.mxu0 %v3576
    %4273 = vmatprep.subr.bf16.mxu0 %v3583
    %4274 = vmatpush1.bf16.msra.mxu0 %v3582
    %4275 = vmatprep.subr.bf16.mxu0 %v3589
    %4276 = vmatpush1.bf16.msra.mxu0 %v3588
    %4277 = vmatprep.subr.bf16.mxu0 %v3595
    %4278 = vmatpush1.bf16.msra.mxu0 %v3594
    %4279 = vmatprep.subr.bf16.mxu0 %v3601
    %4280 = vmatpush1.bf16.msra.mxu0 %v3600
    %4281 = vmatprep.subr.bf16.mxu0 %v3607
    %4282 = vmatpush1.bf16.msra.mxu0 %v3606
    %4283 = vmatprep.subr.bf16.mxu0 %v3613
    %4284 = vmatpush1.bf16.msra.mxu0 %v3612
    %4285 = vmatprep.subr.bf16.mxu0 %v3619
    %4286 = vmatpush1.bf16.msra.mxu0 %v3618
    %4287 = vmatprep.subr.bf16.mxu0 %v3625
    %4288 = vmatpush1.bf16.msra.mxu0 %v3624
    %4289 = vmatprep.subr.bf16.mxu0 %v3631
    %4290 = vmatpush1.bf16.msra.mxu0 %v3630
    %4291 = vmatprep.subr.bf16.mxu0 %v3637
    %4292 = vmatpush1.bf16.msra.mxu0 %v3636
    %4293 = vmatprep.subr.bf16.mxu0 %v3643
    %4294 = vmatpush1.bf16.msra.mxu0 %v3642
    %4295 = vmatprep.subr.bf16.mxu0 %v3649
    %4296 = vmatpush1.bf16.msra.mxu0 %v3648
    %4297 = vmatprep.subr.bf16.mxu0 %v3655
    %4298 = vmatpush1.bf16.msra.mxu0 %v3654
    %4299 = vmatprep.mubr.bf16.mxu0 %v2373
    %4300 = vmatmul.mubr.bf16.gmra.mrb[0].mxu0 %v2372
    %v4301 = vpop.f32.mrb[0].mxu0
    %v4302 = vadd.f32 %v2679, %v4301
    %v4303 = vpop.f32.mrb[0].mxu0
    %v4304 = vadd.f32 %v2683, %v4303
    %v4305 = vpop.f32.mrb[0].mxu0
    %v4306 = vadd.f32 %v2679, %v4305
    %v4307 = vpop.f32.mrb[0].mxu0
    %v4308 = vadd.f32 %v2683, %v4307
    %4309 = vdwg.mxu0
    %4310 = vmatprep.subr.bf16.mxu0 %v3661
    %4311 = vmatpush1.bf16.msra.mxu0 %v3660
    %4312 = vmatprep.subr.bf16.mxu0 %v3667
    %4313 = vmatpush1.bf16.msra.mxu0 %v3666
    %4314 = vmatprep.subr.bf16.mxu0 %v3673
    %4315 = vmatpush1.bf16.msra.mxu0 %v3672
    %4316 = vmatprep.subr.bf16.mxu0 %v3679
    %4317 = vmatpush1.bf16.msra.mxu0 %v3678
    %4318 = vmatprep.subr.bf16.mxu0 %v3685
    %4319 = vmatpush1.bf16.msra.mxu0 %v3684
    %4320 = vmatprep.subr.bf16.mxu0 %v3691
    %4321 = vmatpush1.bf16.msra.mxu0 %v3690
    %4322 = vmatprep.subr.bf16.mxu0 %v3697
    %4323 = vmatpush1.bf16.msra.mxu0 %v3696
    %4324 = vmatprep.subr.bf16.mxu0 %v3703
    %4325 = vmatpush1.bf16.msra.mxu0 %v3702
    %4326 = vmatprep.subr.bf16.mxu0 %v3709
    %4327 = vmatpush1.bf16.msra.mxu0 %v3708
    %4328 = vmatprep.subr.bf16.mxu0 %v3715
    %4329 = vmatpush1.bf16.msra.mxu0 %v3714
    %4330 = vmatprep.subr.bf16.mxu0 %v3721
    %4331 = vmatpush1.bf16.msra.mxu0 %v3720
    %4332 = vmatprep.subr.bf16.mxu0 %v3727
    %4333 = vmatpush1.bf16.msra.mxu0 %v3726
    %4334 = vmatprep.subr.bf16.mxu0 %v3733
    %4335 = vmatpush1.bf16.msra.mxu0 %v3732
    %4336 = vmatprep.subr.bf16.mxu0 %v3739
    %4337 = vmatpush1.bf16.msra.mxu0 %v3738
    %4338 = vmatprep.subr.bf16.mxu0 %v3745
    %4339 = vmatpush1.bf16.msra.mxu0 %v3744
    %4340 = vmatprep.subr.bf16.mxu0 %v3751
    %4341 = vmatpush1.bf16.msra.mxu0 %v3750
    %4342 = vmatprep.mubr.bf16.mxu0 %v2375
    %4343 = vmatmul.mubr.bf16.gmra.mrb[0].mxu0 %v2374
    %v4344 = vpop.f32.mrb[0].mxu0
    %v4345 = vadd.f32 %v4302, %v4344
    %v4346 = vpop.f32.mrb[0].mxu0
    %v4347 = vadd.f32 %v4304, %v4346
    %v4348 = vpop.f32.mrb[0].mxu0
    %v4349 = vadd.f32 %v4306, %v4348
    %v4350 = vpop.f32.mrb[0].mxu0
    %v4351 = vadd.f32 %v4308, %v4350
    %4352 = vdwg.mxu0
    %4353 = vmatprep.subr.bf16.mxu0 %v3757
    %4354 = vmatpush1.bf16.msra.mxu0 %v3756
    %4355 = vmatprep.subr.bf16.mxu0 %v3763
    %4356 = vmatpush1.bf16.msra.mxu0 %v3762
    %4357 = vmatprep.subr.bf16.mxu0 %v3769
    %4358 = vmatpush1.bf16.msra.mxu0 %v3768
    %4359 = vmatprep.subr.bf16.mxu0 %v3775
    %4360 = vmatpush1.bf16.msra.mxu0 %v3774
    %4361 = vmatprep.subr.bf16.mxu0 %v3781
    %4362 = vmatpush1.bf16.msra.mxu0 %v3780
    %4363 = vmatprep.subr.bf16.mxu0 %v3787
    %4364 = vmatpush1.bf16.msra.mxu0 %v3786
    %4365 = vmatprep.subr.bf16.mxu0 %v3793
    %4366 = vmatpush1.bf16.msra.mxu0 %v3792
    %4367 = vmatprep.subr.bf16.mxu0 %v3799
    %4368 = vmatpush1.bf16.msra.mxu0 %v3798
    %4369 = vmatprep.subr.bf16.mxu0 %v3805
    %4370 = vmatpush1.bf16.msra.mxu0 %v3804
    %4371 = vmatprep.subr.bf16.mxu0 %v3811
    %4372 = vmatpush1.bf16.msra.mxu0 %v3810
    %4373 = vmatprep.subr.bf16.mxu0 %v3817
    %4374 = vmatpush1.bf16.msra.mxu0 %v3816
    %4375 = vmatprep.subr.bf16.mxu0 %v3823
    %4376 = vmatpush1.bf16.msra.mxu0 %v3822
    %4377 = vmatprep.subr.bf16.mxu0 %v3829
    %4378 = vmatpush1.bf16.msra.mxu0 %v3828
    %4379 = vmatprep.subr.bf16.mxu0 %v3835
    %4380 = vmatpush1.bf16.msra.mxu0 %v3834
    %4381 = vmatprep.subr.bf16.mxu0 %v3841
    %4382 = vmatpush1.bf16.msra.mxu0 %v3840
    %4383 = vmatprep.subr.bf16.mxu0 %v3847
    %4384 = vmatpush1.bf16.msra.mxu0 %v3846
    %4385 = vmatprep.mubr.bf16.mxu0 %v2377
    %4386 = vmatmul.mubr.bf16.gmra.mrb[0].mxu0 %v2376
    %v4387 = vpop.f32.mrb[0].mxu0
    %v4388 = vadd.f32 %v4345, %v4387
    %v4389 = vpop.f32.mrb[0].mxu0
    %v4390 = vadd.f32 %v4347, %v4389
    %v4391 = vpop.f32.mrb[0].mxu0
    %v4392 = vadd.f32 %v4349, %v4391
    %v4393 = vpop.f32.mrb[0].mxu0
    %v4394 = vadd.f32 %v4351, %v4393
    %4395 = vdwg.mxu0
    %4396 = vmatprep.subr.bf16.mxu0 %v3567
    %4397 = vmatpush1.bf16.msra.mxu0 %v3566
    %4398 = vmatprep.subr.bf16.mxu0 %v3573
    %4399 = vmatpush1.bf16.msra.mxu0 %v3572
    %4400 = vmatprep.subr.bf16.mxu0 %v3579
    %4401 = vmatpush1.bf16.msra.mxu0 %v3578
    %4402 = vmatprep.subr.bf16.mxu0 %v3585
    %4403 = vmatpush1.bf16.msra.mxu0 %v3584
    %4404 = vmatprep.subr.bf16.mxu0 %v3591
    %4405 = vmatpush1.bf16.msra.mxu0 %v3590
    %4406 = vmatprep.subr.bf16.mxu0 %v3597
    %4407 = vmatpush1.bf16.msra.mxu0 %v3596
    %4408 = vmatprep.subr.bf16.mxu0 %v3603
    %4409 = vmatpush1.bf16.msra.mxu0 %v3602
    %4410 = vmatprep.subr.bf16.mxu0 %v3609
    %4411 = vmatpush1.bf16.msra.mxu0 %v3608
    %4412 = vmatprep.subr.bf16.mxu0 %v3615
    %4413 = vmatpush1.bf16.msra.mxu0 %v3614
    %4414 = vmatprep.subr.bf16.mxu0 %v3621
    %4415 = vmatpush1.bf16.msra.mxu0 %v3620
    %4416 = vmatprep.subr.bf16.mxu0 %v3627
    %4417 = vmatpush1.bf16.msra.mxu0 %v3626
    %4418 = vmatprep.subr.bf16.mxu0 %v3633
    %4419 = vmatpush1.bf16.msra.mxu0 %v3632
    %4420 = vmatprep.subr.bf16.mxu0 %v3639
    %4421 = vmatpush1.bf16.msra.mxu0 %v3638
    %4422 = vmatprep.subr.bf16.mxu0 %v3645
    %4423 = vmatpush1.bf16.msra.mxu0 %v3644
    %4424 = vmatprep.subr.bf16.mxu0 %v3651
    %4425 = vmatpush1.bf16.msra.mxu0 %v3650
    %4426 = vmatprep.subr.bf16.mxu0 %v3657
    %4427 = vmatpush1.bf16.msra.mxu0 %v3656
    %4428 = vmatprep.mubr.bf16.mxu0 %v2373
    %4429 = vmatmul.mubr.bf16.gmra.mrb[0].mxu0 %v2372
    %v4430 = vpop.f32.mrb[0].mxu0
    %v4431 = vadd.f32 %v2687, %v4430
    %v4432 = vpop.f32.mrb[0].mxu0
    %v4433 = vadd.f32 %v2691, %v4432
    %v4434 = vpop.f32.mrb[0].mxu0
    %v4435 = vadd.f32 %v2687, %v4434
    %v4436 = vpop.f32.mrb[0].mxu0
    %v4437 = vadd.f32 %v2691, %v4436
    %4438 = vdwg.mxu0
    %4439 = vmatprep.subr.bf16.mxu0 %v3663
    %4440 = vmatpush1.bf16.msra.mxu0 %v3662
    %4441 = vmatprep.subr.bf16.mxu0 %v3669
    %4442 = vmatpush1.bf16.msra.mxu0 %v3668
    %4443 = vmatprep.subr.bf16.mxu0 %v3675
    %4444 = vmatpush1.bf16.msra.mxu0 %v3674
    %4445 = vmatprep.subr.bf16.mxu0 %v3681
    %4446 = vmatpush1.bf16.msra.mxu0 %v3680
    %4447 = vmatprep.subr.bf16.mxu0 %v3687
    %4448 = vmatpush1.bf16.msra.mxu0 %v3686
    %4449 = vmatprep.subr.bf16.mxu0 %v3693
    %4450 = vmatpush1.bf16.msra.mxu0 %v3692
    %4451 = vmatprep.subr.bf16.mxu0 %v3699
    %4452 = vmatpush1.bf16.msra.mxu0 %v3698
    %4453 = vmatprep.subr.bf16.mxu0 %v3705
    %4454 = vmatpush1.bf16.msra.mxu0 %v3704
    %4455 = vmatprep.subr.bf16.mxu0 %v3711
    %4456 = vmatpush1.bf16.msra.mxu0 %v3710
    %4457 = vmatprep.subr.bf16.mxu0 %v3717
    %4458 = vmatpush1.bf16.msra.mxu0 %v3716
    %4459 = vmatprep.subr.bf16.mxu0 %v3723
    %4460 = vmatpush1.bf16.msra.mxu0 %v3722
    %4461 = vmatprep.subr.bf16.mxu0 %v3729
    %4462 = vmatpush1.bf16.msra.mxu0 %v3728
    %4463 = vmatprep.subr.bf16.mxu0 %v3735
    %4464 = vmatpush1.bf16.msra.mxu0 %v3734
    %4465 = vmatprep.subr.bf16.mxu0 %v3741
    %4466 = vmatpush1.bf16.msra.mxu0 %v3740
    %4467 = vmatprep.subr.bf16.mxu0 %v3747
    %4468 = vmatpush1.bf16.msra.mxu0 %v3746
    %4469 = vmatprep.subr.bf16.mxu0 %v3753
    %4470 = vmatpush1.bf16.msra.mxu0 %v3752
    %4471 = vmatprep.mubr.bf16.mxu0 %v2375
    %4472 = vmatmul.mubr.bf16.gmra.mrb[0].mxu0 %v2374
    %v4473 = vpop.f32.mrb[0].mxu0
    %v4474 = vadd.f32 %v4431, %v4473
    %v4475 = vpop.f32.mrb[0].mxu0
    %v4476 = vadd.f32 %v4433, %v4475
    %v4477 = vpop.f32.mrb[0].mxu0
    %v4478 = vadd.f32 %v4435, %v4477
    %v4479 = vpop.f32.mrb[0].mxu0
    %v4480 = vadd.f32 %v4437, %v4479
    %4481 = vdwg.mxu0
    %4482 = vmatprep.subr.bf16.mxu0 %v3759
    %4483 = vmatpush1.bf16.msra.mxu0 %v3758
    %4484 = vmatprep.subr.bf16.mxu0 %v3765
    %4485 = vmatpush1.bf16.msra.mxu0 %v3764
    %4486 = vmatprep.subr.bf16.mxu0 %v3771
    %4487 = vmatpush1.bf16.msra.mxu0 %v3770
    %4488 = vmatprep.subr.bf16.mxu0 %v3777
    %4489 = vmatpush1.bf16.msra.mxu0 %v3776
    %4490 = vmatprep.subr.bf16.mxu0 %v3783
    %4491 = vmatpush1.bf16.msra.mxu0 %v3782
    %4492 = vmatprep.subr.bf16.mxu0 %v3789
    %4493 = vmatpush1.bf16.msra.mxu0 %v3788
    %4494 = vmatprep.subr.bf16.mxu0 %v3795
    %4495 = vmatpush1.bf16.msra.mxu0 %v3794
    %4496 = vmatprep.subr.bf16.mxu0 %v3801
    %4497 = vmatpush1.bf16.msra.mxu0 %v3800
    %4498 = vmatprep.subr.bf16.mxu0 %v3807
    %4499 = vmatpush1.bf16.msra.mxu0 %v3806
    %4500 = vmatprep.subr.bf16.mxu0 %v3813
    %4501 = vmatpush1.bf16.msra.mxu0 %v3812
    %4502 = vmatprep.subr.bf16.mxu0 %v3819
    %4503 = vmatpush1.bf16.msra.mxu0 %v3818
    %4504 = vmatprep.subr.bf16.mxu0 %v3825
    %4505 = vmatpush1.bf16.msra.mxu0 %v3824
    %4506 = vmatprep.subr.bf16.mxu0 %v3831
    %4507 = vmatpush1.bf16.msra.mxu0 %v3830
    %4508 = vmatprep.subr.bf16.mxu0 %v3837
    %4509 = vmatpush1.bf16.msra.mxu0 %v3836
    %4510 = vmatprep.subr.bf16.mxu0 %v3843
    %4511 = vmatpush1.bf16.msra.mxu0 %v3842
    %4512 = vmatprep.subr.bf16.mxu0 %v3849
    %4513 = vmatpush1.bf16.msra.mxu0 %v3848
    %4514 = vmatprep.mubr.bf16.mxu0 %v2377
    %4515 = vmatmul.mubr.bf16.gmra.mrb[0].mxu0 %v2376
    %v4516 = vpop.f32.mrb[0].mxu0
    %v4517 = vadd.f32 %v4474, %v4516
    %v4518 = vpop.f32.mrb[0].mxu0
    %v4519 = vadd.f32 %v4476, %v4518
    %v4520 = vpop.f32.mrb[0].mxu0
    %v4521 = vadd.f32 %v4478, %v4520
    %v4522 = vpop.f32.mrb[0].mxu0
    %v4523 = vadd.f32 %v4480, %v4522
    %4524 = vdwg.mxu0
    %v4525 = vpack.c.bf16 %v4263, %v4259
    %v4526 = vpack.c.bf16 %v4265, %v4261
    %v4527 = vpack.c.bf16 %v4392, %v4388
    %v4528 = vpack.c.bf16 %v4394, %v4390
    %v4529 = vpack.c.bf16 %v4521, %v4517
    %v4530 = vpack.c.bf16 %v4523, %v4519
    %v4537 = vunpack.c.l.b16 %v4525
    %v4538 = vunpack.c.l.b16 %v4526
    %v4539 = vunpack.c.l.b16 %v4527
    %v4540 = vunpack.c.l.b16 %v4528
    %v4541 = vunpack.c.l.b16 %v4529
    %v4542 = vunpack.c.l.b16 %v4530
    %v4543 = vunpack.c.h.b16 %v4525
    %v4544 = vunpack.c.h.b16 %v4526
    %v4545 = vunpack.c.h.b16 %v4527
    %v4546 = vunpack.c.h.b16 %v4528
    %v4547 = vunpack.c.h.b16 %v4529
    %v4548 = vunpack.c.h.b16 %v4530
    %v4549 = vpack.c.b16 %v4538, %v4537
    %v4550 = vpack.c.b16 %v4540, %v4539
    %v4551 = vpack.c.b16 %v4542, %v4541
    %v4552 = vpack.c.b16 %v4544, %v4543
    %v4553 = vpack.c.b16 %v4546, %v4545
    %v4554 = vpack.c.b16 %v4548, %v4547
    %4561 = vst [vmem:[#allocation18] sm:$0xff] %v4549
    %4562 = vst [vmem:[#allocation18 + $0x8] sm:$0xff] %v4550
    %4563 = vst [vmem:[#allocation18 + $0x10] sm:$0xff] %v4551
    %4564 = vst [vmem:[#allocation18 + $0x18] sm:$0xff] %v4552
    %4565 = vst [vmem:[#allocation18 + $0x20] sm:$0xff] %v4553
    %4566 = vst [vmem:[#allocation18 + $0x28] sm:$0xff] %v4554
    %v4567 = vld [vmem:[#allocation7] sm:$0xff]
    %v4568 = vld [vmem:[#allocation7 + $0x8] sm:$0xff]
    %v4569 = vld [vmem:[#allocation7 + $0x10] sm:$0xff]
    %v4570 = vld [vmem:[#allocation7 + $0x18] sm:$0xff]
    %v4571 = vld [vmem:[#allocation7 + $0x20] sm:$0xff]
    %v4572 = vld [vmem:[#allocation7 + $0x28] sm:$0xff]
    %v4573 = vld [vmem:[#allocation7 + $0x30] sm:$0xff]
    %v4574 = vld [vmem:[#allocation7 + $0x38] sm:$0xff]
    %v4575 = vld [vmem:[#allocation7 + $0x40] sm:$0xff]
    %v4576 = vld [vmem:[#allocation7 + $0x48] sm:$0xff]
    %v4577 = vld [vmem:[#allocation7 + $0x50] sm:$0xff]
    %v4578 = vld [vmem:[#allocation7 + $0x58] sm:$0xff]
    %v4579 = vpack.c.bf16 %v4573, %v4567
    %v4580 = vpack.c.bf16 %v4574, %v4568
    %v4581 = vpack.c.bf16 %v4575, %v4569
    %v4582 = vpack.c.bf16 %v4576, %v4570
    %v4583 = vpack.c.bf16 %v4577, %v4571
    %v4584 = vpack.c.bf16 %v4578, %v4572
    %v4585 = vld [vmem:[#allocation11] sm:$0xff]
    %v4586 = vld [vmem:[#allocation11 + $0x8] sm:$0xff]
    %v4587 = vld [vmem:[#allocation11 + $0x10] sm:$0xff]
    %v4588 = vld [vmem:[#allocation11 + $0x18] sm:$0xff]
    %v4589 = vld [vmem:[#allocation11 + $0x20] sm:$0xff]
    %v4590 = vld [vmem:[#allocation11 + $0x28] sm:$0xff]
    %v4591 = vld [vmem:[#allocation11 + $0x30] sm:$0xff]
    %v4592 = vld [vmem:[#allocation11 + $0x38] sm:$0xff]
    %v4593 = vld [vmem:[#allocation11 + $0x40] sm:$0xff]
    %v4594 = vld [vmem:[#allocation11 + $0x48] sm:$0xff]
    %v4595 = vld [vmem:[#allocation11 + $0x50] sm:$0xff]
    %v4596 = vld [vmem:[#allocation11 + $0x58] sm:$0xff]
    %v4597 = vld [vmem:[#allocation11 + $0x60] sm:$0xff]
    %v4598 = vld [vmem:[#allocation11 + $0x68] sm:$0xff]
    %v4599 = vld [vmem:[#allocation11 + $0x70] sm:$0xff]
    %v4600 = vld [vmem:[#allocation11 + $0x78] sm:$0xff]
    %v4601 = vld [vmem:[#allocation11 + $0x80] sm:$0xff]
    %v4602 = vld [vmem:[#allocation11 + $0x88] sm:$0xff]
    %v4603 = vld [vmem:[#allocation11 + $0x90] sm:$0xff]
    %v4604 = vld [vmem:[#allocation11 + $0x98] sm:$0xff]
    %v4605 = vld [vmem:[#allocation11 + $0xa0] sm:$0xff]
    %v4606 = vld [vmem:[#allocation11 + $0xa8] sm:$0xff]
    %v4607 = vld [vmem:[#allocation11 + $0xb0] sm:$0xff]
    %v4608 = vld [vmem:[#allocation11 + $0xb8] sm:$0xff]
    %v4609 = vld [vmem:[#allocation11 + $0xc0] sm:$0xff]
    %v4610 = vld [vmem:[#allocation11 + $0xc8] sm:$0xff]
    %v4611 = vld [vmem:[#allocation11 + $0xd0] sm:$0xff]
    %v4612 = vld [vmem:[#allocation11 + $0xd8] sm:$0xff]
    %v4613 = vld [vmem:[#allocation11 + $0xe0] sm:$0xff]
    %v4614 = vld [vmem:[#allocation11 + $0xe8] sm:$0xff]
    %v4615 = vld [vmem:[#allocation11 + $0xf0] sm:$0xff]
    %v4616 = vld [vmem:[#allocation11 + $0xf8] sm:$0xff]
    %v4617 = vld [vmem:[#allocation11 + $0x100] sm:$0xff]
    %v4618 = vld [vmem:[#allocation11 + $0x108] sm:$0xff]
    %v4619 = vld [vmem:[#allocation11 + $0x110] sm:$0xff]
    %v4620 = vld [vmem:[#allocation11 + $0x118] sm:$0xff]
    %v4621 = vld [vmem:[#allocation11 + $0x120] sm:$0xff]
    %v4622 = vld [vmem:[#allocation11 + $0x128] sm:$0xff]
    %v4623 = vld [vmem:[#allocation11 + $0x130] sm:$0xff]
    %v4624 = vld [vmem:[#allocation11 + $0x138] sm:$0xff]
    %v4625 = vld [vmem:[#allocation11 + $0x140] sm:$0xff]
    %v4626 = vld [vmem:[#allocation11 + $0x148] sm:$0xff]
    %v4627 = vld [vmem:[#allocation11 + $0x150] sm:$0xff]
    %v4628 = vld [vmem:[#allocation11 + $0x158] sm:$0xff]
    %v4629 = vld [vmem:[#allocation11 + $0x160] sm:$0xff]
    %v4630 = vld [vmem:[#allocation11 + $0x168] sm:$0xff]
    %v4631 = vld [vmem:[#allocation11 + $0x170] sm:$0xff]
    %v4632 = vld [vmem:[#allocation11 + $0x178] sm:$0xff]
    %v4633 = vld [vmem:[#allocation11 + $0x180] sm:$0xff]
    %v4634 = vld [vmem:[#allocation11 + $0x188] sm:$0xff]
    %v4635 = vld [vmem:[#allocation11 + $0x190] sm:$0xff]
    %v4636 = vld [vmem:[#allocation11 + $0x198] sm:$0xff]
    %v4637 = vld [vmem:[#allocation11 + $0x1a0] sm:$0xff]
    %v4638 = vld [vmem:[#allocation11 + $0x1a8] sm:$0xff]
    %v4639 = vld [vmem:[#allocation11 + $0x1b0] sm:$0xff]
    %v4640 = vld [vmem:[#allocation11 + $0x1b8] sm:$0xff]
    %v4641 = vld [vmem:[#allocation11 + $0x1c0] sm:$0xff]
    %v4642 = vld [vmem:[#allocation11 + $0x1c8] sm:$0xff]
    %v4643 = vld [vmem:[#allocation11 + $0x1d0] sm:$0xff]
    %v4644 = vld [vmem:[#allocation11 + $0x1d8] sm:$0xff]
    %v4645 = vld [vmem:[#allocation11 + $0x1e0] sm:$0xff]
    %v4646 = vld [vmem:[#allocation11 + $0x1e8] sm:$0xff]
    %v4647 = vld [vmem:[#allocation11 + $0x1f0] sm:$0xff]
    %v4648 = vld [vmem:[#allocation11 + $0x1f8] sm:$0xff]
    %v4649 = vld [vmem:[#allocation11 + $0x200] sm:$0xff]
    %v4650 = vld [vmem:[#allocation11 + $0x208] sm:$0xff]
    %v4651 = vld [vmem:[#allocation11 + $0x210] sm:$0xff]
    %v4652 = vld [vmem:[#allocation11 + $0x218] sm:$0xff]
    %v4653 = vld [vmem:[#allocation11 + $0x220] sm:$0xff]
    %v4654 = vld [vmem:[#allocation11 + $0x228] sm:$0xff]
    %v4655 = vld [vmem:[#allocation11 + $0x230] sm:$0xff]
    %v4656 = vld [vmem:[#allocation11 + $0x238] sm:$0xff]
    %v4657 = vld [vmem:[#allocation11 + $0x240] sm:$0xff]
    %v4658 = vld [vmem:[#allocation11 + $0x248] sm:$0xff]
    %v4659 = vld [vmem:[#allocation11 + $0x250] sm:$0xff]
    %v4660 = vld [vmem:[#allocation11 + $0x258] sm:$0xff]
    %v4661 = vld [vmem:[#allocation11 + $0x260] sm:$0xff]
    %v4662 = vld [vmem:[#allocation11 + $0x268] sm:$0xff]
    %v4663 = vld [vmem:[#allocation11 + $0x270] sm:$0xff]
    %v4664 = vld [vmem:[#allocation11 + $0x278] sm:$0xff]
    %v4665 = vld [vmem:[#allocation11 + $0x280] sm:$0xff]
    %v4666 = vld [vmem:[#allocation11 + $0x288] sm:$0xff]
    %v4667 = vld [vmem:[#allocation11 + $0x290] sm:$0xff]
    %v4668 = vld [vmem:[#allocation11 + $0x298] sm:$0xff]
    %v4669 = vld [vmem:[#allocation11 + $0x2a0] sm:$0xff]
    %v4670 = vld [vmem:[#allocation11 + $0x2a8] sm:$0xff]
    %v4671 = vld [vmem:[#allocation11 + $0x2b0] sm:$0xff]
    %v4672 = vld [vmem:[#allocation11 + $0x2b8] sm:$0xff]
    %v4673 = vld [vmem:[#allocation11 + $0x2c0] sm:$0xff]
    %v4674 = vld [vmem:[#allocation11 + $0x2c8] sm:$0xff]
    %v4675 = vld [vmem:[#allocation11 + $0x2d0] sm:$0xff]
    %v4676 = vld [vmem:[#allocation11 + $0x2d8] sm:$0xff]
    %v4677 = vld [vmem:[#allocation11 + $0x2e0] sm:$0xff]
    %v4678 = vld [vmem:[#allocation11 + $0x2e8] sm:$0xff]
    %v4679 = vld [vmem:[#allocation11 + $0x2f0] sm:$0xff]
    %v4680 = vld [vmem:[#allocation11 + $0x2f8] sm:$0xff]
    %v4681 = vld [vmem:[#allocation11 + $0x300] sm:$0xff]
    %v4682 = vld [vmem:[#allocation11 + $0x308] sm:$0xff]
    %v4683 = vld [vmem:[#allocation11 + $0x310] sm:$0xff]
    %v4684 = vld [vmem:[#allocation11 + $0x318] sm:$0xff]
    %v4685 = vld [vmem:[#allocation11 + $0x320] sm:$0xff]
    %v4686 = vld [vmem:[#allocation11 + $0x328] sm:$0xff]
    %v4687 = vld [vmem:[#allocation11 + $0x330] sm:$0xff]
    %v4688 = vld [vmem:[#allocation11 + $0x338] sm:$0xff]
    %v4689 = vld [vmem:[#allocation11 + $0x340] sm:$0xff]
    %v4690 = vld [vmem:[#allocation11 + $0x348] sm:$0xff]
    %v4691 = vld [vmem:[#allocation11 + $0x350] sm:$0xff]
    %v4692 = vld [vmem:[#allocation11 + $0x358] sm:$0xff]
    %v4693 = vld [vmem:[#allocation11 + $0x360] sm:$0xff]
    %v4694 = vld [vmem:[#allocation11 + $0x368] sm:$0xff]
    %v4695 = vld [vmem:[#allocation11 + $0x370] sm:$0xff]
    %v4696 = vld [vmem:[#allocation11 + $0x378] sm:$0xff]
    %v4697 = vld [vmem:[#allocation11 + $0x380] sm:$0xff]
    %v4698 = vld [vmem:[#allocation11 + $0x388] sm:$0xff]
    %v4699 = vld [vmem:[#allocation11 + $0x390] sm:$0xff]
    %v4700 = vld [vmem:[#allocation11 + $0x398] sm:$0xff]
    %v4701 = vld [vmem:[#allocation11 + $0x3a0] sm:$0xff]
    %v4702 = vld [vmem:[#allocation11 + $0x3a8] sm:$0xff]
    %v4703 = vld [vmem:[#allocation11 + $0x3b0] sm:$0xff]
    %v4704 = vld [vmem:[#allocation11 + $0x3b8] sm:$0xff]
    %v4705 = vld [vmem:[#allocation11 + $0x3c0] sm:$0xff]
    %v4706 = vld [vmem:[#allocation11 + $0x3c8] sm:$0xff]
    %v4707 = vld [vmem:[#allocation11 + $0x3d0] sm:$0xff]
    %v4708 = vld [vmem:[#allocation11 + $0x3d8] sm:$0xff]
    %v4709 = vld [vmem:[#allocation11 + $0x3e0] sm:$0xff]
    %v4710 = vld [vmem:[#allocation11 + $0x3e8] sm:$0xff]
    %v4711 = vld [vmem:[#allocation11 + $0x3f0] sm:$0xff]
    %v4712 = vld [vmem:[#allocation11 + $0x3f8] sm:$0xff]
    %v4713 = vld [vmem:[#allocation11 + $0x400] sm:$0xff]
    %v4714 = vld [vmem:[#allocation11 + $0x408] sm:$0xff]
    %v4715 = vld [vmem:[#allocation11 + $0x410] sm:$0xff]
    %v4716 = vld [vmem:[#allocation11 + $0x418] sm:$0xff]
    %v4717 = vld [vmem:[#allocation11 + $0x420] sm:$0xff]
    %v4718 = vld [vmem:[#allocation11 + $0x428] sm:$0xff]
    %v4719 = vld [vmem:[#allocation11 + $0x430] sm:$0xff]
    %v4720 = vld [vmem:[#allocation11 + $0x438] sm:$0xff]
    %v4721 = vld [vmem:[#allocation11 + $0x440] sm:$0xff]
    %v4722 = vld [vmem:[#allocation11 + $0x448] sm:$0xff]
    %v4723 = vld [vmem:[#allocation11 + $0x450] sm:$0xff]
    %v4724 = vld [vmem:[#allocation11 + $0x458] sm:$0xff]
    %v4725 = vld [vmem:[#allocation11 + $0x460] sm:$0xff]
    %v4726 = vld [vmem:[#allocation11 + $0x468] sm:$0xff]
    %v4727 = vld [vmem:[#allocation11 + $0x470] sm:$0xff]
    %v4728 = vld [vmem:[#allocation11 + $0x478] sm:$0xff]
    %v4729 = vld [vmem:[#allocation11 + $0x480] sm:$0xff]
    %v4730 = vld [vmem:[#allocation11 + $0x488] sm:$0xff]
    %v4731 = vld [vmem:[#allocation11 + $0x490] sm:$0xff]
    %v4732 = vld [vmem:[#allocation11 + $0x498] sm:$0xff]
    %v4733 = vld [vmem:[#allocation11 + $0x4a0] sm:$0xff]
    %v4734 = vld [vmem:[#allocation11 + $0x4a8] sm:$0xff]
    %v4735 = vld [vmem:[#allocation11 + $0x4b0] sm:$0xff]
    %v4736 = vld [vmem:[#allocation11 + $0x4b8] sm:$0xff]
    %v4737 = vld [vmem:[#allocation11 + $0x4c0] sm:$0xff]
    %v4738 = vld [vmem:[#allocation11 + $0x4c8] sm:$0xff]
    %v4739 = vld [vmem:[#allocation11 + $0x4d0] sm:$0xff]
    %v4740 = vld [vmem:[#allocation11 + $0x4d8] sm:$0xff]
    %v4741 = vld [vmem:[#allocation11 + $0x4e0] sm:$0xff]
    %v4742 = vld [vmem:[#allocation11 + $0x4e8] sm:$0xff]
    %v4743 = vld [vmem:[#allocation11 + $0x4f0] sm:$0xff]
    %v4744 = vld [vmem:[#allocation11 + $0x4f8] sm:$0xff]
    %v4745 = vld [vmem:[#allocation11 + $0x500] sm:$0xff]
    %v4746 = vld [vmem:[#allocation11 + $0x508] sm:$0xff]
    %v4747 = vld [vmem:[#allocation11 + $0x510] sm:$0xff]
    %v4748 = vld [vmem:[#allocation11 + $0x518] sm:$0xff]
    %v4749 = vld [vmem:[#allocation11 + $0x520] sm:$0xff]
    %v4750 = vld [vmem:[#allocation11 + $0x528] sm:$0xff]
    %v4751 = vld [vmem:[#allocation11 + $0x530] sm:$0xff]
    %v4752 = vld [vmem:[#allocation11 + $0x538] sm:$0xff]
    %v4753 = vld [vmem:[#allocation11 + $0x540] sm:$0xff]
    %v4754 = vld [vmem:[#allocation11 + $0x548] sm:$0xff]
    %v4755 = vld [vmem:[#allocation11 + $0x550] sm:$0xff]
    %v4756 = vld [vmem:[#allocation11 + $0x558] sm:$0xff]
    %v4757 = vld [vmem:[#allocation11 + $0x560] sm:$0xff]
    %v4758 = vld [vmem:[#allocation11 + $0x568] sm:$0xff]
    %v4759 = vld [vmem:[#allocation11 + $0x570] sm:$0xff]
    %v4760 = vld [vmem:[#allocation11 + $0x578] sm:$0xff]
    %v4761 = vld [vmem:[#allocation11 + $0x580] sm:$0xff]
    %v4762 = vld [vmem:[#allocation11 + $0x588] sm:$0xff]
    %v4763 = vld [vmem:[#allocation11 + $0x590] sm:$0xff]
    %v4764 = vld [vmem:[#allocation11 + $0x598] sm:$0xff]
    %v4765 = vld [vmem:[#allocation11 + $0x5a0] sm:$0xff]
    %v4766 = vld [vmem:[#allocation11 + $0x5a8] sm:$0xff]
    %v4767 = vld [vmem:[#allocation11 + $0x5b0] sm:$0xff]
    %v4768 = vld [vmem:[#allocation11 + $0x5b8] sm:$0xff]
    %v4769 = vld [vmem:[#allocation11 + $0x5c0] sm:$0xff]
    %v4770 = vld [vmem:[#allocation11 + $0x5c8] sm:$0xff]
    %v4771 = vld [vmem:[#allocation11 + $0x5d0] sm:$0xff]
    %v4772 = vld [vmem:[#allocation11 + $0x5d8] sm:$0xff]
    %v4773 = vld [vmem:[#allocation11 + $0x5e0] sm:$0xff]
    %v4774 = vld [vmem:[#allocation11 + $0x5e8] sm:$0xff]
    %v4775 = vld [vmem:[#allocation11 + $0x5f0] sm:$0xff]
    %v4776 = vld [vmem:[#allocation11 + $0x5f8] sm:$0xff]
    %v4777 = vld [vmem:[#allocation11 + $0x600] sm:$0xff]
    %v4778 = vld [vmem:[#allocation11 + $0x608] sm:$0xff]
    %v4779 = vld [vmem:[#allocation11 + $0x610] sm:$0xff]
    %v4780 = vld [vmem:[#allocation11 + $0x618] sm:$0xff]
    %v4781 = vld [vmem:[#allocation11 + $0x620] sm:$0xff]
    %v4782 = vld [vmem:[#allocation11 + $0x628] sm:$0xff]
    %v4783 = vld [vmem:[#allocation11 + $0x630] sm:$0xff]
    %v4784 = vld [vmem:[#allocation11 + $0x638] sm:$0xff]
    %v4785 = vld [vmem:[#allocation11 + $0x640] sm:$0xff]
    %v4786 = vld [vmem:[#allocation11 + $0x648] sm:$0xff]
    %v4787 = vld [vmem:[#allocation11 + $0x650] sm:$0xff]
    %v4788 = vld [vmem:[#allocation11 + $0x658] sm:$0xff]
    %v4789 = vld [vmem:[#allocation11 + $0x660] sm:$0xff]
    %v4790 = vld [vmem:[#allocation11 + $0x668] sm:$0xff]
    %v4791 = vld [vmem:[#allocation11 + $0x670] sm:$0xff]
    %v4792 = vld [vmem:[#allocation11 + $0x678] sm:$0xff]
    %v4793 = vld [vmem:[#allocation11 + $0x680] sm:$0xff]
    %v4794 = vld [vmem:[#allocation11 + $0x688] sm:$0xff]
    %v4795 = vld [vmem:[#allocation11 + $0x690] sm:$0xff]
    %v4796 = vld [vmem:[#allocation11 + $0x698] sm:$0xff]
    %v4797 = vld [vmem:[#allocation11 + $0x6a0] sm:$0xff]
    %v4798 = vld [vmem:[#allocation11 + $0x6a8] sm:$0xff]
    %v4799 = vld [vmem:[#allocation11 + $0x6b0] sm:$0xff]
    %v4800 = vld [vmem:[#allocation11 + $0x6b8] sm:$0xff]
    %v4801 = vld [vmem:[#allocation11 + $0x6c0] sm:$0xff]
    %v4802 = vld [vmem:[#allocation11 + $0x6c8] sm:$0xff]
    %v4803 = vld [vmem:[#allocation11 + $0x6d0] sm:$0xff]
    %v4804 = vld [vmem:[#allocation11 + $0x6d8] sm:$0xff]
    %v4805 = vld [vmem:[#allocation11 + $0x6e0] sm:$0xff]
    %v4806 = vld [vmem:[#allocation11 + $0x6e8] sm:$0xff]
    %v4807 = vld [vmem:[#allocation11 + $0x6f0] sm:$0xff]
    %v4808 = vld [vmem:[#allocation11 + $0x6f8] sm:$0xff]
    %v4809 = vld [vmem:[#allocation11 + $0x700] sm:$0xff]
    %v4810 = vld [vmem:[#allocation11 + $0x708] sm:$0xff]
    %v4811 = vld [vmem:[#allocation11 + $0x710] sm:$0xff]
    %v4812 = vld [vmem:[#allocation11 + $0x718] sm:$0xff]
    %v4813 = vld [vmem:[#allocation11 + $0x720] sm:$0xff]
    %v4814 = vld [vmem:[#allocation11 + $0x728] sm:$0xff]
    %v4815 = vld [vmem:[#allocation11 + $0x730] sm:$0xff]
    %v4816 = vld [vmem:[#allocation11 + $0x738] sm:$0xff]
    %v4817 = vld [vmem:[#allocation11 + $0x740] sm:$0xff]
    %v4818 = vld [vmem:[#allocation11 + $0x748] sm:$0xff]
    %v4819 = vld [vmem:[#allocation11 + $0x750] sm:$0xff]
    %v4820 = vld [vmem:[#allocation11 + $0x758] sm:$0xff]
    %v4821 = vld [vmem:[#allocation11 + $0x760] sm:$0xff]
    %v4822 = vld [vmem:[#allocation11 + $0x768] sm:$0xff]
    %v4823 = vld [vmem:[#allocation11 + $0x770] sm:$0xff]
    %v4824 = vld [vmem:[#allocation11 + $0x778] sm:$0xff]
    %v4825 = vld [vmem:[#allocation11 + $0x780] sm:$0xff]
    %v4826 = vld [vmem:[#allocation11 + $0x788] sm:$0xff]
    %v4827 = vld [vmem:[#allocation11 + $0x790] sm:$0xff]
    %v4828 = vld [vmem:[#allocation11 + $0x798] sm:$0xff]
    %v4829 = vld [vmem:[#allocation11 + $0x7a0] sm:$0xff]
    %v4830 = vld [vmem:[#allocation11 + $0x7a8] sm:$0xff]
    %v4831 = vld [vmem:[#allocation11 + $0x7b0] sm:$0xff]
    %v4832 = vld [vmem:[#allocation11 + $0x7b8] sm:$0xff]
    %v4833 = vld [vmem:[#allocation11 + $0x7c0] sm:$0xff]
    %v4834 = vld [vmem:[#allocation11 + $0x7c8] sm:$0xff]
    %v4835 = vld [vmem:[#allocation11 + $0x7d0] sm:$0xff]
    %v4836 = vld [vmem:[#allocation11 + $0x7d8] sm:$0xff]
    %v4837 = vld [vmem:[#allocation11 + $0x7e0] sm:$0xff]
    %v4838 = vld [vmem:[#allocation11 + $0x7e8] sm:$0xff]
    %v4839 = vld [vmem:[#allocation11 + $0x7f0] sm:$0xff]
    %v4840 = vld [vmem:[#allocation11 + $0x7f8] sm:$0xff]
    %v4841 = vld [vmem:[#allocation11 + $0x800] sm:$0xff]
    %v4842 = vld [vmem:[#allocation11 + $0x808] sm:$0xff]
    %v4843 = vld [vmem:[#allocation11 + $0x810] sm:$0xff]
    %v4844 = vld [vmem:[#allocation11 + $0x818] sm:$0xff]
    %v4845 = vld [vmem:[#allocation11 + $0x820] sm:$0xff]
    %v4846 = vld [vmem:[#allocation11 + $0x828] sm:$0xff]
    %v4847 = vld [vmem:[#allocation11 + $0x830] sm:$0xff]
    %v4848 = vld [vmem:[#allocation11 + $0x838] sm:$0xff]
    %v4849 = vld [vmem:[#allocation11 + $0x840] sm:$0xff]
    %v4850 = vld [vmem:[#allocation11 + $0x848] sm:$0xff]
    %v4851 = vld [vmem:[#allocation11 + $0x850] sm:$0xff]
    %v4852 = vld [vmem:[#allocation11 + $0x858] sm:$0xff]
    %v4853 = vld [vmem:[#allocation11 + $0x860] sm:$0xff]
    %v4854 = vld [vmem:[#allocation11 + $0x868] sm:$0xff]
    %v4855 = vld [vmem:[#allocation11 + $0x870] sm:$0xff]
    %v4856 = vld [vmem:[#allocation11 + $0x878] sm:$0xff]
    %v4857 = vld [vmem:[#allocation11 + $0x880] sm:$0xff]
    %v4858 = vld [vmem:[#allocation11 + $0x888] sm:$0xff]
    %v4859 = vld [vmem:[#allocation11 + $0x890] sm:$0xff]
    %v4860 = vld [vmem:[#allocation11 + $0x898] sm:$0xff]
    %v4861 = vld [vmem:[#allocation11 + $0x8a0] sm:$0xff]
    %v4862 = vld [vmem:[#allocation11 + $0x8a8] sm:$0xff]
    %v4863 = vld [vmem:[#allocation11 + $0x8b0] sm:$0xff]
    %v4864 = vld [vmem:[#allocation11 + $0x8b8] sm:$0xff]
    %v4865 = vld [vmem:[#allocation11 + $0x8c0] sm:$0xff]
    %v4866 = vld [vmem:[#allocation11 + $0x8c8] sm:$0xff]
    %v4867 = vld [vmem:[#allocation11 + $0x8d0] sm:$0xff]
    %v4868 = vld [vmem:[#allocation11 + $0x8d8] sm:$0xff]
    %v4869 = vld [vmem:[#allocation11 + $0x8e0] sm:$0xff]
    %v4870 = vld [vmem:[#allocation11 + $0x8e8] sm:$0xff]
    %v4871 = vld [vmem:[#allocation11 + $0x8f0] sm:$0xff]
    %v4872 = vld [vmem:[#allocation11 + $0x8f8] sm:$0xff]
    %v4873 = vld [vmem:[#allocation16] sm:$0x3f]
    %v4875 = vlaneseq
    %v4876 = vshrl.u32 %v4875, 7
    %v4877 = vsub.s32 0, %v4876
    %v4878 = vrot.slane %v4873, %v4877
    %v4879 = vlaneseq
    %v4880 = vshrl.u32 %v4879, 7
    %v4881 = vsub.s32 1, %v4880
    %v4882 = vrot.slane %v4873, %v4881
    %v4883 = vlaneseq
    %v4884 = vshrl.u32 %v4883, 7
    %v4885 = vsub.s32 2, %v4884
    %v4886 = vrot.slane %v4873, %v4885
    %v4887 = vlaneseq
    %v4888 = vshrl.u32 %v4887, 7
    %v4889 = vsub.s32 3, %v4888
    %v4890 = vrot.slane %v4873, %v4889
    %v4891 = vlaneseq
    %v4892 = vshrl.u32 %v4891, 7
    %v4893 = vsub.s32 4, %v4892
    %v4894 = vrot.slane %v4873, %v4893
    %v4895 = vlaneseq
    %v4896 = vshrl.u32 %v4895, 7
    %v4897 = vsub.s32 5, %v4896
    %v4898 = vrot.slane %v4873, %v4897
    %v5193 = vunpack.c.l.b16 %v4585
    %v5194 = vunpack.c.h.b16 %v4585
    %v5195 = vunpack.c.l.b16 %v4586
    %v5196 = vunpack.c.h.b16 %v4586
    %v5197 = vunpack.c.l.b16 %v4587
    %v5198 = vunpack.c.h.b16 %v4587
    %v5199 = vunpack.c.l.b16 %v4588
    %v5200 = vunpack.c.h.b16 %v4588
    %v5201 = vunpack.c.l.b16 %v4589
    %v5202 = vunpack.c.h.b16 %v4589
    %v5203 = vunpack.c.l.b16 %v4590
    %v5204 = vunpack.c.h.b16 %v4590
    %v5205 = vunpack.c.l.b16 %v4591
    %v5206 = vunpack.c.h.b16 %v4591
    %v5207 = vunpack.c.l.b16 %v4592
    %v5208 = vunpack.c.h.b16 %v4592
    %v5209 = vunpack.c.l.b16 %v4593
    %v5210 = vunpack.c.h.b16 %v4593
    %v5211 = vunpack.c.l.b16 %v4594
    %v5212 = vunpack.c.h.b16 %v4594
    %v5213 = vunpack.c.l.b16 %v4595
    %v5214 = vunpack.c.h.b16 %v4595
    %v5215 = vunpack.c.l.b16 %v4596
    %v5216 = vunpack.c.h.b16 %v4596
    %v5217 = vunpack.c.l.b16 %v4597
    %v5218 = vunpack.c.h.b16 %v4597
    %v5219 = vunpack.c.l.b16 %v4598
    %v5220 = vunpack.c.h.b16 %v4598
    %v5221 = vunpack.c.l.b16 %v4599
    %v5222 = vunpack.c.h.b16 %v4599
    %v5223 = vunpack.c.l.b16 %v4600
    %v5224 = vunpack.c.h.b16 %v4600
    %v5225 = vunpack.c.l.b16 %v4601
    %v5226 = vunpack.c.h.b16 %v4601
    %v5227 = vunpack.c.l.b16 %v4602
    %v5228 = vunpack.c.h.b16 %v4602
    %v5229 = vunpack.c.l.b16 %v4603
    %v5230 = vunpack.c.h.b16 %v4603
    %v5231 = vunpack.c.l.b16 %v4604
    %v5232 = vunpack.c.h.b16 %v4604
    %v5233 = vunpack.c.l.b16 %v4605
    %v5234 = vunpack.c.h.b16 %v4605
    %v5235 = vunpack.c.l.b16 %v4606
    %v5236 = vunpack.c.h.b16 %v4606
    %v5237 = vunpack.c.l.b16 %v4607
    %v5238 = vunpack.c.h.b16 %v4607
    %v5239 = vunpack.c.l.b16 %v4608
    %v5240 = vunpack.c.h.b16 %v4608
    %v5241 = vunpack.c.l.b16 %v4609
    %v5242 = vunpack.c.h.b16 %v4609
    %v5243 = vunpack.c.l.b16 %v4610
    %v5244 = vunpack.c.h.b16 %v4610
    %v5245 = vunpack.c.l.b16 %v4611
    %v5246 = vunpack.c.h.b16 %v4611
    %v5247 = vunpack.c.l.b16 %v4612
    %v5248 = vunpack.c.h.b16 %v4612
    %v5249 = vunpack.c.l.b16 %v4613
    %v5250 = vunpack.c.h.b16 %v4613
    %v5251 = vunpack.c.l.b16 %v4614
    %v5252 = vunpack.c.h.b16 %v4614
    %v5253 = vunpack.c.l.b16 %v4615
    %v5254 = vunpack.c.h.b16 %v4615
    %v5255 = vunpack.c.l.b16 %v4616
    %v5256 = vunpack.c.h.b16 %v4616
    %v5257 = vunpack.c.l.b16 %v4617
    %v5258 = vunpack.c.h.b16 %v4617
    %v5259 = vunpack.c.l.b16 %v4618
    %v5260 = vunpack.c.h.b16 %v4618
    %v5261 = vunpack.c.l.b16 %v4619
    %v5262 = vunpack.c.h.b16 %v4619
    %v5263 = vunpack.c.l.b16 %v4620
    %v5264 = vunpack.c.h.b16 %v4620
    %v5265 = vunpack.c.l.b16 %v4621
    %v5266 = vunpack.c.h.b16 %v4621
    %v5267 = vunpack.c.l.b16 %v4622
    %v5268 = vunpack.c.h.b16 %v4622
    %v5269 = vunpack.c.l.b16 %v4623
    %v5270 = vunpack.c.h.b16 %v4623
    %v5271 = vunpack.c.l.b16 %v4624
    %v5272 = vunpack.c.h.b16 %v4624
    %v5273 = vunpack.c.l.b16 %v4625
    %v5274 = vunpack.c.h.b16 %v4625
    %v5275 = vunpack.c.l.b16 %v4626
    %v5276 = vunpack.c.h.b16 %v4626
    %v5277 = vunpack.c.l.b16 %v4627
    %v5278 = vunpack.c.h.b16 %v4627
    %v5279 = vunpack.c.l.b16 %v4628
    %v5280 = vunpack.c.h.b16 %v4628
    %v5281 = vunpack.c.l.b16 %v4629
    %v5282 = vunpack.c.h.b16 %v4629
    %v5283 = vunpack.c.l.b16 %v4630
    %v5284 = vunpack.c.h.b16 %v4630
    %v5285 = vunpack.c.l.b16 %v4631
    %v5286 = vunpack.c.h.b16 %v4631
    %v5287 = vunpack.c.l.b16 %v4632
    %v5288 = vunpack.c.h.b16 %v4632
    %v5289 = vunpack.c.l.b16 %v4633
    %v5290 = vunpack.c.h.b16 %v4633
    %v5291 = vunpack.c.l.b16 %v4634
    %v5292 = vunpack.c.h.b16 %v4634
    %v5293 = vunpack.c.l.b16 %v4635
    %v5294 = vunpack.c.h.b16 %v4635
    %v5295 = vunpack.c.l.b16 %v4636
    %v5296 = vunpack.c.h.b16 %v4636
    %v5297 = vunpack.c.l.b16 %v4637
    %v5298 = vunpack.c.h.b16 %v4637
    %v5299 = vunpack.c.l.b16 %v4638
    %v5300 = vunpack.c.h.b16 %v4638
    %v5301 = vunpack.c.l.b16 %v4639
    %v5302 = vunpack.c.h.b16 %v4639
    %v5303 = vunpack.c.l.b16 %v4640
    %v5304 = vunpack.c.h.b16 %v4640
    %v5305 = vunpack.c.l.b16 %v4641
    %v5306 = vunpack.c.h.b16 %v4641
    %v5307 = vunpack.c.l.b16 %v4642
    %v5308 = vunpack.c.h.b16 %v4642
    %v5309 = vunpack.c.l.b16 %v4643
    %v5310 = vunpack.c.h.b16 %v4643
    %v5311 = vunpack.c.l.b16 %v4644
    %v5312 = vunpack.c.h.b16 %v4644
    %v5313 = vunpack.c.l.b16 %v4645
    %v5314 = vunpack.c.h.b16 %v4645
    %v5315 = vunpack.c.l.b16 %v4646
    %v5316 = vunpack.c.h.b16 %v4646
    %v5317 = vunpack.c.l.b16 %v4647
    %v5318 = vunpack.c.h.b16 %v4647
    %v5319 = vunpack.c.l.b16 %v4648
    %v5320 = vunpack.c.h.b16 %v4648
    %v5321 = vunpack.c.l.b16 %v4649
    %v5322 = vunpack.c.h.b16 %v4649
    %v5323 = vunpack.c.l.b16 %v4650
    %v5324 = vunpack.c.h.b16 %v4650
    %v5325 = vunpack.c.l.b16 %v4651
    %v5326 = vunpack.c.h.b16 %v4651
    %v5327 = vunpack.c.l.b16 %v4652
    %v5328 = vunpack.c.h.b16 %v4652
    %v5329 = vunpack.c.l.b16 %v4653
    %v5330 = vunpack.c.h.b16 %v4653
    %v5331 = vunpack.c.l.b16 %v4654
    %v5332 = vunpack.c.h.b16 %v4654
    %v5333 = vunpack.c.l.b16 %v4655
    %v5334 = vunpack.c.h.b16 %v4655
    %v5335 = vunpack.c.l.b16 %v4656
    %v5336 = vunpack.c.h.b16 %v4656
    %v5337 = vunpack.c.l.b16 %v4657
    %v5338 = vunpack.c.h.b16 %v4657
    %v5339 = vunpack.c.l.b16 %v4658
    %v5340 = vunpack.c.h.b16 %v4658
    %v5341 = vunpack.c.l.b16 %v4659
    %v5342 = vunpack.c.h.b16 %v4659
    %v5343 = vunpack.c.l.b16 %v4660
    %v5344 = vunpack.c.h.b16 %v4660
    %v5345 = vunpack.c.l.b16 %v4661
    %v5346 = vunpack.c.h.b16 %v4661
    %v5347 = vunpack.c.l.b16 %v4662
    %v5348 = vunpack.c.h.b16 %v4662
    %v5349 = vunpack.c.l.b16 %v4663
    %v5350 = vunpack.c.h.b16 %v4663
    %v5351 = vunpack.c.l.b16 %v4664
    %v5352 = vunpack.c.h.b16 %v4664
    %v5353 = vunpack.c.l.b16 %v4665
    %v5354 = vunpack.c.h.b16 %v4665
    %v5355 = vunpack.c.l.b16 %v4666
    %v5356 = vunpack.c.h.b16 %v4666
    %v5357 = vunpack.c.l.b16 %v4667
    %v5358 = vunpack.c.h.b16 %v4667
    %v5359 = vunpack.c.l.b16 %v4668
    %v5360 = vunpack.c.h.b16 %v4668
    %v5361 = vunpack.c.l.b16 %v4669
    %v5362 = vunpack.c.h.b16 %v4669
    %v5363 = vunpack.c.l.b16 %v4670
    %v5364 = vunpack.c.h.b16 %v4670
    %v5365 = vunpack.c.l.b16 %v4671
    %v5366 = vunpack.c.h.b16 %v4671
    %v5367 = vunpack.c.l.b16 %v4672
    %v5368 = vunpack.c.h.b16 %v4672
    %v5369 = vunpack.c.l.b16 %v4673
    %v5370 = vunpack.c.h.b16 %v4673
    %v5371 = vunpack.c.l.b16 %v4674
    %v5372 = vunpack.c.h.b16 %v4674
    %v5373 = vunpack.c.l.b16 %v4675
    %v5374 = vunpack.c.h.b16 %v4675
    %v5375 = vunpack.c.l.b16 %v4676
    %v5376 = vunpack.c.h.b16 %v4676
    %v5377 = vunpack.c.l.b16 %v4677
    %v5378 = vunpack.c.h.b16 %v4677
    %v5379 = vunpack.c.l.b16 %v4678
    %v5380 = vunpack.c.h.b16 %v4678
    %v5381 = vunpack.c.l.b16 %v4679
    %v5382 = vunpack.c.h.b16 %v4679
    %v5383 = vunpack.c.l.b16 %v4680
    %v5384 = vunpack.c.h.b16 %v4680
    %v5385 = vunpack.c.l.b16 %v4681
    %v5386 = vunpack.c.h.b16 %v4681
    %v5387 = vunpack.c.l.b16 %v4682
    %v5388 = vunpack.c.h.b16 %v4682
    %v5389 = vunpack.c.l.b16 %v4683
    %v5390 = vunpack.c.h.b16 %v4683
    %v5391 = vunpack.c.l.b16 %v4684
    %v5392 = vunpack.c.h.b16 %v4684
    %v5393 = vunpack.c.l.b16 %v4685
    %v5394 = vunpack.c.h.b16 %v4685
    %v5395 = vunpack.c.l.b16 %v4686
    %v5396 = vunpack.c.h.b16 %v4686
    %v5397 = vunpack.c.l.b16 %v4687
    %v5398 = vunpack.c.h.b16 %v4687
    %v5399 = vunpack.c.l.b16 %v4688
    %v5400 = vunpack.c.h.b16 %v4688
    %v5401 = vunpack.c.l.b16 %v4689
    %v5402 = vunpack.c.h.b16 %v4689
    %v5403 = vunpack.c.l.b16 %v4690
    %v5404 = vunpack.c.h.b16 %v4690
    %v5405 = vunpack.c.l.b16 %v4691
    %v5406 = vunpack.c.h.b16 %v4691
    %v5407 = vunpack.c.l.b16 %v4692
    %v5408 = vunpack.c.h.b16 %v4692
    %v5409 = vunpack.c.l.b16 %v4693
    %v5410 = vunpack.c.h.b16 %v4693
    %v5411 = vunpack.c.l.b16 %v4694
    %v5412 = vunpack.c.h.b16 %v4694
    %v5413 = vunpack.c.l.b16 %v4695
    %v5414 = vunpack.c.h.b16 %v4695
    %v5415 = vunpack.c.l.b16 %v4696
    %v5416 = vunpack.c.h.b16 %v4696
    %v5417 = vunpack.c.l.b16 %v4697
    %v5418 = vunpack.c.h.b16 %v4697
    %v5419 = vunpack.c.l.b16 %v4698
    %v5420 = vunpack.c.h.b16 %v4698
    %v5421 = vunpack.c.l.b16 %v4699
    %v5422 = vunpack.c.h.b16 %v4699
    %v5423 = vunpack.c.l.b16 %v4700
    %v5424 = vunpack.c.h.b16 %v4700
    %v5425 = vunpack.c.l.b16 %v4701
    %v5426 = vunpack.c.h.b16 %v4701
    %v5427 = vunpack.c.l.b16 %v4702
    %v5428 = vunpack.c.h.b16 %v4702
    %v5429 = vunpack.c.l.b16 %v4703
    %v5430 = vunpack.c.h.b16 %v4703
    %v5431 = vunpack.c.l.b16 %v4704
    %v5432 = vunpack.c.h.b16 %v4704
    %v5433 = vunpack.c.l.b16 %v4705
    %v5434 = vunpack.c.h.b16 %v4705
    %v5435 = vunpack.c.l.b16 %v4706
    %v5436 = vunpack.c.h.b16 %v4706
    %v5437 = vunpack.c.l.b16 %v4707
    %v5438 = vunpack.c.h.b16 %v4707
    %v5439 = vunpack.c.l.b16 %v4708
    %v5440 = vunpack.c.h.b16 %v4708
    %v5441 = vunpack.c.l.b16 %v4709
    %v5442 = vunpack.c.h.b16 %v4709
    %v5443 = vunpack.c.l.b16 %v4710
    %v5444 = vunpack.c.h.b16 %v4710
    %v5445 = vunpack.c.l.b16 %v4711
    %v5446 = vunpack.c.h.b16 %v4711
    %v5447 = vunpack.c.l.b16 %v4712
    %v5448 = vunpack.c.h.b16 %v4712
    %v5449 = vunpack.c.l.b16 %v4713
    %v5450 = vunpack.c.h.b16 %v4713
    %v5451 = vunpack.c.l.b16 %v4714
    %v5452 = vunpack.c.h.b16 %v4714
    %v5453 = vunpack.c.l.b16 %v4715
    %v5454 = vunpack.c.h.b16 %v4715
    %v5455 = vunpack.c.l.b16 %v4716
    %v5456 = vunpack.c.h.b16 %v4716
    %v5457 = vunpack.c.l.b16 %v4717
    %v5458 = vunpack.c.h.b16 %v4717
    %v5459 = vunpack.c.l.b16 %v4718
    %v5460 = vunpack.c.h.b16 %v4718
    %v5461 = vunpack.c.l.b16 %v4719
    %v5462 = vunpack.c.h.b16 %v4719
    %v5463 = vunpack.c.l.b16 %v4720
    %v5464 = vunpack.c.h.b16 %v4720
    %v5465 = vunpack.c.l.b16 %v4721
    %v5466 = vunpack.c.h.b16 %v4721
    %v5467 = vunpack.c.l.b16 %v4722
    %v5468 = vunpack.c.h.b16 %v4722
    %v5469 = vunpack.c.l.b16 %v4723
    %v5470 = vunpack.c.h.b16 %v4723
    %v5471 = vunpack.c.l.b16 %v4724
    %v5472 = vunpack.c.h.b16 %v4724
    %v5473 = vunpack.c.l.b16 %v4725
    %v5474 = vunpack.c.h.b16 %v4725
    %v5475 = vunpack.c.l.b16 %v4726
    %v5476 = vunpack.c.h.b16 %v4726
    %v5477 = vunpack.c.l.b16 %v4727
    %v5478 = vunpack.c.h.b16 %v4727
    %v5479 = vunpack.c.l.b16 %v4728
    %v5480 = vunpack.c.h.b16 %v4728
    %v5481 = vunpack.c.l.b16 %v4729
    %v5482 = vunpack.c.h.b16 %v4729
    %v5483 = vunpack.c.l.b16 %v4730
    %v5484 = vunpack.c.h.b16 %v4730
    %v5485 = vunpack.c.l.b16 %v4731
    %v5486 = vunpack.c.h.b16 %v4731
    %v5487 = vunpack.c.l.b16 %v4732
    %v5488 = vunpack.c.h.b16 %v4732
    %v5489 = vunpack.c.l.b16 %v4733
    %v5490 = vunpack.c.h.b16 %v4733
    %v5491 = vunpack.c.l.b16 %v4734
    %v5492 = vunpack.c.h.b16 %v4734
    %v5493 = vunpack.c.l.b16 %v4735
    %v5494 = vunpack.c.h.b16 %v4735
    %v5495 = vunpack.c.l.b16 %v4736
    %v5496 = vunpack.c.h.b16 %v4736
    %v5497 = vunpack.c.l.b16 %v4737
    %v5498 = vunpack.c.h.b16 %v4737
    %v5499 = vunpack.c.l.b16 %v4738
    %v5500 = vunpack.c.h.b16 %v4738
    %v5501 = vunpack.c.l.b16 %v4739
    %v5502 = vunpack.c.h.b16 %v4739
    %v5503 = vunpack.c.l.b16 %v4740
    %v5504 = vunpack.c.h.b16 %v4740
    %v5505 = vunpack.c.l.b16 %v4741
    %v5506 = vunpack.c.h.b16 %v4741
    %v5507 = vunpack.c.l.b16 %v4742
    %v5508 = vunpack.c.h.b16 %v4742
    %v5509 = vunpack.c.l.b16 %v4743
    %v5510 = vunpack.c.h.b16 %v4743
    %v5511 = vunpack.c.l.b16 %v4744
    %v5512 = vunpack.c.h.b16 %v4744
    %v5513 = vunpack.c.l.b16 %v4745
    %v5514 = vunpack.c.h.b16 %v4745
    %v5515 = vunpack.c.l.b16 %v4746
    %v5516 = vunpack.c.h.b16 %v4746
    %v5517 = vunpack.c.l.b16 %v4747
    %v5518 = vunpack.c.h.b16 %v4747
    %v5519 = vunpack.c.l.b16 %v4748
    %v5520 = vunpack.c.h.b16 %v4748
    %v5521 = vunpack.c.l.b16 %v4749
    %v5522 = vunpack.c.h.b16 %v4749
    %v5523 = vunpack.c.l.b16 %v4750
    %v5524 = vunpack.c.h.b16 %v4750
    %v5525 = vunpack.c.l.b16 %v4751
    %v5526 = vunpack.c.h.b16 %v4751
    %v5527 = vunpack.c.l.b16 %v4752
    %v5528 = vunpack.c.h.b16 %v4752
    %v5529 = vunpack.c.l.b16 %v4753
    %v5530 = vunpack.c.h.b16 %v4753
    %v5531 = vunpack.c.l.b16 %v4754
    %v5532 = vunpack.c.h.b16 %v4754
    %v5533 = vunpack.c.l.b16 %v4755
    %v5534 = vunpack.c.h.b16 %v4755
    %v5535 = vunpack.c.l.b16 %v4756
    %v5536 = vunpack.c.h.b16 %v4756
    %v5537 = vunpack.c.l.b16 %v4757
    %v5538 = vunpack.c.h.b16 %v4757
    %v5539 = vunpack.c.l.b16 %v4758
    %v5540 = vunpack.c.h.b16 %v4758
    %v5541 = vunpack.c.l.b16 %v4759
    %v5542 = vunpack.c.h.b16 %v4759
    %v5543 = vunpack.c.l.b16 %v4760
    %v5544 = vunpack.c.h.b16 %v4760
    %v5545 = vunpack.c.l.b16 %v4761
    %v5546 = vunpack.c.h.b16 %v4761
    %v5547 = vunpack.c.l.b16 %v4762
    %v5548 = vunpack.c.h.b16 %v4762
    %v5549 = vunpack.c.l.b16 %v4763
    %v5550 = vunpack.c.h.b16 %v4763
    %v5551 = vunpack.c.l.b16 %v4764
    %v5552 = vunpack.c.h.b16 %v4764
    %v5553 = vunpack.c.l.b16 %v4765
    %v5554 = vunpack.c.h.b16 %v4765
    %v5555 = vunpack.c.l.b16 %v4766
    %v5556 = vunpack.c.h.b16 %v4766
    %v5557 = vunpack.c.l.b16 %v4767
    %v5558 = vunpack.c.h.b16 %v4767
    %v5559 = vunpack.c.l.b16 %v4768
    %v5560 = vunpack.c.h.b16 %v4768
    %v5561 = vunpack.c.l.b16 %v4769
    %v5562 = vunpack.c.h.b16 %v4769
    %v5563 = vunpack.c.l.b16 %v4770
    %v5564 = vunpack.c.h.b16 %v4770
    %v5565 = vunpack.c.l.b16 %v4771
    %v5566 = vunpack.c.h.b16 %v4771
    %v5567 = vunpack.c.l.b16 %v4772
    %v5568 = vunpack.c.h.b16 %v4772
    %v5569 = vunpack.c.l.b16 %v4773
    %v5570 = vunpack.c.h.b16 %v4773
    %v5571 = vunpack.c.l.b16 %v4774
    %v5572 = vunpack.c.h.b16 %v4774
    %v5573 = vunpack.c.l.b16 %v4775
    %v5574 = vunpack.c.h.b16 %v4775
    %v5575 = vunpack.c.l.b16 %v4776
    %v5576 = vunpack.c.h.b16 %v4776
    %v5577 = vunpack.c.l.b16 %v4777
    %v5578 = vunpack.c.h.b16 %v4777
    %v5579 = vunpack.c.l.b16 %v4778
    %v5580 = vunpack.c.h.b16 %v4778
    %v5581 = vunpack.c.l.b16 %v4779
    %v5582 = vunpack.c.h.b16 %v4779
    %v5583 = vunpack.c.l.b16 %v4780
    %v5584 = vunpack.c.h.b16 %v4780
    %v5585 = vunpack.c.l.b16 %v4781
    %v5586 = vunpack.c.h.b16 %v4781
    %v5587 = vunpack.c.l.b16 %v4782
    %v5588 = vunpack.c.h.b16 %v4782
    %v5589 = vunpack.c.l.b16 %v4783
    %v5590 = vunpack.c.h.b16 %v4783
    %v5591 = vunpack.c.l.b16 %v4784
    %v5592 = vunpack.c.h.b16 %v4784
    %v5593 = vunpack.c.l.b16 %v4785
    %v5594 = vunpack.c.h.b16 %v4785
    %v5595 = vunpack.c.l.b16 %v4786
    %v5596 = vunpack.c.h.b16 %v4786
    %v5597 = vunpack.c.l.b16 %v4787
    %v5598 = vunpack.c.h.b16 %v4787
    %v5599 = vunpack.c.l.b16 %v4788
    %v5600 = vunpack.c.h.b16 %v4788
    %v5601 = vunpack.c.l.b16 %v4789
    %v5602 = vunpack.c.h.b16 %v4789
    %v5603 = vunpack.c.l.b16 %v4790
    %v5604 = vunpack.c.h.b16 %v4790
    %v5605 = vunpack.c.l.b16 %v4791
    %v5606 = vunpack.c.h.b16 %v4791
    %v5607 = vunpack.c.l.b16 %v4792
    %v5608 = vunpack.c.h.b16 %v4792
    %v5609 = vunpack.c.l.b16 %v4793
    %v5610 = vunpack.c.h.b16 %v4793
    %v5611 = vunpack.c.l.b16 %v4794
    %v5612 = vunpack.c.h.b16 %v4794
    %v5613 = vunpack.c.l.b16 %v4795
    %v5614 = vunpack.c.h.b16 %v4795
    %v5615 = vunpack.c.l.b16 %v4796
    %v5616 = vunpack.c.h.b16 %v4796
    %v5617 = vunpack.c.l.b16 %v4797
    %v5618 = vunpack.c.h.b16 %v4797
    %v5619 = vunpack.c.l.b16 %v4798
    %v5620 = vunpack.c.h.b16 %v4798
    %v5621 = vunpack.c.l.b16 %v4799
    %v5622 = vunpack.c.h.b16 %v4799
    %v5623 = vunpack.c.l.b16 %v4800
    %v5624 = vunpack.c.h.b16 %v4800
    %v5625 = vunpack.c.l.b16 %v4801
    %v5626 = vunpack.c.h.b16 %v4801
    %v5627 = vunpack.c.l.b16 %v4802
    %v5628 = vunpack.c.h.b16 %v4802
    %v5629 = vunpack.c.l.b16 %v4803
    %v5630 = vunpack.c.h.b16 %v4803
    %v5631 = vunpack.c.l.b16 %v4804
    %v5632 = vunpack.c.h.b16 %v4804
    %v5633 = vunpack.c.l.b16 %v4805
    %v5634 = vunpack.c.h.b16 %v4805
    %v5635 = vunpack.c.l.b16 %v4806
    %v5636 = vunpack.c.h.b16 %v4806
    %v5637 = vunpack.c.l.b16 %v4807
    %v5638 = vunpack.c.h.b16 %v4807
    %v5639 = vunpack.c.l.b16 %v4808
    %v5640 = vunpack.c.h.b16 %v4808
    %v5641 = vunpack.c.l.b16 %v4809
    %v5642 = vunpack.c.h.b16 %v4809
    %v5643 = vunpack.c.l.b16 %v4810
    %v5644 = vunpack.c.h.b16 %v4810
    %v5645 = vunpack.c.l.b16 %v4811
    %v5646 = vunpack.c.h.b16 %v4811
    %v5647 = vunpack.c.l.b16 %v4812
    %v5648 = vunpack.c.h.b16 %v4812
    %v5649 = vunpack.c.l.b16 %v4813
    %v5650 = vunpack.c.h.b16 %v4813
    %v5651 = vunpack.c.l.b16 %v4814
    %v5652 = vunpack.c.h.b16 %v4814
    %v5653 = vunpack.c.l.b16 %v4815
    %v5654 = vunpack.c.h.b16 %v4815
    %v5655 = vunpack.c.l.b16 %v4816
    %v5656 = vunpack.c.h.b16 %v4816
    %v5657 = vunpack.c.l.b16 %v4817
    %v5658 = vunpack.c.h.b16 %v4817
    %v5659 = vunpack.c.l.b16 %v4818
    %v5660 = vunpack.c.h.b16 %v4818
    %v5661 = vunpack.c.l.b16 %v4819
    %v5662 = vunpack.c.h.b16 %v4819
    %v5663 = vunpack.c.l.b16 %v4820
    %v5664 = vunpack.c.h.b16 %v4820
    %v5665 = vunpack.c.l.b16 %v4821
    %v5666 = vunpack.c.h.b16 %v4821
    %v5667 = vunpack.c.l.b16 %v4822
    %v5668 = vunpack.c.h.b16 %v4822
    %v5669 = vunpack.c.l.b16 %v4823
    %v5670 = vunpack.c.h.b16 %v4823
    %v5671 = vunpack.c.l.b16 %v4824
    %v5672 = vunpack.c.h.b16 %v4824
    %v5673 = vunpack.c.l.b16 %v4825
    %v5674 = vunpack.c.h.b16 %v4825
    %v5675 = vunpack.c.l.b16 %v4826
    %v5676 = vunpack.c.h.b16 %v4826
    %v5677 = vunpack.c.l.b16 %v4827
    %v5678 = vunpack.c.h.b16 %v4827
    %v5679 = vunpack.c.l.b16 %v4828
    %v5680 = vunpack.c.h.b16 %v4828
    %v5681 = vunpack.c.l.b16 %v4829
    %v5682 = vunpack.c.h.b16 %v4829
    %v5683 = vunpack.c.l.b16 %v4830
    %v5684 = vunpack.c.h.b16 %v4830
    %v5685 = vunpack.c.l.b16 %v4831
    %v5686 = vunpack.c.h.b16 %v4831
    %v5687 = vunpack.c.l.b16 %v4832
    %v5688 = vunpack.c.h.b16 %v4832
    %v5689 = vunpack.c.l.b16 %v4833
    %v5690 = vunpack.c.h.b16 %v4833
    %v5691 = vunpack.c.l.b16 %v4834
    %v5692 = vunpack.c.h.b16 %v4834
    %v5693 = vunpack.c.l.b16 %v4835
    %v5694 = vunpack.c.h.b16 %v4835
    %v5695 = vunpack.c.l.b16 %v4836
    %v5696 = vunpack.c.h.b16 %v4836
    %v5697 = vunpack.c.l.b16 %v4837
    %v5698 = vunpack.c.h.b16 %v4837
    %v5699 = vunpack.c.l.b16 %v4838
    %v5700 = vunpack.c.h.b16 %v4838
    %v5701 = vunpack.c.l.b16 %v4839
    %v5702 = vunpack.c.h.b16 %v4839
    %v5703 = vunpack.c.l.b16 %v4840
    %v5704 = vunpack.c.h.b16 %v4840
    %v5705 = vunpack.c.l.b16 %v4841
    %v5706 = vunpack.c.h.b16 %v4841
    %v5707 = vunpack.c.l.b16 %v4842
    %v5708 = vunpack.c.h.b16 %v4842
    %v5709 = vunpack.c.l.b16 %v4843
    %v5710 = vunpack.c.h.b16 %v4843
    %v5711 = vunpack.c.l.b16 %v4844
    %v5712 = vunpack.c.h.b16 %v4844
    %v5713 = vunpack.c.l.b16 %v4845
    %v5714 = vunpack.c.h.b16 %v4845
    %v5715 = vunpack.c.l.b16 %v4846
    %v5716 = vunpack.c.h.b16 %v4846
    %v5717 = vunpack.c.l.b16 %v4847
    %v5718 = vunpack.c.h.b16 %v4847
    %v5719 = vunpack.c.l.b16 %v4848
    %v5720 = vunpack.c.h.b16 %v4848
    %v5721 = vunpack.c.l.b16 %v4849
    %v5722 = vunpack.c.h.b16 %v4849
    %v5723 = vunpack.c.l.b16 %v4850
    %v5724 = vunpack.c.h.b16 %v4850
    %v5725 = vunpack.c.l.b16 %v4851
    %v5726 = vunpack.c.h.b16 %v4851
    %v5727 = vunpack.c.l.b16 %v4852
    %v5728 = vunpack.c.h.b16 %v4852
    %v5729 = vunpack.c.l.b16 %v4853
    %v5730 = vunpack.c.h.b16 %v4853
    %v5731 = vunpack.c.l.b16 %v4854
    %v5732 = vunpack.c.h.b16 %v4854
    %v5733 = vunpack.c.l.b16 %v4855
    %v5734 = vunpack.c.h.b16 %v4855
    %v5735 = vunpack.c.l.b16 %v4856
    %v5736 = vunpack.c.h.b16 %v4856
    %v5737 = vunpack.c.l.b16 %v4857
    %v5738 = vunpack.c.h.b16 %v4857
    %v5739 = vunpack.c.l.b16 %v4858
    %v5740 = vunpack.c.h.b16 %v4858
    %v5741 = vunpack.c.l.b16 %v4859
    %v5742 = vunpack.c.h.b16 %v4859
    %v5743 = vunpack.c.l.b16 %v4860
    %v5744 = vunpack.c.h.b16 %v4860
    %v5745 = vunpack.c.l.b16 %v4861
    %v5746 = vunpack.c.h.b16 %v4861
    %v5747 = vunpack.c.l.b16 %v4862
    %v5748 = vunpack.c.h.b16 %v4862
    %v5749 = vunpack.c.l.b16 %v4863
    %v5750 = vunpack.c.h.b16 %v4863
    %v5751 = vunpack.c.l.b16 %v4864
    %v5752 = vunpack.c.h.b16 %v4864
    %v5753 = vunpack.c.l.b16 %v4865
    %v5754 = vunpack.c.h.b16 %v4865
    %v5755 = vunpack.c.l.b16 %v4866
    %v5756 = vunpack.c.h.b16 %v4866
    %v5757 = vunpack.c.l.b16 %v4867
    %v5758 = vunpack.c.h.b16 %v4867
    %v5759 = vunpack.c.l.b16 %v4868
    %v5760 = vunpack.c.h.b16 %v4868
    %v5761 = vunpack.c.l.b16 %v4869
    %v5762 = vunpack.c.h.b16 %v4869
    %v5763 = vunpack.c.l.b16 %v4870
    %v5764 = vunpack.c.h.b16 %v4870
    %v5765 = vunpack.c.l.b16 %v4871
    %v5766 = vunpack.c.h.b16 %v4871
    %v5767 = vunpack.c.l.b16 %v4872
    %v5768 = vunpack.c.h.b16 %v4872
    %v5769 = vpack.c.b16 %v5199, %v5193
    %v5770 = vpack.c.b16 %v5200, %v5194
    %v5771 = vpack.c.b16 %v5201, %v5195
    %v5772 = vpack.c.b16 %v5202, %v5196
    %v5773 = vpack.c.b16 %v5203, %v5197
    %v5774 = vpack.c.b16 %v5204, %v5198
    %v5775 = vpack.c.b16 %v5211, %v5205
    %v5776 = vpack.c.b16 %v5212, %v5206
    %v5777 = vpack.c.b16 %v5213, %v5207
    %v5778 = vpack.c.b16 %v5214, %v5208
    %v5779 = vpack.c.b16 %v5215, %v5209
    %v5780 = vpack.c.b16 %v5216, %v5210
    %v5781 = vpack.c.b16 %v5223, %v5217
    %v5782 = vpack.c.b16 %v5224, %v5218
    %v5783 = vpack.c.b16 %v5225, %v5219
    %v5784 = vpack.c.b16 %v5226, %v5220
    %v5785 = vpack.c.b16 %v5227, %v5221
    %v5786 = vpack.c.b16 %v5228, %v5222
    %v5787 = vpack.c.b16 %v5235, %v5229
    %v5788 = vpack.c.b16 %v5236, %v5230
    %v5789 = vpack.c.b16 %v5237, %v5231
    %v5790 = vpack.c.b16 %v5238, %v5232
    %v5791 = vpack.c.b16 %v5239, %v5233
    %v5792 = vpack.c.b16 %v5240, %v5234
    %v5793 = vpack.c.b16 %v5247, %v5241
    %v5794 = vpack.c.b16 %v5248, %v5242
    %v5795 = vpack.c.b16 %v5249, %v5243
    %v5796 = vpack.c.b16 %v5250, %v5244
    %v5797 = vpack.c.b16 %v5251, %v5245
    %v5798 = vpack.c.b16 %v5252, %v5246
    %v5799 = vpack.c.b16 %v5259, %v5253
    %v5800 = vpack.c.b16 %v5260, %v5254
    %v5801 = vpack.c.b16 %v5261, %v5255
    %v5802 = vpack.c.b16 %v5262, %v5256
    %v5803 = vpack.c.b16 %v5263, %v5257
    %v5804 = vpack.c.b16 %v5264, %v5258
    %v5805 = vpack.c.b16 %v5271, %v5265
    %v5806 = vpack.c.b16 %v5272, %v5266
    %v5807 = vpack.c.b16 %v5273, %v5267
    %v5808 = vpack.c.b16 %v5274, %v5268
    %v5809 = vpack.c.b16 %v5275, %v5269
    %v5810 = vpack.c.b16 %v5276, %v5270
    %v5811 = vpack.c.b16 %v5283, %v5277
    %v5812 = vpack.c.b16 %v5284, %v5278
    %v5813 = vpack.c.b16 %v5285, %v5279
    %v5814 = vpack.c.b16 %v5286, %v5280
    %v5815 = vpack.c.b16 %v5287, %v5281
    %v5816 = vpack.c.b16 %v5288, %v5282
    %v5817 = vpack.c.b16 %v5295, %v5289
    %v5818 = vpack.c.b16 %v5296, %v5290
    %v5819 = vpack.c.b16 %v5297, %v5291
    %v5820 = vpack.c.b16 %v5298, %v5292
    %v5821 = vpack.c.b16 %v5299, %v5293
    %v5822 = vpack.c.b16 %v5300, %v5294
    %v5823 = vpack.c.b16 %v5307, %v5301
    %v5824 = vpack.c.b16 %v5308, %v5302
    %v5825 = vpack.c.b16 %v5309, %v5303
    %v5826 = vpack.c.b16 %v5310, %v5304
    %v5827 = vpack.c.b16 %v5311, %v5305
    %v5828 = vpack.c.b16 %v5312, %v5306
    %v5829 = vpack.c.b16 %v5319, %v5313
    %v5830 = vpack.c.b16 %v5320, %v5314
    %v5831 = vpack.c.b16 %v5321, %v5315
    %v5832 = vpack.c.b16 %v5322, %v5316
    %v5833 = vpack.c.b16 %v5323, %v5317
    %v5834 = vpack.c.b16 %v5324, %v5318
    %v5835 = vpack.c.b16 %v5331, %v5325
    %v5836 = vpack.c.b16 %v5332, %v5326
    %v5837 = vpack.c.b16 %v5333, %v5327
    %v5838 = vpack.c.b16 %v5334, %v5328
    %v5839 = vpack.c.b16 %v5335, %v5329
    %v5840 = vpack.c.b16 %v5336, %v5330
    %v5841 = vpack.c.b16 %v5343, %v5337
    %v5842 = vpack.c.b16 %v5344, %v5338
    %v5843 = vpack.c.b16 %v5345, %v5339
    %v5844 = vpack.c.b16 %v5346, %v5340
    %v5845 = vpack.c.b16 %v5347, %v5341
    %v5846 = vpack.c.b16 %v5348, %v5342
    %v5847 = vpack.c.b16 %v5355, %v5349
    %v5848 = vpack.c.b16 %v5356, %v5350
    %v5849 = vpack.c.b16 %v5357, %v5351
    %v5850 = vpack.c.b16 %v5358, %v5352
    %v5851 = vpack.c.b16 %v5359, %v5353
    %v5852 = vpack.c.b16 %v5360, %v5354
    %v5853 = vpack.c.b16 %v5367, %v5361
    %v5854 = vpack.c.b16 %v5368, %v5362
    %v5855 = vpack.c.b16 %v5369, %v5363
    %v5856 = vpack.c.b16 %v5370, %v5364
    %v5857 = vpack.c.b16 %v5371, %v5365
    %v5858 = vpack.c.b16 %v5372, %v5366
    %v5859 = vpack.c.b16 %v5379, %v5373
    %v5860 = vpack.c.b16 %v5380, %v5374
    %v5861 = vpack.c.b16 %v5381, %v5375
    %v5862 = vpack.c.b16 %v5382, %v5376
    %v5863 = vpack.c.b16 %v5383, %v5377
    %v5864 = vpack.c.b16 %v5384, %v5378
    %v5865 = vpack.c.b16 %v5391, %v5385
    %v5866 = vpack.c.b16 %v5392, %v5386
    %v5867 = vpack.c.b16 %v5393, %v5387
    %v5868 = vpack.c.b16 %v5394, %v5388
    %v5869 = vpack.c.b16 %v5395, %v5389
    %v5870 = vpack.c.b16 %v5396, %v5390
    %v5871 = vpack.c.b16 %v5403, %v5397
    %v5872 = vpack.c.b16 %v5404, %v5398
    %v5873 = vpack.c.b16 %v5405, %v5399
    %v5874 = vpack.c.b16 %v5406, %v5400
    %v5875 = vpack.c.b16 %v5407, %v5401
    %v5876 = vpack.c.b16 %v5408, %v5402
    %v5877 = vpack.c.b16 %v5415, %v5409
    %v5878 = vpack.c.b16 %v5416, %v5410
    %v5879 = vpack.c.b16 %v5417, %v5411
    %v5880 = vpack.c.b16 %v5418, %v5412
    %v5881 = vpack.c.b16 %v5419, %v5413
    %v5882 = vpack.c.b16 %v5420, %v5414
    %v5883 = vpack.c.b16 %v5427, %v5421
    %v5884 = vpack.c.b16 %v5428, %v5422
    %v5885 = vpack.c.b16 %v5429, %v5423
    %v5886 = vpack.c.b16 %v5430, %v5424
    %v5887 = vpack.c.b16 %v5431, %v5425
    %v5888 = vpack.c.b16 %v5432, %v5426
    %v5889 = vpack.c.b16 %v5439, %v5433
    %v5890 = vpack.c.b16 %v5440, %v5434
    %v5891 = vpack.c.b16 %v5441, %v5435
    %v5892 = vpack.c.b16 %v5442, %v5436
    %v5893 = vpack.c.b16 %v5443, %v5437
    %v5894 = vpack.c.b16 %v5444, %v5438
    %v5895 = vpack.c.b16 %v5451, %v5445
    %v5896 = vpack.c.b16 %v5452, %v5446
    %v5897 = vpack.c.b16 %v5453, %v5447
    %v5898 = vpack.c.b16 %v5454, %v5448
    %v5899 = vpack.c.b16 %v5455, %v5449
    %v5900 = vpack.c.b16 %v5456, %v5450
    %v5901 = vpack.c.b16 %v5463, %v5457
    %v5902 = vpack.c.b16 %v5464, %v5458
    %v5903 = vpack.c.b16 %v5465, %v5459
    %v5904 = vpack.c.b16 %v5466, %v5460
    %v5905 = vpack.c.b16 %v5467, %v5461
    %v5906 = vpack.c.b16 %v5468, %v5462
    %v5907 = vpack.c.b16 %v5475, %v5469
    %v5908 = vpack.c.b16 %v5476, %v5470
    %v5909 = vpack.c.b16 %v5477, %v5471
    %v5910 = vpack.c.b16 %v5478, %v5472
    %v5911 = vpack.c.b16 %v5479, %v5473
    %v5912 = vpack.c.b16 %v5480, %v5474
    %v5913 = vpack.c.b16 %v5487, %v5481
    %v5914 = vpack.c.b16 %v5488, %v5482
    %v5915 = vpack.c.b16 %v5489, %v5483
    %v5916 = vpack.c.b16 %v5490, %v5484
    %v5917 = vpack.c.b16 %v5491, %v5485
    %v5918 = vpack.c.b16 %v5492, %v5486
    %v5919 = vpack.c.b16 %v5499, %v5493
    %v5920 = vpack.c.b16 %v5500, %v5494
    %v5921 = vpack.c.b16 %v5501, %v5495
    %v5922 = vpack.c.b16 %v5502, %v5496
    %v5923 = vpack.c.b16 %v5503, %v5497
    %v5924 = vpack.c.b16 %v5504, %v5498
    %v5925 = vpack.c.b16 %v5511, %v5505
    %v5926 = vpack.c.b16 %v5512, %v5506
    %v5927 = vpack.c.b16 %v5513, %v5507
    %v5928 = vpack.c.b16 %v5514, %v5508
    %v5929 = vpack.c.b16 %v5515, %v5509
    %v5930 = vpack.c.b16 %v5516, %v5510
    %v5931 = vpack.c.b16 %v5523, %v5517
    %v5932 = vpack.c.b16 %v5524, %v5518
    %v5933 = vpack.c.b16 %v5525, %v5519
    %v5934 = vpack.c.b16 %v5526, %v5520
    %v5935 = vpack.c.b16 %v5527, %v5521
    %v5936 = vpack.c.b16 %v5528, %v5522
    %v5937 = vpack.c.b16 %v5535, %v5529
    %v5938 = vpack.c.b16 %v5536, %v5530
    %v5939 = vpack.c.b16 %v5537, %v5531
    %v5940 = vpack.c.b16 %v5538, %v5532
    %v5941 = vpack.c.b16 %v5539, %v5533
    %v5942 = vpack.c.b16 %v5540, %v5534
    %v5943 = vpack.c.b16 %v5547, %v5541
    %v5944 = vpack.c.b16 %v5548, %v5542
    %v5945 = vpack.c.b16 %v5549, %v5543
    %v5946 = vpack.c.b16 %v5550, %v5544
    %v5947 = vpack.c.b16 %v5551, %v5545
    %v5948 = vpack.c.b16 %v5552, %v5546
    %v5949 = vpack.c.b16 %v5559, %v5553
    %v5950 = vpack.c.b16 %v5560, %v5554
    %v5951 = vpack.c.b16 %v5561, %v5555
    %v5952 = vpack.c.b16 %v5562, %v5556
    %v5953 = vpack.c.b16 %v5563, %v5557
    %v5954 = vpack.c.b16 %v5564, %v5558
    %v5955 = vpack.c.b16 %v5571, %v5565
    %v5956 = vpack.c.b16 %v5572, %v5566
    %v5957 = vpack.c.b16 %v5573, %v5567
    %v5958 = vpack.c.b16 %v5574, %v5568
    %v5959 = vpack.c.b16 %v5575, %v5569
    %v5960 = vpack.c.b16 %v5576, %v5570
    %v5961 = vpack.c.b16 %v5583, %v5577
    %v5962 = vpack.c.b16 %v5584, %v5578
    %v5963 = vpack.c.b16 %v5585, %v5579
    %v5964 = vpack.c.b16 %v5586, %v5580
    %v5965 = vpack.c.b16 %v5587, %v5581
    %v5966 = vpack.c.b16 %v5588, %v5582
    %v5967 = vpack.c.b16 %v5595, %v5589
    %v5968 = vpack.c.b16 %v5596, %v5590
    %v5969 = vpack.c.b16 %v5597, %v5591
    %v5970 = vpack.c.b16 %v5598, %v5592
    %v5971 = vpack.c.b16 %v5599, %v5593
    %v5972 = vpack.c.b16 %v5600, %v5594
    %v5973 = vpack.c.b16 %v5607, %v5601
    %v5974 = vpack.c.b16 %v5608, %v5602
    %v5975 = vpack.c.b16 %v5609, %v5603
    %v5976 = vpack.c.b16 %v5610, %v5604
    %v5977 = vpack.c.b16 %v5611, %v5605
    %v5978 = vpack.c.b16 %v5612, %v5606
    %v5979 = vpack.c.b16 %v5619, %v5613
    %v5980 = vpack.c.b16 %v5620, %v5614
    %v5981 = vpack.c.b16 %v5621, %v5615
    %v5982 = vpack.c.b16 %v5622, %v5616
    %v5983 = vpack.c.b16 %v5623, %v5617
    %v5984 = vpack.c.b16 %v5624, %v5618
    %v5985 = vpack.c.b16 %v5631, %v5625
    %v5986 = vpack.c.b16 %v5632, %v5626
    %v5987 = vpack.c.b16 %v5633, %v5627
    %v5988 = vpack.c.b16 %v5634, %v5628
    %v5989 = vpack.c.b16 %v5635, %v5629
    %v5990 = vpack.c.b16 %v5636, %v5630
    %v5991 = vpack.c.b16 %v5643, %v5637
    %v5992 = vpack.c.b16 %v5644, %v5638
    %v5993 = vpack.c.b16 %v5645, %v5639
    %v5994 = vpack.c.b16 %v5646, %v5640
    %v5995 = vpack.c.b16 %v5647, %v5641
    %v5996 = vpack.c.b16 %v5648, %v5642
    %v5997 = vpack.c.b16 %v5655, %v5649
    %v5998 = vpack.c.b16 %v5656, %v5650
    %v5999 = vpack.c.b16 %v5657, %v5651
    %v6000 = vpack.c.b16 %v5658, %v5652
    %v6001 = vpack.c.b16 %v5659, %v5653
    %v6002 = vpack.c.b16 %v5660, %v5654
    %v6003 = vpack.c.b16 %v5667, %v5661
    %v6004 = vpack.c.b16 %v5668, %v5662
    %v6005 = vpack.c.b16 %v5669, %v5663
    %v6006 = vpack.c.b16 %v5670, %v5664
    %v6007 = vpack.c.b16 %v5671, %v5665
    %v6008 = vpack.c.b16 %v5672, %v5666
    %v6009 = vpack.c.b16 %v5679, %v5673
    %v6010 = vpack.c.b16 %v5680, %v5674
    %v6011 = vpack.c.b16 %v5681, %v5675
    %v6012 = vpack.c.b16 %v5682, %v5676
    %v6013 = vpack.c.b16 %v5683, %v5677
    %v6014 = vpack.c.b16 %v5684, %v5678
    %v6015 = vpack.c.b16 %v5691, %v5685
    %v6016 = vpack.c.b16 %v5692, %v5686
    %v6017 = vpack.c.b16 %v5693, %v5687
    %v6018 = vpack.c.b16 %v5694, %v5688
    %v6019 = vpack.c.b16 %v5695, %v5689
    %v6020 = vpack.c.b16 %v5696, %v5690
    %v6021 = vpack.c.b16 %v5703, %v5697
    %v6022 = vpack.c.b16 %v5704, %v5698
    %v6023 = vpack.c.b16 %v5705, %v5699
    %v6024 = vpack.c.b16 %v5706, %v5700
    %v6025 = vpack.c.b16 %v5707, %v5701
    %v6026 = vpack.c.b16 %v5708, %v5702
    %v6027 = vpack.c.b16 %v5715, %v5709
    %v6028 = vpack.c.b16 %v5716, %v5710
    %v6029 = vpack.c.b16 %v5717, %v5711
    %v6030 = vpack.c.b16 %v5718, %v5712
    %v6031 = vpack.c.b16 %v5719, %v5713
    %v6032 = vpack.c.b16 %v5720, %v5714
    %v6033 = vpack.c.b16 %v5727, %v5721
    %v6034 = vpack.c.b16 %v5728, %v5722
    %v6035 = vpack.c.b16 %v5729, %v5723
    %v6036 = vpack.c.b16 %v5730, %v5724
    %v6037 = vpack.c.b16 %v5731, %v5725
    %v6038 = vpack.c.b16 %v5732, %v5726
    %v6039 = vpack.c.b16 %v5739, %v5733
    %v6040 = vpack.c.b16 %v5740, %v5734
    %v6041 = vpack.c.b16 %v5741, %v5735
    %v6042 = vpack.c.b16 %v5742, %v5736
    %v6043 = vpack.c.b16 %v5743, %v5737
    %v6044 = vpack.c.b16 %v5744, %v5738
    %v6045 = vpack.c.b16 %v5751, %v5745
    %v6046 = vpack.c.b16 %v5752, %v5746
    %v6047 = vpack.c.b16 %v5753, %v5747
    %v6048 = vpack.c.b16 %v5754, %v5748
    %v6049 = vpack.c.b16 %v5755, %v5749
    %v6050 = vpack.c.b16 %v5756, %v5750
    %v6051 = vpack.c.b16 %v5763, %v5757
    %v6052 = vpack.c.b16 %v5764, %v5758
    %v6053 = vpack.c.b16 %v5765, %v5759
    %v6054 = vpack.c.b16 %v5766, %v5760
    %v6055 = vpack.c.b16 %v5767, %v5761
    %v6056 = vpack.c.b16 %v5768, %v5762
    %6345 = vmatprep.subr.bf16.mxu0 %v5770
    %6346 = vmatpush1.bf16.msra.mxu0 %v5769
    %6347 = vmatprep.subr.bf16.mxu0 %v5776
    %6348 = vmatpush1.bf16.msra.mxu0 %v5775
    %6349 = vmatprep.subr.bf16.mxu0 %v5782
    %6350 = vmatpush1.bf16.msra.mxu0 %v5781
    %6351 = vmatprep.subr.bf16.mxu0 %v5788
    %6352 = vmatpush1.bf16.msra.mxu0 %v5787
    %6353 = vmatprep.subr.bf16.mxu0 %v5794
    %6354 = vmatpush1.bf16.msra.mxu0 %v5793
    %6355 = vmatprep.subr.bf16.mxu0 %v5800
    %6356 = vmatpush1.bf16.msra.mxu0 %v5799
    %6357 = vmatprep.subr.bf16.mxu0 %v5806
    %6358 = vmatpush1.bf16.msra.mxu0 %v5805
    %6359 = vmatprep.subr.bf16.mxu0 %v5812
    %6360 = vmatpush1.bf16.msra.mxu0 %v5811
    %6361 = vmatprep.subr.bf16.mxu0 %v5818
    %6362 = vmatpush1.bf16.msra.mxu0 %v5817
    %6363 = vmatprep.subr.bf16.mxu0 %v5824
    %6364 = vmatpush1.bf16.msra.mxu0 %v5823
    %6365 = vmatprep.subr.bf16.mxu0 %v5830
    %6366 = vmatpush1.bf16.msra.mxu0 %v5829
    %6367 = vmatprep.subr.bf16.mxu0 %v5836
    %6368 = vmatpush1.bf16.msra.mxu0 %v5835
    %6369 = vmatprep.subr.bf16.mxu0 %v5842
    %6370 = vmatpush1.bf16.msra.mxu0 %v5841
    %6371 = vmatprep.subr.bf16.mxu0 %v5848
    %6372 = vmatpush1.bf16.msra.mxu0 %v5847
    %6373 = vmatprep.subr.bf16.mxu0 %v5854
    %6374 = vmatpush1.bf16.msra.mxu0 %v5853
    %6375 = vmatprep.subr.bf16.mxu0 %v5860
    %6376 = vmatpush1.bf16.msra.mxu0 %v5859
    %6377 = vmatprep.mubr.bf16.mxu0 %v4580
    %6378 = vmatmul.mubr.bf16.gmra.mrb[0].mxu0 %v4579
    %v6379 = vpop.f32.mrb[0].mxu0
    %v6380 = vadd.f32 %v4878, %v6379
    %v6381 = vpop.f32.mrb[0].mxu0
    %v6382 = vadd.f32 %v4882, %v6381
    %v6383 = vpop.f32.mrb[0].mxu0
    %v6384 = vadd.f32 %v4878, %v6383
    %v6385 = vpop.f32.mrb[0].mxu0
    %v6386 = vadd.f32 %v4882, %v6385
    %6387 = vdwg.mxu0
    %6388 = vmatprep.subr.bf16.mxu0 %v5866
    %6389 = vmatpush1.bf16.msra.mxu0 %v5865
    %6390 = vmatprep.subr.bf16.mxu0 %v5872
    %6391 = vmatpush1.bf16.msra.mxu0 %v5871
    %6392 = vmatprep.subr.bf16.mxu0 %v5878
    %6393 = vmatpush1.bf16.msra.mxu0 %v5877
    %6394 = vmatprep.subr.bf16.mxu0 %v5884
    %6395 = vmatpush1.bf16.msra.mxu0 %v5883
    %6396 = vmatprep.subr.bf16.mxu0 %v5890
    %6397 = vmatpush1.bf16.msra.mxu0 %v5889
    %6398 = vmatprep.subr.bf16.mxu0 %v5896
    %6399 = vmatpush1.bf16.msra.mxu0 %v5895
    %6400 = vmatprep.subr.bf16.mxu0 %v5902
    %6401 = vmatpush1.bf16.msra.mxu0 %v5901
    %6402 = vmatprep.subr.bf16.mxu0 %v5908
    %6403 = vmatpush1.bf16.msra.mxu0 %v5907
    %6404 = vmatprep.subr.bf16.mxu0 %v5914
    %6405 = vmatpush1.bf16.msra.mxu0 %v5913
    %6406 = vmatprep.subr.bf16.mxu0 %v5920
    %6407 = vmatpush1.bf16.msra.mxu0 %v5919
    %6408 = vmatprep.subr.bf16.mxu0 %v5926
    %6409 = vmatpush1.bf16.msra.mxu0 %v5925
    %6410 = vmatprep.subr.bf16.mxu0 %v5932
    %6411 = vmatpush1.bf16.msra.mxu0 %v5931
    %6412 = vmatprep.subr.bf16.mxu0 %v5938
    %6413 = vmatpush1.bf16.msra.mxu0 %v5937
    %6414 = vmatprep.subr.bf16.mxu0 %v5944
    %6415 = vmatpush1.bf16.msra.mxu0 %v5943
    %6416 = vmatprep.subr.bf16.mxu0 %v5950
    %6417 = vmatpush1.bf16.msra.mxu0 %v5949
    %6418 = vmatprep.subr.bf16.mxu0 %v5956
    %6419 = vmatpush1.bf16.msra.mxu0 %v5955
    %6420 = vmatprep.mubr.bf16.mxu0 %v4582
    %6421 = vmatmul.mubr.bf16.gmra.mrb[0].mxu0 %v4581
    %v6422 = vpop.f32.mrb[0].mxu0
    %v6423 = vadd.f32 %v6380, %v6422
    %v6424 = vpop.f32.mrb[0].mxu0
    %v6425 = vadd.f32 %v6382, %v6424
    %v6426 = vpop.f32.mrb[0].mxu0
    %v6427 = vadd.f32 %v6384, %v6426
    %v6428 = vpop.f32.mrb[0].mxu0
    %v6429 = vadd.f32 %v6386, %v6428
    %6430 = vdwg.mxu0
    %6431 = vmatprep.subr.bf16.mxu0 %v5962
    %6432 = vmatpush1.bf16.msra.mxu0 %v5961
    %6433 = vmatprep.subr.bf16.mxu0 %v5968
    %6434 = vmatpush1.bf16.msra.mxu0 %v5967
    %6435 = vmatprep.subr.bf16.mxu0 %v5974
    %6436 = vmatpush1.bf16.msra.mxu0 %v5973
    %6437 = vmatprep.subr.bf16.mxu0 %v5980
    %6438 = vmatpush1.bf16.msra.mxu0 %v5979
    %6439 = vmatprep.subr.bf16.mxu0 %v5986
    %6440 = vmatpush1.bf16.msra.mxu0 %v5985
    %6441 = vmatprep.subr.bf16.mxu0 %v5992
    %6442 = vmatpush1.bf16.msra.mxu0 %v5991
    %6443 = vmatprep.subr.bf16.mxu0 %v5998
    %6444 = vmatpush1.bf16.msra.mxu0 %v5997
    %6445 = vmatprep.subr.bf16.mxu0 %v6004
    %6446 = vmatpush1.bf16.msra.mxu0 %v6003
    %6447 = vmatprep.subr.bf16.mxu0 %v6010
    %6448 = vmatpush1.bf16.msra.mxu0 %v6009
    %6449 = vmatprep.subr.bf16.mxu0 %v6016
    %6450 = vmatpush1.bf16.msra.mxu0 %v6015
    %6451 = vmatprep.subr.bf16.mxu0 %v6022
    %6452 = vmatpush1.bf16.msra.mxu0 %v6021
    %6453 = vmatprep.subr.bf16.mxu0 %v6028
    %6454 = vmatpush1.bf16.msra.mxu0 %v6027
    %6455 = vmatprep.subr.bf16.mxu0 %v6034
    %6456 = vmatpush1.bf16.msra.mxu0 %v6033
    %6457 = vmatprep.subr.bf16.mxu0 %v6040
    %6458 = vmatpush1.bf16.msra.mxu0 %v6039
    %6459 = vmatprep.subr.bf16.mxu0 %v6046
    %6460 = vmatpush1.bf16.msra.mxu0 %v6045
    %6461 = vmatprep.subr.bf16.mxu0 %v6052
    %6462 = vmatpush1.bf16.msra.mxu0 %v6051
    %6463 = vmatprep.mubr.bf16.mxu0 %v4584
    %6464 = vmatmul.mubr.bf16.gmra.mrb[0].mxu0 %v4583
    %v6465 = vpop.f32.mrb[0].mxu0
    %v6466 = vadd.f32 %v6423, %v6465
    %v6467 = vpop.f32.mrb[0].mxu0
    %v6468 = vadd.f32 %v6425, %v6467
    %v6469 = vpop.f32.mrb[0].mxu0
    %v6470 = vadd.f32 %v6427, %v6469
    %v6471 = vpop.f32.mrb[0].mxu0
    %v6472 = vadd.f32 %v6429, %v6471
    %6473 = vdwg.mxu0
    %6474 = vmatprep.subr.bf16.mxu0 %v5772
    %6475 = vmatpush1.bf16.msra.mxu0 %v5771
    %6476 = vmatprep.subr.bf16.mxu0 %v5778
    %6477 = vmatpush1.bf16.msra.mxu0 %v5777
    %6478 = vmatprep.subr.bf16.mxu0 %v5784
    %6479 = vmatpush1.bf16.msra.mxu0 %v5783
    %6480 = vmatprep.subr.bf16.mxu0 %v5790
    %6481 = vmatpush1.bf16.msra.mxu0 %v5789
    %6482 = vmatprep.subr.bf16.mxu0 %v5796
    %6483 = vmatpush1.bf16.msra.mxu0 %v5795
    %6484 = vmatprep.subr.bf16.mxu0 %v5802
    %6485 = vmatpush1.bf16.msra.mxu0 %v5801
    %6486 = vmatprep.subr.bf16.mxu0 %v5808
    %6487 = vmatpush1.bf16.msra.mxu0 %v5807
    %6488 = vmatprep.subr.bf16.mxu0 %v5814
    %6489 = vmatpush1.bf16.msra.mxu0 %v5813
    %6490 = vmatprep.subr.bf16.mxu0 %v5820
    %6491 = vmatpush1.bf16.msra.mxu0 %v5819
    %6492 = vmatprep.subr.bf16.mxu0 %v5826
    %6493 = vmatpush1.bf16.msra.mxu0 %v5825
    %6494 = vmatprep.subr.bf16.mxu0 %v5832
    %6495 = vmatpush1.bf16.msra.mxu0 %v5831
    %6496 = vmatprep.subr.bf16.mxu0 %v5838
    %6497 = vmatpush1.bf16.msra.mxu0 %v5837
    %6498 = vmatprep.subr.bf16.mxu0 %v5844
    %6499 = vmatpush1.bf16.msra.mxu0 %v5843
    %6500 = vmatprep.subr.bf16.mxu0 %v5850
    %6501 = vmatpush1.bf16.msra.mxu0 %v5849
    %6502 = vmatprep.subr.bf16.mxu0 %v5856
    %6503 = vmatpush1.bf16.msra.mxu0 %v5855
    %6504 = vmatprep.subr.bf16.mxu0 %v5862
    %6505 = vmatpush1.bf16.msra.mxu0 %v5861
    %6506 = vmatprep.mubr.bf16.mxu0 %v4580
    %6507 = vmatmul.mubr.bf16.gmra.mrb[0].mxu0 %v4579
    %v6508 = vpop.f32.mrb[0].mxu0
    %v6509 = vadd.f32 %v4886, %v6508
    %v6510 = vpop.f32.mrb[0].mxu0
    %v6511 = vadd.f32 %v4890, %v6510
    %v6512 = vpop.f32.mrb[0].mxu0
    %v6513 = vadd.f32 %v4886, %v6512
    %v6514 = vpop.f32.mrb[0].mxu0
    %v6515 = vadd.f32 %v4890, %v6514
    %6516 = vdwg.mxu0
    %6517 = vmatprep.subr.bf16.mxu0 %v5868
    %6518 = vmatpush1.bf16.msra.mxu0 %v5867
    %6519 = vmatprep.subr.bf16.mxu0 %v5874
    %6520 = vmatpush1.bf16.msra.mxu0 %v5873
    %6521 = vmatprep.subr.bf16.mxu0 %v5880
    %6522 = vmatpush1.bf16.msra.mxu0 %v5879
    %6523 = vmatprep.subr.bf16.mxu0 %v5886
    %6524 = vmatpush1.bf16.msra.mxu0 %v5885
    %6525 = vmatprep.subr.bf16.mxu0 %v5892
    %6526 = vmatpush1.bf16.msra.mxu0 %v5891
    %6527 = vmatprep.subr.bf16.mxu0 %v5898
    %6528 = vmatpush1.bf16.msra.mxu0 %v5897
    %6529 = vmatprep.subr.bf16.mxu0 %v5904
    %6530 = vmatpush1.bf16.msra.mxu0 %v5903
    %6531 = vmatprep.subr.bf16.mxu0 %v5910
    %6532 = vmatpush1.bf16.msra.mxu0 %v5909
    %6533 = vmatprep.subr.bf16.mxu0 %v5916
    %6534 = vmatpush1.bf16.msra.mxu0 %v5915
    %6535 = vmatprep.subr.bf16.mxu0 %v5922
    %6536 = vmatpush1.bf16.msra.mxu0 %v5921
    %6537 = vmatprep.subr.bf16.mxu0 %v5928
    %6538 = vmatpush1.bf16.msra.mxu0 %v5927
    %6539 = vmatprep.subr.bf16.mxu0 %v5934
    %6540 = vmatpush1.bf16.msra.mxu0 %v5933
    %6541 = vmatprep.subr.bf16.mxu0 %v5940
    %6542 = vmatpush1.bf16.msra.mxu0 %v5939
    %6543 = vmatprep.subr.bf16.mxu0 %v5946
    %6544 = vmatpush1.bf16.msra.mxu0 %v5945
    %6545 = vmatprep.subr.bf16.mxu0 %v5952
    %6546 = vmatpush1.bf16.msra.mxu0 %v5951
    %6547 = vmatprep.subr.bf16.mxu0 %v5958
    %6548 = vmatpush1.bf16.msra.mxu0 %v5957
    %6549 = vmatprep.mubr.bf16.mxu0 %v4582
    %6550 = vmatmul.mubr.bf16.gmra.mrb[0].mxu0 %v4581
    %v6551 = vpop.f32.mrb[0].mxu0
    %v6552 = vadd.f32 %v6509, %v6551
    %v6553 = vpop.f32.mrb[0].mxu0
    %v6554 = vadd.f32 %v6511, %v6553
    %v6555 = vpop.f32.mrb[0].mxu0
    %v6556 = vadd.f32 %v6513, %v6555
    %v6557 = vpop.f32.mrb[0].mxu0
    %v6558 = vadd.f32 %v6515, %v6557
    %6559 = vdwg.mxu0
    %6560 = vmatprep.subr.bf16.mxu0 %v5964
    %6561 = vmatpush1.bf16.msra.mxu0 %v5963
    %6562 = vmatprep.subr.bf16.mxu0 %v5970
    %6563 = vmatpush1.bf16.msra.mxu0 %v5969
    %6564 = vmatprep.subr.bf16.mxu0 %v5976
    %6565 = vmatpush1.bf16.msra.mxu0 %v5975
    %6566 = vmatprep.subr.bf16.mxu0 %v5982
    %6567 = vmatpush1.bf16.msra.mxu0 %v5981
    %6568 = vmatprep.subr.bf16.mxu0 %v5988
    %6569 = vmatpush1.bf16.msra.mxu0 %v5987
    %6570 = vmatprep.subr.bf16.mxu0 %v5994
    %6571 = vmatpush1.bf16.msra.mxu0 %v5993
    %6572 = vmatprep.subr.bf16.mxu0 %v6000
    %6573 = vmatpush1.bf16.msra.mxu0 %v5999
    %6574 = vmatprep.subr.bf16.mxu0 %v6006
    %6575 = vmatpush1.bf16.msra.mxu0 %v6005
    %6576 = vmatprep.subr.bf16.mxu0 %v6012
    %6577 = vmatpush1.bf16.msra.mxu0 %v6011
    %6578 = vmatprep.subr.bf16.mxu0 %v6018
    %6579 = vmatpush1.bf16.msra.mxu0 %v6017
    %6580 = vmatprep.subr.bf16.mxu0 %v6024
    %6581 = vmatpush1.bf16.msra.mxu0 %v6023
    %6582 = vmatprep.subr.bf16.mxu0 %v6030
    %6583 = vmatpush1.bf16.msra.mxu0 %v6029
    %6584 = vmatprep.subr.bf16.mxu0 %v6036
    %6585 = vmatpush1.bf16.msra.mxu0 %v6035
    %6586 = vmatprep.subr.bf16.mxu0 %v6042
    %6587 = vmatpush1.bf16.msra.mxu0 %v6041
    %6588 = vmatprep.subr.bf16.mxu0 %v6048
    %6589 = vmatpush1.bf16.msra.mxu0 %v6047
    %6590 = vmatprep.subr.bf16.mxu0 %v6054
    %6591 = vmatpush1.bf16.msra.mxu0 %v6053
    %6592 = vmatprep.mubr.bf16.mxu0 %v4584
    %6593 = vmatmul.mubr.bf16.gmra.mrb[0].mxu0 %v4583
    %v6594 = vpop.f32.mrb[0].mxu0
    %v6595 = vadd.f32 %v6552, %v6594
    %v6596 = vpop.f32.mrb[0].mxu0
    %v6597 = vadd.f32 %v6554, %v6596
    %v6598 = vpop.f32.mrb[0].mxu0
    %v6599 = vadd.f32 %v6556, %v6598
    %v6600 = vpop.f32.mrb[0].mxu0
    %v6601 = vadd.f32 %v6558, %v6600
    %6602 = vdwg.mxu0
    %6603 = vmatprep.subr.bf16.mxu0 %v5774
    %6604 = vmatpush1.bf16.msra.mxu0 %v5773
    %6605 = vmatprep.subr.bf16.mxu0 %v5780
    %6606 = vmatpush1.bf16.msra.mxu0 %v5779
    %6607 = vmatprep.subr.bf16.mxu0 %v5786
    %6608 = vmatpush1.bf16.msra.mxu0 %v5785
    %6609 = vmatprep.subr.bf16.mxu0 %v5792
    %6610 = vmatpush1.bf16.msra.mxu0 %v5791
    %6611 = vmatprep.subr.bf16.mxu0 %v5798
    %6612 = vmatpush1.bf16.msra.mxu0 %v5797
    %6613 = vmatprep.subr.bf16.mxu0 %v5804
    %6614 = vmatpush1.bf16.msra.mxu0 %v5803
    %6615 = vmatprep.subr.bf16.mxu0 %v5810
    %6616 = vmatpush1.bf16.msra.mxu0 %v5809
    %6617 = vmatprep.subr.bf16.mxu0 %v5816
    %6618 = vmatpush1.bf16.msra.mxu0 %v5815
    %6619 = vmatprep.subr.bf16.mxu0 %v5822
    %6620 = vmatpush1.bf16.msra.mxu0 %v5821
    %6621 = vmatprep.subr.bf16.mxu0 %v5828
    %6622 = vmatpush1.bf16.msra.mxu0 %v5827
    %6623 = vmatprep.subr.bf16.mxu0 %v5834
    %6624 = vmatpush1.bf16.msra.mxu0 %v5833
    %6625 = vmatprep.subr.bf16.mxu0 %v5840
    %6626 = vmatpush1.bf16.msra.mxu0 %v5839
    %6627 = vmatprep.subr.bf16.mxu0 %v5846
    %6628 = vmatpush1.bf16.msra.mxu0 %v5845
    %6629 = vmatprep.subr.bf16.mxu0 %v5852
    %6630 = vmatpush1.bf16.msra.mxu0 %v5851
    %6631 = vmatprep.subr.bf16.mxu0 %v5858
    %6632 = vmatpush1.bf16.msra.mxu0 %v5857
    %6633 = vmatprep.subr.bf16.mxu0 %v5864
    %6634 = vmatpush1.bf16.msra.mxu0 %v5863
    %6635 = vmatprep.mubr.bf16.mxu0 %v4580
    %6636 = vmatmul.mubr.bf16.gmra.mrb[0].mxu0 %v4579
    %v6637 = vpop.f32.mrb[0].mxu0
    %v6638 = vadd.f32 %v4894, %v6637
    %v6639 = vpop.f32.mrb[0].mxu0
    %v6640 = vadd.f32 %v4898, %v6639
    %v6641 = vpop.f32.mrb[0].mxu0
    %v6642 = vadd.f32 %v4894, %v6641
    %v6643 = vpop.f32.mrb[0].mxu0
    %v6644 = vadd.f32 %v4898, %v6643
    %6645 = vdwg.mxu0
    %6646 = vmatprep.subr.bf16.mxu0 %v5870
    %6647 = vmatpush1.bf16.msra.mxu0 %v5869
    %6648 = vmatprep.subr.bf16.mxu0 %v5876
    %6649 = vmatpush1.bf16.msra.mxu0 %v5875
    %6650 = vmatprep.subr.bf16.mxu0 %v5882
    %6651 = vmatpush1.bf16.msra.mxu0 %v5881
    %6652 = vmatprep.subr.bf16.mxu0 %v5888
    %6653 = vmatpush1.bf16.msra.mxu0 %v5887
    %6654 = vmatprep.subr.bf16.mxu0 %v5894
    %6655 = vmatpush1.bf16.msra.mxu0 %v5893
    %6656 = vmatprep.subr.bf16.mxu0 %v5900
    %6657 = vmatpush1.bf16.msra.mxu0 %v5899
    %6658 = vmatprep.subr.bf16.mxu0 %v5906
    %6659 = vmatpush1.bf16.msra.mxu0 %v5905
    %6660 = vmatprep.subr.bf16.mxu0 %v5912
    %6661 = vmatpush1.bf16.msra.mxu0 %v5911
    %6662 = vmatprep.subr.bf16.mxu0 %v5918
    %6663 = vmatpush1.bf16.msra.mxu0 %v5917
    %6664 = vmatprep.subr.bf16.mxu0 %v5924
    %6665 = vmatpush1.bf16.msra.mxu0 %v5923
    %6666 = vmatprep.subr.bf16.mxu0 %v5930
    %6667 = vmatpush1.bf16.msra.mxu0 %v5929
    %6668 = vmatprep.subr.bf16.mxu0 %v5936
    %6669 = vmatpush1.bf16.msra.mxu0 %v5935
    %6670 = vmatprep.subr.bf16.mxu0 %v5942
    %6671 = vmatpush1.bf16.msra.mxu0 %v5941
    %6672 = vmatprep.subr.bf16.mxu0 %v5948
    %6673 = vmatpush1.bf16.msra.mxu0 %v5947
    %6674 = vmatprep.subr.bf16.mxu0 %v5954
    %6675 = vmatpush1.bf16.msra.mxu0 %v5953
    %6676 = vmatprep.subr.bf16.mxu0 %v5960
    %6677 = vmatpush1.bf16.msra.mxu0 %v5959
    %6678 = vmatprep.mubr.bf16.mxu0 %v4582
    %6679 = vmatmul.mubr.bf16.gmra.mrb[0].mxu0 %v4581
    %v6680 = vpop.f32.mrb[0].mxu0
    %v6681 = vadd.f32 %v6638, %v6680
    %v6682 = vpop.f32.mrb[0].mxu0
    %v6683 = vadd.f32 %v6640, %v6682
    %v6684 = vpop.f32.mrb[0].mxu0
    %v6685 = vadd.f32 %v6642, %v6684
    %v6686 = vpop.f32.mrb[0].mxu0
    %v6687 = vadd.f32 %v6644, %v6686
    %6688 = vdwg.mxu0
    %6689 = vmatprep.subr.bf16.mxu0 %v5966
    %6690 = vmatpush1.bf16.msra.mxu0 %v5965
    %6691 = vmatprep.subr.bf16.mxu0 %v5972
    %6692 = vmatpush1.bf16.msra.mxu0 %v5971
    %6693 = vmatprep.subr.bf16.mxu0 %v5978
    %6694 = vmatpush1.bf16.msra.mxu0 %v5977
    %6695 = vmatprep.subr.bf16.mxu0 %v5984
    %6696 = vmatpush1.bf16.msra.mxu0 %v5983
    %6697 = vmatprep.subr.bf16.mxu0 %v5990
    %6698 = vmatpush1.bf16.msra.mxu0 %v5989
    %6699 = vmatprep.subr.bf16.mxu0 %v5996
    %6700 = vmatpush1.bf16.msra.mxu0 %v5995
    %6701 = vmatprep.subr.bf16.mxu0 %v6002
    %6702 = vmatpush1.bf16.msra.mxu0 %v6001
    %6703 = vmatprep.subr.bf16.mxu0 %v6008
    %6704 = vmatpush1.bf16.msra.mxu0 %v6007
    %6705 = vmatprep.subr.bf16.mxu0 %v6014
    %6706 = vmatpush1.bf16.msra.mxu0 %v6013
    %6707 = vmatprep.subr.bf16.mxu0 %v6020
    %6708 = vmatpush1.bf16.msra.mxu0 %v6019
    %6709 = vmatprep.subr.bf16.mxu0 %v6026
    %6710 = vmatpush1.bf16.msra.mxu0 %v6025
    %6711 = vmatprep.subr.bf16.mxu0 %v6032
    %6712 = vmatpush1.bf16.msra.mxu0 %v6031
    %6713 = vmatprep.subr.bf16.mxu0 %v6038
    %6714 = vmatpush1.bf16.msra.mxu0 %v6037
    %6715 = vmatprep.subr.bf16.mxu0 %v6044
    %6716 = vmatpush1.bf16.msra.mxu0 %v6043
    %6717 = vmatprep.subr.bf16.mxu0 %v6050
    %6718 = vmatpush1.bf16.msra.mxu0 %v6049
    %6719 = vmatprep.subr.bf16.mxu0 %v6056
    %6720 = vmatpush1.bf16.msra.mxu0 %v6055
    %6721 = vmatprep.mubr.bf16.mxu0 %v4584
    %6722 = vmatmul.mubr.bf16.gmra.mrb[0].mxu0 %v4583
    %v6723 = vpop.f32.mrb[0].mxu0
    %v6724 = vadd.f32 %v6681, %v6723
    %v6725 = vpop.f32.mrb[0].mxu0
    %v6726 = vadd.f32 %v6683, %v6725
    %v6727 = vpop.f32.mrb[0].mxu0
    %v6728 = vadd.f32 %v6685, %v6727
    %v6729 = vpop.f32.mrb[0].mxu0
    %v6730 = vadd.f32 %v6687, %v6729
    %6731 = vdwg.mxu0
    %v6732 = vpack.c.bf16 %v6470, %v6466
    %v6733 = vpack.c.bf16 %v6472, %v6468
    %v6734 = vpack.c.bf16 %v6599, %v6595
    %v6735 = vpack.c.bf16 %v6601, %v6597
    %v6736 = vpack.c.bf16 %v6728, %v6724
    %v6737 = vpack.c.bf16 %v6730, %v6726
    %v6744 = vunpack.c.l.b16 %v6732
    %v6745 = vunpack.c.l.b16 %v6733
    %v6746 = vunpack.c.l.b16 %v6734
    %v6747 = vunpack.c.l.b16 %v6735
    %v6748 = vunpack.c.l.b16 %v6736
    %v6749 = vunpack.c.l.b16 %v6737
    %v6750 = vunpack.c.h.b16 %v6732
    %v6751 = vunpack.c.h.b16 %v6733
    %v6752 = vunpack.c.h.b16 %v6734
    %v6753 = vunpack.c.h.b16 %v6735
    %v6754 = vunpack.c.h.b16 %v6736
    %v6755 = vunpack.c.h.b16 %v6737
    %v6756 = vpack.c.b16 %v6745, %v6744
    %v6757 = vpack.c.b16 %v6747, %v6746
    %v6758 = vpack.c.b16 %v6749, %v6748
    %v6759 = vpack.c.b16 %v6751, %v6750
    %v6760 = vpack.c.b16 %v6753, %v6752
    %v6761 = vpack.c.b16 %v6755, %v6754
    %6768 = vst [vmem:[#allocation20] sm:$0xff] %v6756
    %6769 = vst [vmem:[#allocation20 + $0x8] sm:$0xff] %v6757
    %6770 = vst [vmem:[#allocation20 + $0x10] sm:$0xff] %v6758
    %6771 = vst [vmem:[#allocation20 + $0x18] sm:$0xff] %v6759
    %6772 = vst [vmem:[#allocation20 + $0x20] sm:$0xff] %v6760
    %6773 = vst [vmem:[#allocation20 + $0x28] sm:$0xff] %v6761
    // Predicated region
    $region74: #{tpu_custom_call.1} parent=1 // pred_check
      _
    $region75: #{tpu_custom_call.1} parent=1 // pred_check_branch
      %6775 = sbr.rel (0) target = $region77
    $region76: #{tpu_custom_call.1} parent=1 // pred_region
      %s6777 = ssub.s32 768, 768
      %6778 = vsyncadd [#allocation4], %s6777
      %s6779 = sshll.u32 [#allocation17], 4
      %s6780 = int_to_ptr.vmem [resolvable:$true] %s6779
      %6785 = dma.vmem_to_hbm [thread:$0]  %s6780, 768, %s9, [#allocation4], 384, 384, 24
    $region77: #{tpu_custom_call.1} parent=1 // pred_fallthru
      _
    // Predicated region
    $region78: #{tpu_custom_call.1} parent=1 // pred_check
      _
    $region79: #{tpu_custom_call.1} parent=1 // pred_check_branch
      %6787 = sbr.rel (0) target = $region81
    $region80: #{tpu_custom_call.1} parent=1 // pred_region
      %s6789 = ssub.s32 768, 768
      %6790 = vsyncadd [#allocation19], %s6789
      %s6791 = sshll.u32 [#allocation18], 4
      %s6792 = int_to_ptr.vmem [resolvable:$true] %s6791
      %6797 = dma.vmem_to_hbm [thread:$0]  %s6792, 768, %s10, [#allocation19], 384, 384, 24
    $region81: #{tpu_custom_call.1} parent=1 // pred_fallthru
      _
    // Predicated region
    $region82: #{tpu_custom_call.1} parent=1 // pred_check
      _
    $region83: #{tpu_custom_call.1} parent=1 // pred_check_branch
      %6799 = sbr.rel (0) target = $region85
    $region84: #{tpu_custom_call.1} parent=1 // pred_region
      %s6801 = ssub.s32 768, 768
      %6802 = vsyncadd [#allocation19], %s6801
      %s6803 = sshll.u32 [#allocation20], 4
      %s6804 = int_to_ptr.vmem [resolvable:$true] %s6803
      %6809 = dma.vmem_to_hbm [thread:$0]  %s6804, 768, %s11, [#allocation19], 384, 384, 24
    $region85: #{tpu_custom_call.1} parent=1 // pred_fallthru
      _
    // Predicated region
    $region86: #{tpu_custom_call.1} parent=1 // pred_check
      _
    $region87: #{tpu_custom_call.1} parent=1 // pred_check_branch
      %6811 = sbr.rel (0) target = $region89
    $region88: #{tpu_custom_call.1} parent=1 // pred_region
      %6812 = dma.done [#allocation4], 768
    $region89: #{tpu_custom_call.1} parent=1 // pred_fallthru
      _
    // Predicated region
    $region90: #{tpu_custom_call.1} parent=1 // pred_check
      _
    $region91: #{tpu_custom_call.1} parent=1 // pred_check_branch
      %6814 = sbr.rel (0) target = $region93
    $region92: #{tpu_custom_call.1} parent=1 // pred_region
      %6815 = dma.done [#allocation19], 768
    $region93: #{tpu_custom_call.1} parent=1 // pred_fallthru
      _
    // Predicated region
    $region94: #{tpu_custom_call.1} parent=1 // pred_check
      _
    $region95: #{tpu_custom_call.1} parent=1 // pred_check_branch
      %6817 = sbr.rel (0) target = $region97
    $region96: #{tpu_custom_call.1} parent=1 // pred_region
      %6818 = dma.done [#allocation19], 768
    $region97: #{tpu_custom_call.1} parent=1 // pred_fallthru
      _
    %6819 = vsyncpa [#allocation3], 1
    %6820 = vsyncpa [#allocation6], 1
    %6821 = vsyncpa [#allocation9], 1
    %6822 = vsyncpa [#allocation12], 1
    %6823 = vsyncpa [#allocation15], 1
    %6824 = vsyncpa [#allocation4], 1
    %6825 = vsyncpa [#allocation19], 1

</llo_original>
